<compile_context>
chip_gen: v5e
topology: v5e:2x2
jax: 0.10.0
libtpu: 0.0.40
codegen_flags: <defaults>
</compile_context>

<pallas_src>
import functools

import numpy as np
import jax
import jax.numpy as jnp
from jax.experimental import pallas as pl
from jax.experimental.pallas import tpu as pltpu

# Keep f32 matmuls at full precision so the Pallas kernel and the pure-JAX
# reference agree tightly.
jax.config.update("jax_default_matmul_precision", "highest")


# ----------------------------------------------------------------------------
# Fused DCGRU cell kernel: one pallas_call per (cell, timestep)
# ----------------------------------------------------------------------------
def fused_dcgru_cell_kernel(x_ref, h_ref, sup_ref, wg_ref, bg_ref, wc_ref,
                            bc_ref, *rest):
    """One full DCGRU cell for the whole batch.

    x_ref  : (B, N, Din)   current input
    h_ref  : (B, N, H)     previous hidden state
    sup_ref: (S, N, N)     diffusion supports
    wg_ref : (M*F, 2H)     gate weight, rows ordered m-major (m*F + f)
    bg_ref : (1, 2H)
    wc_ref : (M*F, H)      candidate weight, rows ordered m-major
    bc_ref : (1, H)
    rest   : [wp_ref (H,P), bp_ref (1,P)]?  out_ref (B,N,Dout), hnew_ref (B,N,H)
    """
    has_proj = len(rest) == 4
    if has_proj:
        wp_ref, bp_ref, out_ref, hnew_ref = rest
    else:
        out_ref, hnew_ref = rest

    B, N, Din = x_ref.shape
    H = h_ref.shape[2]
    S = sup_ref.shape[0]
    F = Din + H
    M = wg_ref.shape[0] // F
    K = (M - 1) // S if S > 0 else 0

    # hoist constant loads out of the batch loop
    sups = [sup_ref[s] for s in range(S)]
    wg = wg_ref[...]
    bg = bg_ref[...]
    wc = wc_ref[...]
    bc = bc_ref[...]

    def diffuse(x0_init):
        # Literal translation of the reference Chebyshev loop; x0/x1
        # deliberately carry over across supports (matches the torch code).
        mats = [x0_init]
        if K == 0:
            return mats
        x0 = x0_init
        for s in range(S):
            sup = sups[s]                                               # (N, N)
            x1 = jnp.dot(sup, x0, preferred_element_type=jnp.float32)
            mats.append(x1)
            for _ in range(2, K + 1):
                x2 = 2.0 * jnp.dot(sup, x1,
                                   preferred_element_type=jnp.float32) - x0
                mats.append(x2)
                x1, x0 = x2, x1
        return mats

    for b in range(B):                     # B is tiny & static -> unrolled
        xb = x_ref[b]                                                   # (N, Din)
        hb = h_ref[b]                                                   # (N, H)

        # ---- gate: r, u = sigmoid(DGC([x, h])) ------------------------------
        xh = jnp.concatenate([xb, hb], axis=1)                          # (N, F)
        diff_g = diffuse(xh)                                            # M x (N, F)
        xg = jnp.concatenate(diff_g, axis=1)                            # (N, M*F)
        gate = jax.nn.sigmoid(
            jnp.dot(xg, wg, preferred_element_type=jnp.float32) + bg)   # (N, 2H)
        r = gate[:, :H]
        u = gate[:, H:]

        # ---- candidate: c = tanh(DGC([x, r*h])) -----------------------------
        # Diffusion is linear & column-wise, so the x-columns of the gate's
        # diffusion stack are reused; only r*h is re-diffused.
        diff_rh = diffuse(r * hb)                                       # M x (N, H)
        parts = []
        for m in range(M):
            parts.append(diff_g[m][:, :Din])                            # reused x-part
            parts.append(diff_rh[m])
        xc = jnp.concatenate(parts, axis=1)                             # (N, M*F)
        c = jnp.tanh(
            jnp.dot(xc, wc, preferred_element_type=jnp.float32) + bc)   # (N, H)

        # ---- GRU combine + optional output projection -----------------------
        hnew = u * hb + (1.0 - u) * c                                   # (N, H)
        hnew_ref[b] = hnew
        if has_proj:
            out_ref[b] = (jnp.dot(hnew, wp_ref[...],
                                  preferred_element_type=jnp.float32)
                          + bp_ref[...])
        else:
            out_ref[b] = hnew


def fused_dcgru_cell(params, x, supports, h):
    """x: (B, N, Din), h: (B, N, H) -> (output (B, N, Dout), new_h (B, N, H))."""
    B, N, _ = x.shape
    H = h.shape[2]
    has_proj = "w_proj" in params
    Dout = params["w_proj"].shape[1] if has_proj else H

    args = [x, h, supports,
            params["w_gate_k"], params["b_gate"].reshape(1, -1),
            params["w_cand_k"], params["b_cand"].reshape(1, -1)]
    if has_proj:
        args += [params["w_proj"], params["b_proj"].reshape(1, -1)]

    vmem = pl.BlockSpec(memory_space=pltpu.MemorySpace.VMEM)
    out, hnew = pl.pallas_call(
        fused_dcgru_cell_kernel,
        out_shape=(jax.ShapeDtypeStruct((B, N, Dout), jnp.float32),
                   jax.ShapeDtypeStruct((B, N, H), jnp.float32)),
        in_specs=[vmem] * len(args),
        out_specs=(vmem, vmem),
    )(*args)
    return out, hnew


# ----------------------------------------------------------------------------
# Decoder: jitted lax.scan over time, fused Pallas cell per layer
# ----------------------------------------------------------------------------
def dcgru_decoder(cell_params, inputs, supports, initial_hidden_state, tf_mask,
                  *, node_num, output_dim):
    """inputs: (T, B, N*Din); initial_hidden_state: (L, B, N*H); tf_mask: (T,) bool."""
    T, B = inputs.shape[0], inputs.shape[1]
    N = node_num
    L = len(cell_params)
    H = initial_hidden_state.shape[2] // N
    Din0 = inputs.shape[2] // N

    x_seq = inputs.reshape(T, B, N, Din0)
    h0 = initial_hidden_state.reshape(L, B, N, H)

    def step(carry, xs):
        hidden, cur = carry
        x_t, tf = xs
        inp = cur
        out = inp
        new_hidden = []
        for i in range(L):
            out, h_i = fused_dcgru_cell(cell_params[i], inp, supports, hidden[i])
            inp = out
            new_hidden.append(h_i)
        new_hidden = jnp.stack(new_hidden, axis=0)
        nxt = jnp.where(tf, x_t, out)       # teacher forcing (pre-drawn mask)
        return (new_hidden, nxt), (out, new_hidden[-1])

    _, (outs, last_states) = jax.lax.scan(
        step, (h0, x_seq[0]), (x_seq[1:], tf_mask[1:]))

    outputs = jnp.concatenate(
        [jnp.zeros((1, B, N * output_dim), jnp.float32),     # outputs[0] stays 0
         outs.reshape(T - 1, B, N * output_dim)], axis=0)
    dcgru_states = last_states.reshape(T - 1, B, N * H)
    return outputs, dcgru_states


# ----------------------------------------------------------------------------
# Parameter init (mirrors the torch __init__ shapes)
# ----------------------------------------------------------------------------
def xavier_normal(key, shape, gain=1.414):
    std = gain * np.sqrt(2.0 / (shape[0] + shape[1]))
    return (std * jax.random.normal(key, shape)).astype(jnp.float32)


def make_cell_params(key, in_dim, hid, supports_len, K, num_proj=None):
    F = in_dim + hid
    M = supports_len * K + 1
    k0, k1, k2 = jax.random.split(key, 3)
    w_gate_t = xavier_normal(k0, (F * M, 2 * hid))   # torch layout: row = f*M + m
    w_cand_t = xavier_normal(k1, (F * M, hid))

    def reorder(w, out_dim):
        # torch row order f*M + m  ->  kernel row order m*F + f
        return jnp.transpose(w.reshape(F, M, out_dim), (1, 0, 2)).reshape(M * F, out_dim)

    params = {
        "w_gate_t": w_gate_t, "w_gate_k": reorder(w_gate_t, 2 * hid),
        "b_gate": jnp.zeros((2 * hid,), jnp.float32),
        "w_cand_t": w_cand_t, "w_cand_k": reorder(w_cand_t, hid),
        "b_cand": jnp.zeros((hid,), jnp.float32),
    }
    if num_proj is not None:
        params["w_proj"] = xavier_normal(k2, (hid, num_proj), gain=1.0)
        params["b_proj"] = jnp.zeros((num_proj,), jnp.float32)
    return params


# ----------------------------------------------------------------------------
# Pure-JAX reference (literal torch math, torch weight layout) for checks
# ----------------------------------------------------------------------------
def dgc_reference(x_flat, supports, state_flat, w_torch, b, *, node_num, K):
    B = x_flat.shape[0]
    N = node_num
    xs = jnp.concatenate([x_flat.reshape(B, N, -1),
                          state_flat.reshape(B, N, -1)], axis=2)   # (B, N, F)
    F = xs.shape[2]
    x0 = jnp.transpose(xs, (1, 2, 0)).reshape(N, F * B)
    mats = [x0]
    if K > 0:
        for s in range(supports.shape[0]):
            sup = supports[s]
            x1 = sup @ x0
            mats.append(x1)
            for _ in range(2, K + 1):
                x2 = 2.0 * (sup @ x1) - x0
                mats.append(x2)
                x1, x0 = x2, x1
    M = len(mats)
    x = jnp.stack(mats, axis=0).reshape(M, N, F, B)
    x = jnp.transpose(x, (3, 1, 2, 0)).reshape(B * N, F * M)
    out = x @ w_torch + b
    return out.reshape(B, N * w_torch.shape[1])


def dcgru_cell_reference(params, x_flat, supports, h_flat, *, node_num,
                         num_units, K, num_proj=None):
    N, H = node_num, num_units
    B = x_flat.shape[0]
    value = jax.nn.sigmoid(dgc_reference(x_flat, supports, h_flat,
                                         params["w_gate_t"], params["b_gate"],
                                         node_num=N, K=K))
    value = value.reshape(B, N, 2 * H)
    r = value[..., :H].reshape(B, N * H)
    u = value[..., H:].reshape(B, N * H)
    c = jnp.tanh(dgc_reference(x_flat, supports, r * h_flat,
                               params["w_cand_t"], params["b_cand"],
                               node_num=N, K=K))
    new_state = u * h_flat + (1.0 - u) * c
    if num_proj is None:
        return new_state, new_state
    out = new_state.reshape(B * N, H) @ params["w_proj"] + params["b_proj"]
    return out.reshape(B, N * num_proj), new_state


def dcgru_decoder_reference(cell_params, cell_cfgs, inputs, supports,
                            initial_hidden_state, tf_mask, node_num, output_dim):
    T, B = inputs.shape[0], inputs.shape[1]
    L = len(cell_params)
    outputs = [jnp.zeros((B, node_num * output_dim), jnp.float32)]
    hidden = [initial_hidden_state[i] for i in range(L)]
    last_states = []
    current_input = inputs[0]
    output = None
    for t in range(1, T):
        new_hidden = []
        for i in range(L):
            output, h = dcgru_cell_reference(cell_params[i], current_input,
                                             supports, hidden[i], **cell_cfgs[i])
            current_input = output
            new_hidden.append(h)
        hidden = new_hidden
        last_states.append(new_hidden[-1])
        outputs.append(output)
        current_input = jnp.where(tf_mask[t], inputs[t], output)
    return jnp.stack(outputs, axis=0), jnp.stack(last_states, axis=0)


# ----------------------------------------------------------------------------
if __name__ == "__main__":
    key = jax.random.PRNGKey(0)

    node_num = 16
    input_dim = 2
    hid_dim = 8
    output_dim = 2
    max_diffusion_step = 2                    # K
    filter_type = "doubletransition"          # -> supports_len = 2
    num_rnn_layers = 2
    seq_len = 8
    batch = 2

    supports_len = 2 if filter_type == "doubletransition" else 1

    keys = jax.random.split(key, num_rnn_layers + 4)
    cell_params, cell_cfgs = [], []
    for i in range(num_rnn_layers):
        in_d = input_dim if i == 0 else hid_dim
        proj = output_dim if i == num_rnn_layers - 1 else None
        cell_params.append(make_cell_params(keys[i], in_d, hid_dim,
                                            supports_len, max_diffusion_step, proj))
        cell_cfgs.append(dict(node_num=node_num, num_units=hid_dim,
                              K=max_diffusion_step, num_proj=proj))

    k_x, k_s, k_h, k_tf = keys[num_rnn_layers:num_rnn_layers + 4]
    inputs = jax.random.normal(k_x, (seq_len, batch, node_num * input_dim), jnp.float32)
    adj = jax.random.uniform(k_s, (supports_len, node_num, node_num), jnp.float32)
    supports = adj / jnp.sum(adj, axis=-1, keepdims=True)   # row-normalized transitions
    initial_hidden_state = jax.random.normal(
        k_h, (num_rnn_layers, batch, node_num * hid_dim), jnp.float32)
    tf_mask = jax.random.uniform(k_tf, (seq_len,)) < 0.5    # reproducible teacher forcing

    # --- correctness: fused Pallas cell vs. literal-torch pure-JAX reference ---
    for i in (0, num_rnn_layers - 1):
        in_d = input_dim if i == 0 else hid_dim
        x_flat = (inputs[0] if i == 0 else
                  jax.random.normal(keys[i], (batch, node_num * in_d), jnp.float32))
        h_flat = initial_hidden_state[i]
        out_k, h_k = fused_dcgru_cell(cell_params[i],
                                      x_flat.reshape(batch, node_num, in_d),
                                      supports,
                                      h_flat.reshape(batch, node_num, hid_dim))
        out_r, h_r = dcgru_cell_reference(cell_params[i], x_flat, supports,
                                          h_flat, **cell_cfgs[i])
        np.testing.assert_allclose(np.asarray(out_k.reshape(batch, -1)),
                                   np.asarray(out_r), rtol=1e-4, atol=1e-4)
        np.testing.assert_allclose(np.asarray(h_k.reshape(batch, -1)),
                                   np.asarray(h_r), rtol=1e-4, atol=1e-4)

    # --- full decoder: jit + lax.scan over time, fused Pallas cells ---
    decoder = jax.jit(functools.partial(dcgru_decoder, node_num=node_num,
                                        output_dim=output_dim))
    outputs, dcgru_states = decoder(cell_params, inputs, supports,
                                    initial_hidden_state, tf_mask)
    outputs = jax.block_until_ready(outputs)
    dcgru_states = jax.block_until_ready(dcgru_states)

    # cross-check the whole decoder against the pure-JAX reference
    outputs_ref, states_ref = dcgru_decoder_reference(
        cell_params, cell_cfgs, inputs, supports, initial_hidden_state, tf_mask,
        node_num, output_dim)
    np.testing.assert_allclose(np.asarray(outputs), np.asarray(outputs_ref),
                               rtol=1e-3, atol=1e-3)
    np.testing.assert_allclose(np.asarray(dcgru_states), np.asarray(states_ref),
                               rtol=1e-3, atol=1e-3)

    assert outputs.shape == (seq_len, batch, node_num * output_dim)
    assert dcgru_states.shape == (seq_len - 1, batch, node_num * hid_dim)
    print("KERNEL_OK")
</pallas_src>

<mosaic_0001>
module attributes {stable_mosaic.version = 11 : i64} {
  func.func @fused_dcgru_cell_kernel(%arg0: memref<2x16x2xf32, #tpu.memory_space<vmem>>, %arg1: memref<2x16x8xf32, #tpu.memory_space<vmem>>, %arg2: memref<2x16x16xf32, #tpu.memory_space<vmem>>, %arg3: memref<50x16xf32, #tpu.memory_space<vmem>>, %arg4: memref<1x16xf32, #tpu.memory_space<vmem>>, %arg5: memref<50x8xf32, #tpu.memory_space<vmem>>, %arg6: memref<1x8xf32, #tpu.memory_space<vmem>>, %arg7: memref<2x16x8xf32, #tpu.memory_space<vmem>>, %arg8: memref<2x16x8xf32, #tpu.memory_space<vmem>>) attributes {dimension_semantics = [], scalar_prefetch = 0 : i64, scratch_operands = 0 : i64, tpu.core_type = #tpu.core_type<tc>} {
    %c0 = arith.constant 0 : index
    %c0_0 = arith.constant 0 : index
    %c0_1 = arith.constant 0 : index
    %0 = vector.load %arg2[%c0, %c0_0, %c0_1] : memref<2x16x16xf32, #tpu.memory_space<vmem>>, vector<1x16x16xf32>
    %1 = vector.shape_cast %0 : vector<1x16x16xf32> to vector<16x16xf32>
    %c1 = arith.constant 1 : index
    %c0_2 = arith.constant 0 : index
    %c0_3 = arith.constant 0 : index
    %2 = vector.load %arg2[%c1, %c0_2, %c0_3] : memref<2x16x16xf32, #tpu.memory_space<vmem>>, vector<1x16x16xf32>
    %3 = vector.shape_cast %2 : vector<1x16x16xf32> to vector<16x16xf32>
    %c0_4 = arith.constant 0 : index
    %c0_5 = arith.constant 0 : index
    %4 = vector.load %arg3[%c0_4, %c0_5] : memref<50x16xf32, #tpu.memory_space<vmem>>, vector<50x16xf32>
    %c0_6 = arith.constant 0 : index
    %c0_7 = arith.constant 0 : index
    %5 = vector.load %arg4[%c0_6, %c0_7] : memref<1x16xf32, #tpu.memory_space<vmem>>, vector<1x16xf32>
    %c0_8 = arith.constant 0 : index
    %c0_9 = arith.constant 0 : index
    %6 = vector.load %arg5[%c0_8, %c0_9] : memref<50x8xf32, #tpu.memory_space<vmem>>, vector<50x8xf32>
    %c0_10 = arith.constant 0 : index
    %c0_11 = arith.constant 0 : index
    %7 = vector.load %arg6[%c0_10, %c0_11] : memref<1x8xf32, #tpu.memory_space<vmem>>, vector<1x8xf32>
    %c0_12 = arith.constant 0 : index
    %c0_13 = arith.constant 0 : index
    %c0_14 = arith.constant 0 : index
    %8 = vector.load %arg0[%c0_12, %c0_13, %c0_14] : memref<2x16x2xf32, #tpu.memory_space<vmem>>, vector<1x16x2xf32>
    %9 = vector.shape_cast %8 : vector<1x16x2xf32> to vector<16x2xf32>
    %c0_15 = arith.constant 0 : index
    %c0_16 = arith.constant 0 : index
    %c0_17 = arith.constant 0 : index
    %10 = vector.load %arg1[%c0_15, %c0_16, %c0_17] : memref<2x16x8xf32, #tpu.memory_space<vmem>>, vector<1x16x8xf32>
    %11 = vector.shape_cast %10 : vector<1x16x8xf32> to vector<16x8xf32>
    %12 = tpu.concatenate %9, %11 in 1 : vector<16x2xf32>, vector<16x8xf32> -> vector<16x10xf32>
    %cst = arith.constant dense<0.000000e+00> : vector<16x10xf32>
    %13 = tpu.matmul %1, %12, %cst {dimension_numbers = #tpu.dot_dimension_numbers<[1], [0], [0], [1], [0, 0, 1, 1], [], []>, precision = #tpu.contract_precision<fp32>} : vector<16x16xf32>, vector<16x10xf32>, vector<16x10xf32> -> vector<16x10xf32>
    %cst_18 = arith.constant dense<0.000000e+00> : vector<16x10xf32>
    %14 = tpu.matmul %1, %13, %cst_18 {dimension_numbers = #tpu.dot_dimension_numbers<[1], [0], [0], [1], [0, 0, 1, 1], [], []>, precision = #tpu.contract_precision<fp32>} : vector<16x16xf32>, vector<16x10xf32>, vector<16x10xf32> -> vector<16x10xf32>
    %cst_19 = arith.constant 2.000000e+00 : f32
    %15 = vector.broadcast %cst_19 : f32 to vector<16x10xf32>
    %16 = arith.mulf %15, %14 : vector<16x10xf32>
    %17 = arith.subf %16, %12 : vector<16x10xf32>
    %cst_20 = arith.constant dense<0.000000e+00> : vector<16x10xf32>
    %18 = tpu.matmul %3, %13, %cst_20 {dimension_numbers = #tpu.dot_dimension_numbers<[1], [0], [0], [1], [0, 0, 1, 1], [], []>, precision = #tpu.contract_precision<fp32>} : vector<16x16xf32>, vector<16x10xf32>, vector<16x10xf32> -> vector<16x10xf32>
    %cst_21 = arith.constant dense<0.000000e+00> : vector<16x10xf32>
    %19 = tpu.matmul %3, %18, %cst_21 {dimension_numbers = #tpu.dot_dimension_numbers<[1], [0], [0], [1], [0, 0, 1, 1], [], []>, precision = #tpu.contract_precision<fp32>} : vector<16x16xf32>, vector<16x10xf32>, vector<16x10xf32> -> vector<16x10xf32>
    %cst_22 = arith.constant 2.000000e+00 : f32
    %20 = vector.broadcast %cst_22 : f32 to vector<16x10xf32>
    %21 = arith.mulf %20, %19 : vector<16x10xf32>
    %22 = arith.subf %21, %13 : vector<16x10xf32>
    %23 = tpu.concatenate %12, %13, %17, %18, %22 in 1 : vector<16x10xf32>, vector<16x10xf32>, vector<16x10xf32>, vector<16x10xf32>, vector<16x10xf32> -> vector<16x50xf32>
    %cst_23 = arith.constant dense<0.000000e+00> : vector<16x16xf32>
    %24 = tpu.matmul %23, %4, %cst_23 {dimension_numbers = #tpu.dot_dimension_numbers<[1], [0], [0], [1], [0, 0, 1, 1], [], []>, precision = #tpu.contract_precision<fp32>} : vector<16x50xf32>, vector<50x16xf32>, vector<16x16xf32> -> vector<16x16xf32>
    %25 = vector.broadcast %5 : vector<1x16xf32> to vector<16x16xf32>
    %26 = arith.addf %24, %25 : vector<16x16xf32>
    %27 = arith.negf %26 : vector<16x16xf32>
    %28 = math.exp %27 : vector<16x16xf32>
    %cst_24 = arith.constant 1.000000e+00 : f32
    %29 = vector.broadcast %cst_24 : f32 to vector<16x16xf32>
    %30 = arith.addf %29, %28 : vector<16x16xf32>
    %31 = arith.divf %29, %30 : vector<16x16xf32>
    %32 = vector.extract_strided_slice %31 {offsets = [0, 0], sizes = [16, 8], strides = [1, 1]} : vector<16x16xf32> to vector<16x8xf32>
    %33 = vector.extract_strided_slice %31 {offsets = [0, 8], sizes = [16, 8], strides = [1, 1]} : vector<16x16xf32> to vector<16x8xf32>
    %34 = arith.mulf %32, %11 : vector<16x8xf32>
    %cst_25 = arith.constant dense<0.000000e+00> : vector<16x8xf32>
    %35 = tpu.matmul %1, %34, %cst_25 {dimension_numbers = #tpu.dot_dimension_numbers<[1], [0], [0], [1], [0, 0, 1, 1], [], []>, precision = #tpu.contract_precision<fp32>} : vector<16x16xf32>, vector<16x8xf32>, vector<16x8xf32> -> vector<16x8xf32>
    %cst_26 = arith.constant dense<0.000000e+00> : vector<16x8xf32>
    %36 = tpu.matmul %1, %35, %cst_26 {dimension_numbers = #tpu.dot_dimension_numbers<[1], [0], [0], [1], [0, 0, 1, 1], [], []>, precision = #tpu.contract_precision<fp32>} : vector<16x16xf32>, vector<16x8xf32>, vector<16x8xf32> -> vector<16x8xf32>
    %cst_27 = arith.constant 2.000000e+00 : f32
    %37 = vector.broadcast %cst_27 : f32 to vector<16x8xf32>
    %38 = arith.mulf %37, %36 : vector<16x8xf32>
    %39 = arith.subf %38, %34 : vector<16x8xf32>
    %cst_28 = arith.constant dense<0.000000e+00> : vector<16x8xf32>
    %40 = tpu.matmul %3, %35, %cst_28 {dimension_numbers = #tpu.dot_dimension_numbers<[1], [0], [0], [1], [0, 0, 1, 1], [], []>, precision = #tpu.contract_precision<fp32>} : vector<16x16xf32>, vector<16x8xf32>, vector<16x8xf32> -> vector<16x8xf32>
    %cst_29 = arith.constant dense<0.000000e+00> : vector<16x8xf32>
    %41 = tpu.matmul %3, %40, %cst_29 {dimension_numbers = #tpu.dot_dimension_numbers<[1], [0], [0], [1], [0, 0, 1, 1], [], []>, precision = #tpu.contract_precision<fp32>} : vector<16x16xf32>, vector<16x8xf32>, vector<16x8xf32> -> vector<16x8xf32>
    %cst_30 = arith.constant 2.000000e+00 : f32
    %42 = vector.broadcast %cst_30 : f32 to vector<16x8xf32>
    %43 = arith.mulf %42, %41 : vector<16x8xf32>
    %44 = arith.subf %43, %35 : vector<16x8xf32>
    %45 = vector.extract_strided_slice %12 {offsets = [0, 0], sizes = [16, 2], strides = [1, 1]} : vector<16x10xf32> to vector<16x2xf32>
    %46 = vector.extract_strided_slice %13 {offsets = [0, 0], sizes = [16, 2], strides = [1, 1]} : vector<16x10xf32> to vector<16x2xf32>
    %47 = vector.extract_strided_slice %17 {offsets = [0, 0], sizes = [16, 2], strides = [1, 1]} : vector<16x10xf32> to vector<16x2xf32>
    %48 = vector.extract_strided_slice %18 {offsets = [0, 0], sizes = [16, 2], strides = [1, 1]} : vector<16x10xf32> to vector<16x2xf32>
    %49 = vector.extract_strided_slice %22 {offsets = [0, 0], sizes = [16, 2], strides = [1, 1]} : vector<16x10xf32> to vector<16x2xf32>
    %50 = tpu.concatenate %45, %34, %46, %35, %47, %39, %48, %40, %49, %44 in 1 : vector<16x2xf32>, vector<16x8xf32>, vector<16x2xf32>, vector<16x8xf32>, vector<16x2xf32>, vector<16x8xf32>, vector<16x2xf32>, vector<16x8xf32>, vector<16x2xf32>, vector<16x8xf32> -> vector<16x50xf32>
    %cst_31 = arith.constant dense<0.000000e+00> : vector<16x8xf32>
    %51 = tpu.matmul %50, %6, %cst_31 {dimension_numbers = #tpu.dot_dimension_numbers<[1], [0], [0], [1], [0, 0, 1, 1], [], []>, precision = #tpu.contract_precision<fp32>} : vector<16x50xf32>, vector<50x8xf32>, vector<16x8xf32> -> vector<16x8xf32>
    %52 = vector.broadcast %7 : vector<1x8xf32> to vector<16x8xf32>
    %53 = arith.addf %51, %52 : vector<16x8xf32>
    %54 = math.tanh %53 : vector<16x8xf32>
    %55 = arith.mulf %33, %11 : vector<16x8xf32>
    %cst_32 = arith.constant 1.000000e+00 : f32
    %56 = vector.broadcast %cst_32 : f32 to vector<16x8xf32>
    %57 = arith.subf %56, %33 : vector<16x8xf32>
    %58 = arith.mulf %57, %54 : vector<16x8xf32>
    %59 = arith.addf %55, %58 : vector<16x8xf32>
    %c0_33 = arith.constant 0 : index
    %c0_34 = arith.constant 0 : index
    %c0_35 = arith.constant 0 : index
    %60 = vector.load %arg8[%c0_33, %c0_34, %c0_35] : memref<2x16x8xf32, #tpu.memory_space<vmem>>, vector<1x16x8xf32>
    %61 = vector.shape_cast %60 : vector<1x16x8xf32> to vector<16x8xf32>
    %62 = vector.shape_cast %59 : vector<16x8xf32> to vector<1x16x8xf32>
    tpu.vector_store %arg8[%c0_33, %c0_34, %c0_35], %62 {strides = array<i32>} : memref<2x16x8xf32, #tpu.memory_space<vmem>>, vector<1x16x8xf32>,
    %c0_36 = arith.constant 0 : index
    %c0_37 = arith.constant 0 : index
    %c0_38 = arith.constant 0 : index
    %63 = vector.load %arg7[%c0_36, %c0_37, %c0_38] : memref<2x16x8xf32, #tpu.memory_space<vmem>>, vector<1x16x8xf32>
    %64 = vector.shape_cast %63 : vector<1x16x8xf32> to vector<16x8xf32>
    %65 = vector.shape_cast %59 : vector<16x8xf32> to vector<1x16x8xf32>
    tpu.vector_store %arg7[%c0_36, %c0_37, %c0_38], %65 {strides = array<i32>} : memref<2x16x8xf32, #tpu.memory_space<vmem>>, vector<1x16x8xf32>,
    %c1_39 = arith.constant 1 : index
    %c0_40 = arith.constant 0 : index
    %c0_41 = arith.constant 0 : index
    %66 = vector.load %arg0[%c1_39, %c0_40, %c0_41] : memref<2x16x2xf32, #tpu.memory_space<vmem>>, vector<1x16x2xf32>
    %67 = vector.shape_cast %66 : vector<1x16x2xf32> to vector<16x2xf32>
    %c1_42 = arith.constant 1 : index
    %c0_43 = arith.constant 0 : index
    %c0_44 = arith.constant 0 : index
    %68 = vector.load %arg1[%c1_42, %c0_43, %c0_44] : memref<2x16x8xf32, #tpu.memory_space<vmem>>, vector<1x16x8xf32>
    %69 = vector.shape_cast %68 : vector<1x16x8xf32> to vector<16x8xf32>
    %70 = tpu.concatenate %67, %69 in 1 : vector<16x2xf32>, vector<16x8xf32> -> vector<16x10xf32>
    %cst_45 = arith.constant dense<0.000000e+00> : vector<16x10xf32>
    %71 = tpu.matmul %1, %70, %cst_45 {dimension_numbers = #tpu.dot_dimension_numbers<[1], [0], [0], [1], [0, 0, 1, 1], [], []>, precision = #tpu.contract_precision<fp32>} : vector<16x16xf32>, vector<16x10xf32>, vector<16x10xf32> -> vector<16x10xf32>
    %cst_46 = arith.constant dense<0.000000e+00> : vector<16x10xf32>
    %72 = tpu.matmul %1, %71, %cst_46 {dimension_numbers = #tpu.dot_dimension_numbers<[1], [0], [0], [1], [0, 0, 1, 1], [], []>, precision = #tpu.contract_precision<fp32>} : vector<16x16xf32>, vector<16x10xf32>, vector<16x10xf32> -> vector<16x10xf32>
    %cst_47 = arith.constant 2.000000e+00 : f32
    %73 = vector.broadcast %cst_47 : f32 to vector<16x10xf32>
    %74 = arith.mulf %73, %72 : vector<16x10xf32>
    %75 = arith.subf %74, %70 : vector<16x10xf32>
    %cst_48 = arith.constant dense<0.000000e+00> : vector<16x10xf32>
    %76 = tpu.matmul %3, %71, %cst_48 {dimension_numbers = #tpu.dot_dimension_numbers<[1], [0], [0], [1], [0, 0, 1, 1], [], []>, precision = #tpu.contract_precision<fp32>} : vector<16x16xf32>, vector<16x10xf32>, vector<16x10xf32> -> vector<16x10xf32>
    %cst_49 = arith.constant dense<0.000000e+00> : vector<16x10xf32>
    %77 = tpu.matmul %3, %76, %cst_49 {dimension_numbers = #tpu.dot_dimension_numbers<[1], [0], [0], [1], [0, 0, 1, 1], [], []>, precision = #tpu.contract_precision<fp32>} : vector<16x16xf32>, vector<16x10xf32>, vector<16x10xf32> -> vector<16x10xf32>
    %cst_50 = arith.constant 2.000000e+00 : f32
    %78 = vector.broadcast %cst_50 : f32 to vector<16x10xf32>
    %79 = arith.mulf %78, %77 : vector<16x10xf32>
    %80 = arith.subf %79, %71 : vector<16x10xf32>
    %81 = tpu.concatenate %70, %71, %75, %76, %80 in 1 : vector<16x10xf32>, vector<16x10xf32>, vector<16x10xf32>, vector<16x10xf32>, vector<16x10xf32> -> vector<16x50xf32>
    %cst_51 = arith.constant dense<0.000000e+00> : vector<16x16xf32>
    %82 = tpu.matmul %81, %4, %cst_51 {dimension_numbers = #tpu.dot_dimension_numbers<[1], [0], [0], [1], [0, 0, 1, 1], [], []>, precision = #tpu.contract_precision<fp32>} : vector<16x50xf32>, vector<50x16xf32>, vector<16x16xf32> -> vector<16x16xf32>
    %83 = vector.broadcast %5 : vector<1x16xf32> to vector<16x16xf32>
    %84 = arith.addf %82, %83 : vector<16x16xf32>
    %85 = arith.negf %84 : vector<16x16xf32>
    %86 = math.exp %85 : vector<16x16xf32>
    %cst_52 = arith.constant 1.000000e+00 : f32
    %87 = vector.broadcast %cst_52 : f32 to vector<16x16xf32>
    %88 = arith.addf %87, %86 : vector<16x16xf32>
    %89 = arith.divf %87, %88 : vector<16x16xf32>
    %90 = vector.extract_strided_slice %89 {offsets = [0, 0], sizes = [16, 8], strides = [1, 1]} : vector<16x16xf32> to vector<16x8xf32>
    %91 = vector.extract_strided_slice %89 {offsets = [0, 8], sizes = [16, 8], strides = [1, 1]} : vector<16x16xf32> to vector<16x8xf32>
    %92 = arith.mulf %90, %69 : vector<16x8xf32>
    %cst_53 = arith.constant dense<0.000000e+00> : vector<16x8xf32>
    %93 = tpu.matmul %1, %92, %cst_53 {dimension_numbers = #tpu.dot_dimension_numbers<[1], [0], [0], [1], [0, 0, 1, 1], [], []>, precision = #tpu.contract_precision<fp32>} : vector<16x16xf32>, vector<16x8xf32>, vector<16x8xf32> -> vector<16x8xf32>
    %cst_54 = arith.constant dense<0.000000e+00> : vector<16x8xf32>
    %94 = tpu.matmul %1, %93, %cst_54 {dimension_numbers = #tpu.dot_dimension_numbers<[1], [0], [0], [1], [0, 0, 1, 1], [], []>, precision = #tpu.contract_precision<fp32>} : vector<16x16xf32>, vector<16x8xf32>, vector<16x8xf32> -> vector<16x8xf32>
    %cst_55 = arith.constant 2.000000e+00 : f32
    %95 = vector.broadcast %cst_55 : f32 to vector<16x8xf32>
    %96 = arith.mulf %95, %94 : vector<16x8xf32>
    %97 = arith.subf %96, %92 : vector<16x8xf32>
    %cst_56 = arith.constant dense<0.000000e+00> : vector<16x8xf32>
    %98 = tpu.matmul %3, %93, %cst_56 {dimension_numbers = #tpu.dot_dimension_numbers<[1], [0], [0], [1], [0, 0, 1, 1], [], []>, precision = #tpu.contract_precision<fp32>} : vector<16x16xf32>, vector<16x8xf32>, vector<16x8xf32> -> vector<16x8xf32>
    %cst_57 = arith.constant dense<0.000000e+00> : vector<16x8xf32>
    %99 = tpu.matmul %3, %98, %cst_57 {dimension_numbers = #tpu.dot_dimension_numbers<[1], [0], [0], [1], [0, 0, 1, 1], [], []>, precision = #tpu.contract_precision<fp32>} : vector<16x16xf32>, vector<16x8xf32>, vector<16x8xf32> -> vector<16x8xf32>
    %cst_58 = arith.constant 2.000000e+00 : f32
    %100 = vector.broadcast %cst_58 : f32 to vector<16x8xf32>
    %101 = arith.mulf %100, %99 : vector<16x8xf32>
    %102 = arith.subf %101, %93 : vector<16x8xf32>
    %103 = vector.extract_strided_slice %70 {offsets = [0, 0], sizes = [16, 2], strides = [1, 1]} : vector<16x10xf32> to vector<16x2xf32>
    %104 = vector.extract_strided_slice %71 {offsets = [0, 0], sizes = [16, 2], strides = [1, 1]} : vector<16x10xf32> to vector<16x2xf32>
    %105 = vector.extract_strided_slice %75 {offsets = [0, 0], sizes = [16, 2], strides = [1, 1]} : vector<16x10xf32> to vector<16x2xf32>
    %106 = vector.extract_strided_slice %76 {offsets = [0, 0], sizes = [16, 2], strides = [1, 1]} : vector<16x10xf32> to vector<16x2xf32>
    %107 = vector.extract_strided_slice %80 {offsets = [0, 0], sizes = [16, 2], strides = [1, 1]} : vector<16x10xf32> to vector<16x2xf32>
    %108 = tpu.concatenate %103, %92, %104, %93, %105, %97, %106, %98, %107, %102 in 1 : vector<16x2xf32>, vector<16x8xf32>, vector<16x2xf32>, vector<16x8xf32>, vector<16x2xf32>, vector<16x8xf32>, vector<16x2xf32>, vector<16x8xf32>, vector<16x2xf32>, vector<16x8xf32> -> vector<16x50xf32>
    %cst_59 = arith.constant dense<0.000000e+00> : vector<16x8xf32>
    %109 = tpu.matmul %108, %6, %cst_59 {dimension_numbers = #tpu.dot_dimension_numbers<[1], [0], [0], [1], [0, 0, 1, 1], [], []>, precision = #tpu.contract_precision<fp32>} : vector<16x50xf32>, vector<50x8xf32>, vector<16x8xf32> -> vector<16x8xf32>
    %110 = vector.broadcast %7 : vector<1x8xf32> to vector<16x8xf32>
    %111 = arith.addf %109, %110 : vector<16x8xf32>
    %112 = math.tanh %111 : vector<16x8xf32>
    %113 = arith.mulf %91, %69 : vector<16x8xf32>
    %cst_60 = arith.constant 1.000000e+00 : f32
    %114 = vector.broadcast %cst_60 : f32 to vector<16x8xf32>
    %115 = arith.subf %114, %91 : vector<16x8xf32>
    %116 = arith.mulf %115, %112 : vector<16x8xf32>
    %117 = arith.addf %113, %116 : vector<16x8xf32>
    %c1_61 = arith.constant 1 : index
    %c0_62 = arith.constant 0 : index
    %c0_63 = arith.constant 0 : index
    %118 = vector.load %arg8[%c1_61, %c0_62, %c0_63] : memref<2x16x8xf32, #tpu.memory_space<vmem>>, vector<1x16x8xf32>
    %119 = vector.shape_cast %118 : vector<1x16x8xf32> to vector<16x8xf32>
    %120 = vector.shape_cast %117 : vector<16x8xf32> to vector<1x16x8xf32>
    tpu.vector_store %arg8[%c1_61, %c0_62, %c0_63], %120 {strides = array<i32>} : memref<2x16x8xf32, #tpu.memory_space<vmem>>, vector<1x16x8xf32>,
    %c1_64 = arith.constant 1 : index
    %c0_65 = arith.constant 0 : index
    %c0_66 = arith.constant 0 : index
    %121 = vector.load %arg7[%c1_64, %c0_65, %c0_66] : memref<2x16x8xf32, #tpu.memory_space<vmem>>, vector<1x16x8xf32>
    %122 = vector.shape_cast %121 : vector<1x16x8xf32> to vector<16x8xf32>
    %123 = vector.shape_cast %117 : vector<16x8xf32> to vector<1x16x8xf32>
    tpu.vector_store %arg7[%c1_64, %c0_65, %c0_66], %123 {strides = array<i32>} : memref<2x16x8xf32, #tpu.memory_space<vmem>>, vector<1x16x8xf32>,
    return
  }
}

</mosaic_0001>

<llo_original>
// kernel: tpu_custom_call.1
$region0: #{tpu_custom_call.1}
  #allocation0 [shape = 'u32[]', space=smem, size = 0x4, offset = 0x4, fixed_abs, tag = 'smem constant byte address 0x4 - core index']
  #allocation1 [shape = 'u32[72,128]{1,0:T(1,128)}', space=vmem, size = 0x9000, scoped, tag = 'internal scratch']
  %s0 = inlined_call_operand.vmem [shape: f32[2,16,2], index: 0, kind: input, shape index: {}]
  %s1 = inlined_call_operand.vmem [shape: f32[2,16,8], index: 1, kind: input, shape index: {}]
  %s2 = inlined_call_operand.vmem [shape: f32[2,16,16], index: 2, kind: input, shape index: {}]
  %s3 = inlined_call_operand.vmem [shape: f32[50,16], index: 3, kind: input, shape index: {}]
  %s4 = inlined_call_operand.vmem [shape: f32[1,16], index: 4, kind: input, shape index: {}]
  %s5 = inlined_call_operand.vmem [shape: f32[50,8], index: 5, kind: input, shape index: {}]
  %s6 = inlined_call_operand.vmem [shape: f32[1,8], index: 6, kind: input, shape index: {}]
  %s7 = inlined_call_operand.vmem [shape: f32[2,16,8], index: 7, kind: output, shape index: {0}]
  %s8 = inlined_call_operand.vmem [shape: f32[2,16,8], index: 8, kind: output, shape index: {1}]
  %9 = xla_tuple %s7, %s8
  %s10 = sld [smem:[#allocation0]]
  $region46: #{tpu_custom_call.1} parent=0
    _
  %s12 = ssub.s32 1, %s10
  %s13 = scalar_select 0, %s12, %s10
  // Predicated region
  $region2: #{tpu_custom_call.1} parent=0 // pred_check
    _
  $region3: #{tpu_custom_call.1} parent=0 // pred_check_branch
    %15 = sbr.rel (0) target = $region5
  $region4: #{tpu_custom_call.1} parent=0 // pred_region
    _
  $region5: #{tpu_custom_call.1} parent=0 // pred_fallthru
    _
  // Predicated region
  $region6: #{tpu_custom_call.1} parent=0 // pred_check
    _
  $region7: #{tpu_custom_call.1} parent=0 // pred_check_branch
    %17 = sbr.rel (0) target = $region9
  $region8: #{tpu_custom_call.1} parent=0 // pred_region
    _
  $region9: #{tpu_custom_call.1} parent=0 // pred_fallthru
    _
  // Predicated region
  $region10: #{tpu_custom_call.1} parent=0 // pred_check
    _
  $region11: #{tpu_custom_call.1} parent=0 // pred_check_branch
    %19 = sbr.rel (0) target = $region13
  $region12: #{tpu_custom_call.1} parent=0 // pred_region
    _
  $region13: #{tpu_custom_call.1} parent=0 // pred_fallthru
    _
  // Predicated region
  $region14: #{tpu_custom_call.1} parent=0 // pred_check
    _
  $region15: #{tpu_custom_call.1} parent=0 // pred_check_branch
    %21 = sbr.rel (0) target = $region17
  $region16: #{tpu_custom_call.1} parent=0 // pred_region
    _
  $region17: #{tpu_custom_call.1} parent=0 // pred_fallthru
    _
  // Predicated region
  $region18: #{tpu_custom_call.1} parent=0 // pred_check
    _
  $region19: #{tpu_custom_call.1} parent=0 // pred_check_branch
    %23 = sbr.rel (0) target = $region21
  $region20: #{tpu_custom_call.1} parent=0 // pred_region
    _
  $region21: #{tpu_custom_call.1} parent=0 // pred_fallthru
    _
  // Predicated region
  $region22: #{tpu_custom_call.1} parent=0 // pred_check
    _
  $region23: #{tpu_custom_call.1} parent=0 // pred_check_branch
    %25 = sbr.rel (0) target = $region25
  $region24: #{tpu_custom_call.1} parent=0 // pred_region
    _
  $region25: #{tpu_custom_call.1} parent=0 // pred_fallthru
    _
  // Predicated region
  $region26: #{tpu_custom_call.1} parent=0 // pred_check
    _
  $region27: #{tpu_custom_call.1} parent=0 // pred_check_branch
    %27 = sbr.rel (0) target = $region29
  $region28: #{tpu_custom_call.1} parent=0 // pred_region
    _
  $region29: #{tpu_custom_call.1} parent=0 // pred_fallthru
    _
  %v28 = vld [vmem:[%s2] sm:$0xff]
  %v29 = vld [vmem:[%s2 + $0x8] sm:$0xff]
  %s30 = scalar_lea.vmem %s2, 16
  %v31 = vld [vmem:[%s30] sm:$0xff]
  %v32 = vld [vmem:[%s30 + $0x8] sm:$0xff]
  %v33 = vld [vmem:[%s3] sm:$0xff]
  %v34 = vld [vmem:[%s3 + $0x8] sm:$0xff]
  %v35 = vld [vmem:[%s3 + $0x10] sm:$0xff]
  %v36 = vld [vmem:[%s3 + $0x18] sm:$0xff]
  %v37 = vld [vmem:[%s3 + $0x20] sm:$0xff]
  %v38 = vld [vmem:[%s3 + $0x28] sm:$0xff]
  %v39 = vld [vmem:[%s3 + $0x30] sm:$0x3]
  %v40 = vld [vmem:[%s4] sm:$0x1]
  %v41 = vld [vmem:[%s5] sm:$0xff]
  %v42 = vld [vmem:[%s5 + $0x8] sm:$0xff]
  %v43 = vld [vmem:[%s5 + $0x10] sm:$0xff]
  %v44 = vld [vmem:[%s5 + $0x18] sm:$0xff]
  %v45 = vld [vmem:[%s5 + $0x20] sm:$0xff]
  %v46 = vld [vmem:[%s5 + $0x28] sm:$0xff]
  %v47 = vld [vmem:[%s5 + $0x30] sm:$0x3]
  %v48 = vld [vmem:[%s6] sm:$0x1]
  %v49 = vld [vmem:[%s0] sm:$0xff]
  %v50 = vld [vmem:[%s0 + $0x8] sm:$0xff]
  %v51 = vld [vmem:[%s1] sm:$0xff]
  %v52 = vld [vmem:[%s1 + $0x8] sm:$0xff]
  %55 = vrot.lane.b32.xlu0 %v51, 2
  %v56 = vpop.permute.xlu0 %55
  %57 = vrot.lane.b32.xlu0 %v52, 2
  %v58 = vpop.permute.xlu0 %57
  %vm61 = vcmask 15360
  %v62 = vsel %vm61, %v49, %v56
  %v63 = vsel %vm61, %v50, %v58
  %vm64 = vcmask 130048
  %v66 = vsel %vm64, %v28, 0
  %v69 = vsel %vm64, %v29, 0
  %71 = vmatpush.msra.mxu0 0.0
  %72 = vmatpush.msra.mxu0 0.0
  %73 = vmatpush.msra.mxu0 0.0
  %74 = vmatpush.msra.mxu0 0.0
  %75 = vmatpush.msra.mxu0 0.0
  %76 = vmatpush.msra.mxu0 0.0
  %77 = vmatpush.msra.mxu0 0.0
  %78 = vmatpush.msra.mxu0 0.0
  %79 = vmatpush.msra.mxu0 0.0
  %80 = vmatpush.msra.mxu0 0.0
  %81 = vmatpush.msra.mxu0 0.0
  %82 = vmatpush.msra.mxu0 0.0
  %83 = vmatpush.msra.mxu0 0.0
  %84 = vmatpush.msra.mxu0 0.0
  %v85 = vand.u32 %v63, 4294901760
  %86 = vmatpush.msra.mxu0 %v85
  %v87 = vand.u32 %v62, 4294901760
  %88 = vmatpush.msra.mxu0 %v87
  %v89 = vand.u32 %v66, 4294901760
  %v90 = vsub.f32 %v66, %v89
  %v91 = vand.u32 %v90, 4294901760
  %v92 = vsub.f32 %v90, %v91
  %v93 = vand.u32 %v92, 4294901760
  %94 = vmatmul.f32.gmra.mxu0 %v93
  %v95 = vpop.f32.mrf.mxu0
  %v96 = vadd.f32 0.0, %v95
  %v97 = vand.u32 %v69, 4294901760
  %v98 = vsub.f32 %v69, %v97
  %v99 = vand.u32 %v98, 4294901760
  %v100 = vsub.f32 %v98, %v99
  %v101 = vand.u32 %v100, 4294901760
  %102 = vmatmul.f32.gmra.mxu0 %v101
  %v103 = vpop.f32.mrf.mxu0
  %v104 = vadd.f32 0.0, %v103
  %105 = vdwg.mxu0
  %106 = vmatpush.msra.mxu0 0.0
  %107 = vmatpush.msra.mxu0 0.0
  %108 = vmatpush.msra.mxu0 0.0
  %109 = vmatpush.msra.mxu0 0.0
  %110 = vmatpush.msra.mxu0 0.0
  %111 = vmatpush.msra.mxu0 0.0
  %112 = vmatpush.msra.mxu0 0.0
  %113 = vmatpush.msra.mxu0 0.0
  %114 = vmatpush.msra.mxu0 0.0
  %115 = vmatpush.msra.mxu0 0.0
  %116 = vmatpush.msra.mxu0 0.0
  %117 = vmatpush.msra.mxu0 0.0
  %118 = vmatpush.msra.mxu0 0.0
  %119 = vmatpush.msra.mxu0 0.0
  %v120 = vand.u32 %v63, 4294901760
  %v121 = vsub.f32 %v63, %v120
  %v122 = vand.u32 %v121, 4294901760
  %v123 = vsub.f32 %v121, %v122
  %v124 = vand.u32 %v123, 4294901760
  %125 = vmatpush.msra.mxu0 %v124
  %v126 = vand.u32 %v62, 4294901760
  %v127 = vsub.f32 %v62, %v126
  %v128 = vand.u32 %v127, 4294901760
  %v129 = vsub.f32 %v127, %v128
  %v130 = vand.u32 %v129, 4294901760
  %131 = vmatpush.msra.mxu0 %v130
  %v132 = vand.u32 %v66, 4294901760
  %133 = vmatmul.f32.gmra.mxu0 %v132
  %v134 = vpop.f32.mrf.mxu0
  %v135 = vadd.f32 %v96, %v134
  %v136 = vand.u32 %v69, 4294901760
  %137 = vmatmul.f32.gmra.mxu0 %v136
  %v138 = vpop.f32.mrf.mxu0
  %v139 = vadd.f32 %v104, %v138
  %140 = vdwg.mxu0
  %141 = vmatpush.msra.mxu0 0.0
  %142 = vmatpush.msra.mxu0 0.0
  %143 = vmatpush.msra.mxu0 0.0
  %144 = vmatpush.msra.mxu0 0.0
  %145 = vmatpush.msra.mxu0 0.0
  %146 = vmatpush.msra.mxu0 0.0
  %147 = vmatpush.msra.mxu0 0.0
  %148 = vmatpush.msra.mxu0 0.0
  %149 = vmatpush.msra.mxu0 0.0
  %150 = vmatpush.msra.mxu0 0.0
  %151 = vmatpush.msra.mxu0 0.0
  %152 = vmatpush.msra.mxu0 0.0
  %153 = vmatpush.msra.mxu0 0.0
  %154 = vmatpush.msra.mxu0 0.0
  %v155 = vand.u32 %v63, 4294901760
  %v156 = vsub.f32 %v63, %v155
  %157 = vmatpush.msra.mxu0 %v156
  %v158 = vand.u32 %v62, 4294901760
  %v159 = vsub.f32 %v62, %v158
  %160 = vmatpush.msra.mxu0 %v159
  %v161 = vand.u32 %v66, 4294901760
  %v162 = vsub.f32 %v66, %v161
  %163 = vmatmul.f32.gmra.mxu0 %v162
  %v164 = vpop.f32.mrf.mxu0
  %v165 = vadd.f32 %v135, %v164
  %v166 = vand.u32 %v69, 4294901760
  %v167 = vsub.f32 %v69, %v166
  %168 = vmatmul.f32.gmra.mxu0 %v167
  %v169 = vpop.f32.mrf.mxu0
  %v170 = vadd.f32 %v139, %v169
  %171 = vdwg.mxu0
  %172 = vmatpush.msra.mxu0 0.0
  %173 = vmatpush.msra.mxu0 0.0
  %174 = vmatpush.msra.mxu0 0.0
  %175 = vmatpush.msra.mxu0 0.0
  %176 = vmatpush.msra.mxu0 0.0
  %177 = vmatpush.msra.mxu0 0.0
  %178 = vmatpush.msra.mxu0 0.0
  %179 = vmatpush.msra.mxu0 0.0
  %180 = vmatpush.msra.mxu0 0.0
  %181 = vmatpush.msra.mxu0 0.0
  %182 = vmatpush.msra.mxu0 0.0
  %183 = vmatpush.msra.mxu0 0.0
  %184 = vmatpush.msra.mxu0 0.0
  %185 = vmatpush.msra.mxu0 0.0
  %v186 = vand.u32 %v63, 4294901760
  %187 = vmatpush.msra.mxu0 %v186
  %v188 = vand.u32 %v62, 4294901760
  %189 = vmatpush.msra.mxu0 %v188
  %v190 = vand.u32 %v66, 4294901760
  %v191 = vsub.f32 %v66, %v190
  %v192 = vand.u32 %v191, 4294901760
  %193 = vmatmul.f32.gmra.mxu0 %v192
  %v194 = vpop.f32.mrf.mxu0
  %v195 = vadd.f32 %v165, %v194
  %v196 = vand.u32 %v69, 4294901760
  %v197 = vsub.f32 %v69, %v196
  %v198 = vand.u32 %v197, 4294901760
  %199 = vmatmul.f32.gmra.mxu0 %v198
  %v200 = vpop.f32.mrf.mxu0
  %v201 = vadd.f32 %v170, %v200
  %202 = vdwg.mxu0
  %203 = vmatpush.msra.mxu0 0.0
  %204 = vmatpush.msra.mxu0 0.0
  %205 = vmatpush.msra.mxu0 0.0
  %206 = vmatpush.msra.mxu0 0.0
  %207 = vmatpush.msra.mxu0 0.0
  %208 = vmatpush.msra.mxu0 0.0
  %209 = vmatpush.msra.mxu0 0.0
  %210 = vmatpush.msra.mxu0 0.0
  %211 = vmatpush.msra.mxu0 0.0
  %212 = vmatpush.msra.mxu0 0.0
  %213 = vmatpush.msra.mxu0 0.0
  %214 = vmatpush.msra.mxu0 0.0
  %215 = vmatpush.msra.mxu0 0.0
  %216 = vmatpush.msra.mxu0 0.0
  %v217 = vand.u32 %v63, 4294901760
  %v218 = vsub.f32 %v63, %v217
  %v219 = vand.u32 %v218, 4294901760
  %220 = vmatpush.msra.mxu0 %v219
  %v221 = vand.u32 %v62, 4294901760
  %v222 = vsub.f32 %v62, %v221
  %v223 = vand.u32 %v222, 4294901760
  %224 = vmatpush.msra.mxu0 %v223
  %v225 = vand.u32 %v66, 4294901760
  %226 = vmatmul.f32.gmra.mxu0 %v225
  %v227 = vpop.f32.mrf.mxu0
  %v228 = vadd.f32 %v195, %v227
  %v229 = vand.u32 %v69, 4294901760
  %230 = vmatmul.f32.gmra.mxu0 %v229
  %v231 = vpop.f32.mrf.mxu0
  %v232 = vadd.f32 %v201, %v231
  %233 = vdwg.mxu0
  %234 = vmatpush.msra.mxu0 0.0
  %235 = vmatpush.msra.mxu0 0.0
  %236 = vmatpush.msra.mxu0 0.0
  %237 = vmatpush.msra.mxu0 0.0
  %238 = vmatpush.msra.mxu0 0.0
  %239 = vmatpush.msra.mxu0 0.0
  %240 = vmatpush.msra.mxu0 0.0
  %241 = vmatpush.msra.mxu0 0.0
  %242 = vmatpush.msra.mxu0 0.0
  %243 = vmatpush.msra.mxu0 0.0
  %244 = vmatpush.msra.mxu0 0.0
  %245 = vmatpush.msra.mxu0 0.0
  %246 = vmatpush.msra.mxu0 0.0
  %247 = vmatpush.msra.mxu0 0.0
  %v248 = vand.u32 %v63, 4294901760
  %249 = vmatpush.msra.mxu0 %v248
  %v250 = vand.u32 %v62, 4294901760
  %251 = vmatpush.msra.mxu0 %v250
  %v252 = vand.u32 %v66, 4294901760
  %253 = vmatmul.f32.gmra.mxu0 %v252
  %v254 = vpop.f32.mrf.mxu0
  %v255 = vadd.f32 %v228, %v254
  %v256 = vand.u32 %v69, 4294901760
  %257 = vmatmul.f32.gmra.mxu0 %v256
  %v258 = vpop.f32.mrf.mxu0
  %v259 = vadd.f32 %v232, %v258
  %260 = vdwg.mxu0
  %261 = vmatpush.msra.mxu0 0.0
  %262 = vmatpush.msra.mxu0 0.0
  %263 = vmatpush.msra.mxu0 0.0
  %264 = vmatpush.msra.mxu0 0.0
  %265 = vmatpush.msra.mxu0 0.0
  %266 = vmatpush.msra.mxu0 0.0
  %267 = vmatpush.msra.mxu0 0.0
  %268 = vmatpush.msra.mxu0 0.0
  %269 = vmatpush.msra.mxu0 0.0
  %270 = vmatpush.msra.mxu0 0.0
  %271 = vmatpush.msra.mxu0 0.0
  %272 = vmatpush.msra.mxu0 0.0
  %273 = vmatpush.msra.mxu0 0.0
  %274 = vmatpush.msra.mxu0 0.0
  %v275 = vand.u32 %v259, 4294901760
  %276 = vmatpush.msra.mxu0 %v275
  %v277 = vand.u32 %v255, 4294901760
  %278 = vmatpush.msra.mxu0 %v277
  %v279 = vand.u32 %v66, 4294901760
  %v280 = vsub.f32 %v66, %v279
  %v281 = vand.u32 %v280, 4294901760
  %v282 = vsub.f32 %v280, %v281
  %v283 = vand.u32 %v282, 4294901760
  %284 = vmatmul.f32.gmra.mxu0 %v283
  %v285 = vpop.f32.mrf.mxu0
  %v286 = vadd.f32 0.0, %v285
  %v287 = vand.u32 %v69, 4294901760
  %v288 = vsub.f32 %v69, %v287
  %v289 = vand.u32 %v288, 4294901760
  %v290 = vsub.f32 %v288, %v289
  %v291 = vand.u32 %v290, 4294901760
  %292 = vmatmul.f32.gmra.mxu0 %v291
  %v293 = vpop.f32.mrf.mxu0
  %v294 = vadd.f32 0.0, %v293
  %295 = vdwg.mxu0
  %296 = vmatpush.msra.mxu0 0.0
  %297 = vmatpush.msra.mxu0 0.0
  %298 = vmatpush.msra.mxu0 0.0
  %299 = vmatpush.msra.mxu0 0.0
  %300 = vmatpush.msra.mxu0 0.0
  %301 = vmatpush.msra.mxu0 0.0
  %302 = vmatpush.msra.mxu0 0.0
  %303 = vmatpush.msra.mxu0 0.0
  %304 = vmatpush.msra.mxu0 0.0
  %305 = vmatpush.msra.mxu0 0.0
  %306 = vmatpush.msra.mxu0 0.0
  %307 = vmatpush.msra.mxu0 0.0
  %308 = vmatpush.msra.mxu0 0.0
  %309 = vmatpush.msra.mxu0 0.0
  %v310 = vand.u32 %v259, 4294901760
  %v311 = vsub.f32 %v259, %v310
  %v312 = vand.u32 %v311, 4294901760
  %v313 = vsub.f32 %v311, %v312
  %v314 = vand.u32 %v313, 4294901760
  %315 = vmatpush.msra.mxu0 %v314
  %v316 = vand.u32 %v255, 4294901760
  %v317 = vsub.f32 %v255, %v316
  %v318 = vand.u32 %v317, 4294901760
  %v319 = vsub.f32 %v317, %v318
  %v320 = vand.u32 %v319, 4294901760
  %321 = vmatpush.msra.mxu0 %v320
  %v322 = vand.u32 %v66, 4294901760
  %323 = vmatmul.f32.gmra.mxu0 %v322
  %v324 = vpop.f32.mrf.mxu0
  %v325 = vadd.f32 %v286, %v324
  %v326 = vand.u32 %v69, 4294901760
  %327 = vmatmul.f32.gmra.mxu0 %v326
  %v328 = vpop.f32.mrf.mxu0
  %v329 = vadd.f32 %v294, %v328
  %330 = vdwg.mxu0
  %331 = vmatpush.msra.mxu0 0.0
  %332 = vmatpush.msra.mxu0 0.0
  %333 = vmatpush.msra.mxu0 0.0
  %334 = vmatpush.msra.mxu0 0.0
  %335 = vmatpush.msra.mxu0 0.0
  %336 = vmatpush.msra.mxu0 0.0
  %337 = vmatpush.msra.mxu0 0.0
  %338 = vmatpush.msra.mxu0 0.0
  %339 = vmatpush.msra.mxu0 0.0
  %340 = vmatpush.msra.mxu0 0.0
  %341 = vmatpush.msra.mxu0 0.0
  %342 = vmatpush.msra.mxu0 0.0
  %343 = vmatpush.msra.mxu0 0.0
  %344 = vmatpush.msra.mxu0 0.0
  %v345 = vand.u32 %v259, 4294901760
  %v346 = vsub.f32 %v259, %v345
  %347 = vmatpush.msra.mxu0 %v346
  %v348 = vand.u32 %v255, 4294901760
  %v349 = vsub.f32 %v255, %v348
  %350 = vmatpush.msra.mxu0 %v349
  %v351 = vand.u32 %v66, 4294901760
  %v352 = vsub.f32 %v66, %v351
  %353 = vmatmul.f32.gmra.mxu0 %v352
  %v354 = vpop.f32.mrf.mxu0
  %v355 = vadd.f32 %v325, %v354
  %v356 = vand.u32 %v69, 4294901760
  %v357 = vsub.f32 %v69, %v356
  %358 = vmatmul.f32.gmra.mxu0 %v357
  %v359 = vpop.f32.mrf.mxu0
  %v360 = vadd.f32 %v329, %v359
  %361 = vdwg.mxu0
  %362 = vmatpush.msra.mxu0 0.0
  %363 = vmatpush.msra.mxu0 0.0
  %364 = vmatpush.msra.mxu0 0.0
  %365 = vmatpush.msra.mxu0 0.0
  %366 = vmatpush.msra.mxu0 0.0
  %367 = vmatpush.msra.mxu0 0.0
  %368 = vmatpush.msra.mxu0 0.0
  %369 = vmatpush.msra.mxu0 0.0
  %370 = vmatpush.msra.mxu0 0.0
  %371 = vmatpush.msra.mxu0 0.0
  %372 = vmatpush.msra.mxu0 0.0
  %373 = vmatpush.msra.mxu0 0.0
  %374 = vmatpush.msra.mxu0 0.0
  %375 = vmatpush.msra.mxu0 0.0
  %v376 = vand.u32 %v259, 4294901760
  %377 = vmatpush.msra.mxu0 %v376
  %v378 = vand.u32 %v255, 4294901760
  %379 = vmatpush.msra.mxu0 %v378
  %v380 = vand.u32 %v66, 4294901760
  %v381 = vsub.f32 %v66, %v380
  %v382 = vand.u32 %v381, 4294901760
  %383 = vmatmul.f32.gmra.mxu0 %v382
  %v384 = vpop.f32.mrf.mxu0
  %v385 = vadd.f32 %v355, %v384
  %v386 = vand.u32 %v69, 4294901760
  %v387 = vsub.f32 %v69, %v386
  %v388 = vand.u32 %v387, 4294901760
  %389 = vmatmul.f32.gmra.mxu0 %v388
  %v390 = vpop.f32.mrf.mxu0
  %v391 = vadd.f32 %v360, %v390
  %392 = vdwg.mxu0
  %393 = vmatpush.msra.mxu0 0.0
  %394 = vmatpush.msra.mxu0 0.0
  %395 = vmatpush.msra.mxu0 0.0
  %396 = vmatpush.msra.mxu0 0.0
  %397 = vmatpush.msra.mxu0 0.0
  %398 = vmatpush.msra.mxu0 0.0
  %399 = vmatpush.msra.mxu0 0.0
  %400 = vmatpush.msra.mxu0 0.0
  %401 = vmatpush.msra.mxu0 0.0
  %402 = vmatpush.msra.mxu0 0.0
  %403 = vmatpush.msra.mxu0 0.0
  %404 = vmatpush.msra.mxu0 0.0
  %405 = vmatpush.msra.mxu0 0.0
  %406 = vmatpush.msra.mxu0 0.0
  %v407 = vand.u32 %v259, 4294901760
  %v408 = vsub.f32 %v259, %v407
  %v409 = vand.u32 %v408, 4294901760
  %410 = vmatpush.msra.mxu0 %v409
  %v411 = vand.u32 %v255, 4294901760
  %v412 = vsub.f32 %v255, %v411
  %v413 = vand.u32 %v412, 4294901760
  %414 = vmatpush.msra.mxu0 %v413
  %v415 = vand.u32 %v66, 4294901760
  %416 = vmatmul.f32.gmra.mxu0 %v415
  %v417 = vpop.f32.mrf.mxu0
  %v418 = vadd.f32 %v385, %v417
  %v419 = vand.u32 %v69, 4294901760
  %420 = vmatmul.f32.gmra.mxu0 %v419
  %v421 = vpop.f32.mrf.mxu0
  %v422 = vadd.f32 %v391, %v421
  %423 = vdwg.mxu0
  %424 = vmatpush.msra.mxu0 0.0
  %425 = vmatpush.msra.mxu0 0.0
  %426 = vmatpush.msra.mxu0 0.0
  %427 = vmatpush.msra.mxu0 0.0
  %428 = vmatpush.msra.mxu0 0.0
  %429 = vmatpush.msra.mxu0 0.0
  %430 = vmatpush.msra.mxu0 0.0
  %431 = vmatpush.msra.mxu0 0.0
  %432 = vmatpush.msra.mxu0 0.0
  %433 = vmatpush.msra.mxu0 0.0
  %434 = vmatpush.msra.mxu0 0.0
  %435 = vmatpush.msra.mxu0 0.0
  %436 = vmatpush.msra.mxu0 0.0
  %437 = vmatpush.msra.mxu0 0.0
  %v438 = vand.u32 %v259, 4294901760
  %439 = vmatpush.msra.mxu0 %v438
  %v440 = vand.u32 %v255, 4294901760
  %441 = vmatpush.msra.mxu0 %v440
  %v442 = vand.u32 %v66, 4294901760
  %443 = vmatmul.f32.gmra.mxu0 %v442
  %v444 = vpop.f32.mrf.mxu0
  %v445 = vadd.f32 %v418, %v444
  %v446 = vand.u32 %v69, 4294901760
  %447 = vmatmul.f32.gmra.mxu0 %v446
  %v448 = vpop.f32.mrf.mxu0
  %v449 = vadd.f32 %v422, %v448
  %450 = vdwg.mxu0
  %v451 = vmul.f32 %v445, 2.0
  %v452 = vmul.f32 %v449, 2.0
  %v453 = vsub.f32 %v451, %v62
  %v454 = vsub.f32 %v452, %v63
  %v456 = vsel %vm64, %v31, 0
  %v459 = vsel %vm64, %v32, 0
  %461 = vmatpush.msra.mxu0 0.0
  %462 = vmatpush.msra.mxu0 0.0
  %463 = vmatpush.msra.mxu0 0.0
  %464 = vmatpush.msra.mxu0 0.0
  %465 = vmatpush.msra.mxu0 0.0
  %466 = vmatpush.msra.mxu0 0.0
  %467 = vmatpush.msra.mxu0 0.0
  %468 = vmatpush.msra.mxu0 0.0
  %469 = vmatpush.msra.mxu0 0.0
  %470 = vmatpush.msra.mxu0 0.0
  %471 = vmatpush.msra.mxu0 0.0
  %472 = vmatpush.msra.mxu0 0.0
  %473 = vmatpush.msra.mxu0 0.0
  %474 = vmatpush.msra.mxu0 0.0
  %v475 = vand.u32 %v259, 4294901760
  %476 = vmatpush.msra.mxu0 %v475
  %v477 = vand.u32 %v255, 4294901760
  %478 = vmatpush.msra.mxu0 %v477
  %v479 = vand.u32 %v456, 4294901760
  %v480 = vsub.f32 %v456, %v479
  %v481 = vand.u32 %v480, 4294901760
  %v482 = vsub.f32 %v480, %v481
  %v483 = vand.u32 %v482, 4294901760
  %484 = vmatmul.f32.gmra.mxu0 %v483
  %v485 = vpop.f32.mrf.mxu0
  %v486 = vadd.f32 0.0, %v485
  %v487 = vand.u32 %v459, 4294901760
  %v488 = vsub.f32 %v459, %v487
  %v489 = vand.u32 %v488, 4294901760
  %v490 = vsub.f32 %v488, %v489
  %v491 = vand.u32 %v490, 4294901760
  %492 = vmatmul.f32.gmra.mxu0 %v491
  %v493 = vpop.f32.mrf.mxu0
  %v494 = vadd.f32 0.0, %v493
  %495 = vdwg.mxu0
  %496 = vmatpush.msra.mxu0 0.0
  %497 = vmatpush.msra.mxu0 0.0
  %498 = vmatpush.msra.mxu0 0.0
  %499 = vmatpush.msra.mxu0 0.0
  %500 = vmatpush.msra.mxu0 0.0
  %501 = vmatpush.msra.mxu0 0.0
  %502 = vmatpush.msra.mxu0 0.0
  %503 = vmatpush.msra.mxu0 0.0
  %504 = vmatpush.msra.mxu0 0.0
  %505 = vmatpush.msra.mxu0 0.0
  %506 = vmatpush.msra.mxu0 0.0
  %507 = vmatpush.msra.mxu0 0.0
  %508 = vmatpush.msra.mxu0 0.0
  %509 = vmatpush.msra.mxu0 0.0
  %v510 = vand.u32 %v259, 4294901760
  %v511 = vsub.f32 %v259, %v510
  %v512 = vand.u32 %v511, 4294901760
  %v513 = vsub.f32 %v511, %v512
  %v514 = vand.u32 %v513, 4294901760
  %515 = vmatpush.msra.mxu0 %v514
  %v516 = vand.u32 %v255, 4294901760
  %v517 = vsub.f32 %v255, %v516
  %v518 = vand.u32 %v517, 4294901760
  %v519 = vsub.f32 %v517, %v518
  %v520 = vand.u32 %v519, 4294901760
  %521 = vmatpush.msra.mxu0 %v520
  %v522 = vand.u32 %v456, 4294901760
  %523 = vmatmul.f32.gmra.mxu0 %v522
  %v524 = vpop.f32.mrf.mxu0
  %v525 = vadd.f32 %v486, %v524
  %v526 = vand.u32 %v459, 4294901760
  %527 = vmatmul.f32.gmra.mxu0 %v526
  %v528 = vpop.f32.mrf.mxu0
  %v529 = vadd.f32 %v494, %v528
  %530 = vdwg.mxu0
  %531 = vmatpush.msra.mxu0 0.0
  %532 = vmatpush.msra.mxu0 0.0
  %533 = vmatpush.msra.mxu0 0.0
  %534 = vmatpush.msra.mxu0 0.0
  %535 = vmatpush.msra.mxu0 0.0
  %536 = vmatpush.msra.mxu0 0.0
  %537 = vmatpush.msra.mxu0 0.0
  %538 = vmatpush.msra.mxu0 0.0
  %539 = vmatpush.msra.mxu0 0.0
  %540 = vmatpush.msra.mxu0 0.0
  %541 = vmatpush.msra.mxu0 0.0
  %542 = vmatpush.msra.mxu0 0.0
  %543 = vmatpush.msra.mxu0 0.0
  %544 = vmatpush.msra.mxu0 0.0
  %v545 = vand.u32 %v259, 4294901760
  %v546 = vsub.f32 %v259, %v545
  %547 = vmatpush.msra.mxu0 %v546
  %v548 = vand.u32 %v255, 4294901760
  %v549 = vsub.f32 %v255, %v548
  %550 = vmatpush.msra.mxu0 %v549
  %v551 = vand.u32 %v456, 4294901760
  %v552 = vsub.f32 %v456, %v551
  %553 = vmatmul.f32.gmra.mxu0 %v552
  %v554 = vpop.f32.mrf.mxu0
  %v555 = vadd.f32 %v525, %v554
  %v556 = vand.u32 %v459, 4294901760
  %v557 = vsub.f32 %v459, %v556
  %558 = vmatmul.f32.gmra.mxu0 %v557
  %v559 = vpop.f32.mrf.mxu0
  %v560 = vadd.f32 %v529, %v559
  %561 = vdwg.mxu0
  %562 = vmatpush.msra.mxu0 0.0
  %563 = vmatpush.msra.mxu0 0.0
  %564 = vmatpush.msra.mxu0 0.0
  %565 = vmatpush.msra.mxu0 0.0
  %566 = vmatpush.msra.mxu0 0.0
  %567 = vmatpush.msra.mxu0 0.0
  %568 = vmatpush.msra.mxu0 0.0
  %569 = vmatpush.msra.mxu0 0.0
  %570 = vmatpush.msra.mxu0 0.0
  %571 = vmatpush.msra.mxu0 0.0
  %572 = vmatpush.msra.mxu0 0.0
  %573 = vmatpush.msra.mxu0 0.0
  %574 = vmatpush.msra.mxu0 0.0
  %575 = vmatpush.msra.mxu0 0.0
  %v576 = vand.u32 %v259, 4294901760
  %577 = vmatpush.msra.mxu0 %v576
  %v578 = vand.u32 %v255, 4294901760
  %579 = vmatpush.msra.mxu0 %v578
  %v580 = vand.u32 %v456, 4294901760
  %v581 = vsub.f32 %v456, %v580
  %v582 = vand.u32 %v581, 4294901760
  %583 = vmatmul.f32.gmra.mxu0 %v582
  %v584 = vpop.f32.mrf.mxu0
  %v585 = vadd.f32 %v555, %v584
  %v586 = vand.u32 %v459, 4294901760
  %v587 = vsub.f32 %v459, %v586
  %v588 = vand.u32 %v587, 4294901760
  %589 = vmatmul.f32.gmra.mxu0 %v588
  %v590 = vpop.f32.mrf.mxu0
  %v591 = vadd.f32 %v560, %v590
  %592 = vdwg.mxu0
  %593 = vmatpush.msra.mxu0 0.0
  %594 = vmatpush.msra.mxu0 0.0
  %595 = vmatpush.msra.mxu0 0.0
  %596 = vmatpush.msra.mxu0 0.0
  %597 = vmatpush.msra.mxu0 0.0
  %598 = vmatpush.msra.mxu0 0.0
  %599 = vmatpush.msra.mxu0 0.0
  %600 = vmatpush.msra.mxu0 0.0
  %601 = vmatpush.msra.mxu0 0.0
  %602 = vmatpush.msra.mxu0 0.0
  %603 = vmatpush.msra.mxu0 0.0
  %604 = vmatpush.msra.mxu0 0.0
  %605 = vmatpush.msra.mxu0 0.0
  %606 = vmatpush.msra.mxu0 0.0
  %v607 = vand.u32 %v259, 4294901760
  %v608 = vsub.f32 %v259, %v607
  %v609 = vand.u32 %v608, 4294901760
  %610 = vmatpush.msra.mxu0 %v609
  %v611 = vand.u32 %v255, 4294901760
  %v612 = vsub.f32 %v255, %v611
  %v613 = vand.u32 %v612, 4294901760
  %614 = vmatpush.msra.mxu0 %v613
  %v615 = vand.u32 %v456, 4294901760
  %616 = vmatmul.f32.gmra.mxu0 %v615
  %v617 = vpop.f32.mrf.mxu0
  %v618 = vadd.f32 %v585, %v617
  %v619 = vand.u32 %v459, 4294901760
  %620 = vmatmul.f32.gmra.mxu0 %v619
  %v621 = vpop.f32.mrf.mxu0
  %v622 = vadd.f32 %v591, %v621
  %623 = vdwg.mxu0
  %624 = vmatpush.msra.mxu0 0.0
  %625 = vmatpush.msra.mxu0 0.0
  %626 = vmatpush.msra.mxu0 0.0
  %627 = vmatpush.msra.mxu0 0.0
  %628 = vmatpush.msra.mxu0 0.0
  %629 = vmatpush.msra.mxu0 0.0
  %630 = vmatpush.msra.mxu0 0.0
  %631 = vmatpush.msra.mxu0 0.0
  %632 = vmatpush.msra.mxu0 0.0
  %633 = vmatpush.msra.mxu0 0.0
  %634 = vmatpush.msra.mxu0 0.0
  %635 = vmatpush.msra.mxu0 0.0
  %636 = vmatpush.msra.mxu0 0.0
  %637 = vmatpush.msra.mxu0 0.0
  %v638 = vand.u32 %v259, 4294901760
  %639 = vmatpush.msra.mxu0 %v638
  %v640 = vand.u32 %v255, 4294901760
  %641 = vmatpush.msra.mxu0 %v640
  %v642 = vand.u32 %v456, 4294901760
  %643 = vmatmul.f32.gmra.mxu0 %v642
  %v644 = vpop.f32.mrf.mxu0
  %v645 = vadd.f32 %v618, %v644
  %v646 = vand.u32 %v459, 4294901760
  %647 = vmatmul.f32.gmra.mxu0 %v646
  %v648 = vpop.f32.mrf.mxu0
  %v649 = vadd.f32 %v622, %v648
  %650 = vdwg.mxu0
  %651 = vmatpush.msra.mxu0 0.0
  %652 = vmatpush.msra.mxu0 0.0
  %653 = vmatpush.msra.mxu0 0.0
  %654 = vmatpush.msra.mxu0 0.0
  %655 = vmatpush.msra.mxu0 0.0
  %656 = vmatpush.msra.mxu0 0.0
  %657 = vmatpush.msra.mxu0 0.0
  %658 = vmatpush.msra.mxu0 0.0
  %659 = vmatpush.msra.mxu0 0.0
  %660 = vmatpush.msra.mxu0 0.0
  %661 = vmatpush.msra.mxu0 0.0
  %662 = vmatpush.msra.mxu0 0.0
  %663 = vmatpush.msra.mxu0 0.0
  %664 = vmatpush.msra.mxu0 0.0
  %v665 = vand.u32 %v649, 4294901760
  %666 = vmatpush.msra.mxu0 %v665
  %v667 = vand.u32 %v645, 4294901760
  %668 = vmatpush.msra.mxu0 %v667
  %v669 = vand.u32 %v456, 4294901760
  %v670 = vsub.f32 %v456, %v669
  %v671 = vand.u32 %v670, 4294901760
  %v672 = vsub.f32 %v670, %v671
  %v673 = vand.u32 %v672, 4294901760
  %674 = vmatmul.f32.gmra.mxu0 %v673
  %v675 = vpop.f32.mrf.mxu0
  %v676 = vadd.f32 0.0, %v675
  %v677 = vand.u32 %v459, 4294901760
  %v678 = vsub.f32 %v459, %v677
  %v679 = vand.u32 %v678, 4294901760
  %v680 = vsub.f32 %v678, %v679
  %v681 = vand.u32 %v680, 4294901760
  %682 = vmatmul.f32.gmra.mxu0 %v681
  %v683 = vpop.f32.mrf.mxu0
  %v684 = vadd.f32 0.0, %v683
  %685 = vdwg.mxu0
  %686 = vmatpush.msra.mxu0 0.0
  %687 = vmatpush.msra.mxu0 0.0
  %688 = vmatpush.msra.mxu0 0.0
  %689 = vmatpush.msra.mxu0 0.0
  %690 = vmatpush.msra.mxu0 0.0
  %691 = vmatpush.msra.mxu0 0.0
  %692 = vmatpush.msra.mxu0 0.0
  %693 = vmatpush.msra.mxu0 0.0
  %694 = vmatpush.msra.mxu0 0.0
  %695 = vmatpush.msra.mxu0 0.0
  %696 = vmatpush.msra.mxu0 0.0
  %697 = vmatpush.msra.mxu0 0.0
  %698 = vmatpush.msra.mxu0 0.0
  %699 = vmatpush.msra.mxu0 0.0
  %v700 = vand.u32 %v649, 4294901760
  %v701 = vsub.f32 %v649, %v700
  %v702 = vand.u32 %v701, 4294901760
  %v703 = vsub.f32 %v701, %v702
  %v704 = vand.u32 %v703, 4294901760
  %705 = vmatpush.msra.mxu0 %v704
  %v706 = vand.u32 %v645, 4294901760
  %v707 = vsub.f32 %v645, %v706
  %v708 = vand.u32 %v707, 4294901760
  %v709 = vsub.f32 %v707, %v708
  %v710 = vand.u32 %v709, 4294901760
  %711 = vmatpush.msra.mxu0 %v710
  %v712 = vand.u32 %v456, 4294901760
  %713 = vmatmul.f32.gmra.mxu0 %v712
  %v714 = vpop.f32.mrf.mxu0
  %v715 = vadd.f32 %v676, %v714
  %v716 = vand.u32 %v459, 4294901760
  %717 = vmatmul.f32.gmra.mxu0 %v716
  %v718 = vpop.f32.mrf.mxu0
  %v719 = vadd.f32 %v684, %v718
  %720 = vdwg.mxu0
  %721 = vmatpush.msra.mxu0 0.0
  %722 = vmatpush.msra.mxu0 0.0
  %723 = vmatpush.msra.mxu0 0.0
  %724 = vmatpush.msra.mxu0 0.0
  %725 = vmatpush.msra.mxu0 0.0
  %726 = vmatpush.msra.mxu0 0.0
  %727 = vmatpush.msra.mxu0 0.0
  %728 = vmatpush.msra.mxu0 0.0
  %729 = vmatpush.msra.mxu0 0.0
  %730 = vmatpush.msra.mxu0 0.0
  %731 = vmatpush.msra.mxu0 0.0
  %732 = vmatpush.msra.mxu0 0.0
  %733 = vmatpush.msra.mxu0 0.0
  %734 = vmatpush.msra.mxu0 0.0
  %v735 = vand.u32 %v649, 4294901760
  %v736 = vsub.f32 %v649, %v735
  %737 = vmatpush.msra.mxu0 %v736
  %v738 = vand.u32 %v645, 4294901760
  %v739 = vsub.f32 %v645, %v738
  %740 = vmatpush.msra.mxu0 %v739
  %v741 = vand.u32 %v456, 4294901760
  %v742 = vsub.f32 %v456, %v741
  %743 = vmatmul.f32.gmra.mxu0 %v742
  %v744 = vpop.f32.mrf.mxu0
  %v745 = vadd.f32 %v715, %v744
  %v746 = vand.u32 %v459, 4294901760
  %v747 = vsub.f32 %v459, %v746
  %748 = vmatmul.f32.gmra.mxu0 %v747
  %v749 = vpop.f32.mrf.mxu0
  %v750 = vadd.f32 %v719, %v749
  %751 = vdwg.mxu0
  %752 = vmatpush.msra.mxu0 0.0
  %753 = vmatpush.msra.mxu0 0.0
  %754 = vmatpush.msra.mxu0 0.0
  %755 = vmatpush.msra.mxu0 0.0
  %756 = vmatpush.msra.mxu0 0.0
  %757 = vmatpush.msra.mxu0 0.0
  %758 = vmatpush.msra.mxu0 0.0
  %759 = vmatpush.msra.mxu0 0.0
  %760 = vmatpush.msra.mxu0 0.0
  %761 = vmatpush.msra.mxu0 0.0
  %762 = vmatpush.msra.mxu0 0.0
  %763 = vmatpush.msra.mxu0 0.0
  %764 = vmatpush.msra.mxu0 0.0
  %765 = vmatpush.msra.mxu0 0.0
  %v766 = vand.u32 %v649, 4294901760
  %767 = vmatpush.msra.mxu0 %v766
  %v768 = vand.u32 %v645, 4294901760
  %769 = vmatpush.msra.mxu0 %v768
  %v770 = vand.u32 %v456, 4294901760
  %v771 = vsub.f32 %v456, %v770
  %v772 = vand.u32 %v771, 4294901760
  %773 = vmatmul.f32.gmra.mxu0 %v772
  %v774 = vpop.f32.mrf.mxu0
  %v775 = vadd.f32 %v745, %v774
  %v776 = vand.u32 %v459, 4294901760
  %v777 = vsub.f32 %v459, %v776
  %v778 = vand.u32 %v777, 4294901760
  %779 = vmatmul.f32.gmra.mxu0 %v778
  %v780 = vpop.f32.mrf.mxu0
  %v781 = vadd.f32 %v750, %v780
  %782 = vdwg.mxu0
  %783 = vmatpush.msra.mxu0 0.0
  %784 = vmatpush.msra.mxu0 0.0
  %785 = vmatpush.msra.mxu0 0.0
  %786 = vmatpush.msra.mxu0 0.0
  %787 = vmatpush.msra.mxu0 0.0
  %788 = vmatpush.msra.mxu0 0.0
  %789 = vmatpush.msra.mxu0 0.0
  %790 = vmatpush.msra.mxu0 0.0
  %791 = vmatpush.msra.mxu0 0.0
  %792 = vmatpush.msra.mxu0 0.0
  %793 = vmatpush.msra.mxu0 0.0
  %794 = vmatpush.msra.mxu0 0.0
  %795 = vmatpush.msra.mxu0 0.0
  %796 = vmatpush.msra.mxu0 0.0
  %v797 = vand.u32 %v649, 4294901760
  %v798 = vsub.f32 %v649, %v797
  %v799 = vand.u32 %v798, 4294901760
  %800 = vmatpush.msra.mxu0 %v799
  %v801 = vand.u32 %v645, 4294901760
  %v802 = vsub.f32 %v645, %v801
  %v803 = vand.u32 %v802, 4294901760
  %804 = vmatpush.msra.mxu0 %v803
  %v805 = vand.u32 %v456, 4294901760
  %806 = vmatmul.f32.gmra.mxu0 %v805
  %v807 = vpop.f32.mrf.mxu0
  %v808 = vadd.f32 %v775, %v807
  %v809 = vand.u32 %v459, 4294901760
  %810 = vmatmul.f32.gmra.mxu0 %v809
  %v811 = vpop.f32.mrf.mxu0
  %v812 = vadd.f32 %v781, %v811
  %813 = vdwg.mxu0
  %814 = vmatpush.msra.mxu0 0.0
  %815 = vmatpush.msra.mxu0 0.0
  %816 = vmatpush.msra.mxu0 0.0
  %817 = vmatpush.msra.mxu0 0.0
  %818 = vmatpush.msra.mxu0 0.0
  %819 = vmatpush.msra.mxu0 0.0
  %820 = vmatpush.msra.mxu0 0.0
  %821 = vmatpush.msra.mxu0 0.0
  %822 = vmatpush.msra.mxu0 0.0
  %823 = vmatpush.msra.mxu0 0.0
  %824 = vmatpush.msra.mxu0 0.0
  %825 = vmatpush.msra.mxu0 0.0
  %826 = vmatpush.msra.mxu0 0.0
  %827 = vmatpush.msra.mxu0 0.0
  %v828 = vand.u32 %v649, 4294901760
  %829 = vmatpush.msra.mxu0 %v828
  %v830 = vand.u32 %v645, 4294901760
  %831 = vmatpush.msra.mxu0 %v830
  %v832 = vand.u32 %v456, 4294901760
  %833 = vmatmul.f32.gmra.mxu0 %v832
  %v834 = vpop.f32.mrf.mxu0
  %v835 = vadd.f32 %v808, %v834
  %v836 = vand.u32 %v459, 4294901760
  %837 = vmatmul.f32.gmra.mxu0 %v836
  %v838 = vpop.f32.mrf.mxu0
  %v839 = vadd.f32 %v812, %v838
  %840 = vdwg.mxu0
  %v841 = vmul.f32 %v835, 2.0
  %v842 = vmul.f32 %v839, 2.0
  %v843 = vsub.f32 %v841, %v255
  %v844 = vsub.f32 %v842, %v259
  %847 = vrot.lane.b32.xlu0 %v255, 10
  %v848 = vpop.permute.xlu0 %847
  %849 = vrot.lane.b32.xlu0 %v259, 10
  %v850 = vpop.permute.xlu0 %849
  %855 = vrot.lane.b32.xlu0 %v453, 20
  %v856 = vpop.permute.xlu0 %855
  %857 = vrot.lane.b32.xlu0 %v454, 20
  %v858 = vpop.permute.xlu0 %857
  %863 = vrot.lane.b32.xlu0 %v645, 30
  %v864 = vpop.permute.xlu0 %863
  %865 = vrot.lane.b32.xlu0 %v649, 30
  %v866 = vpop.permute.xlu0 %865
  %871 = vrot.lane.b32.xlu0 %v843, 40
  %v872 = vpop.permute.xlu0 %871
  %873 = vrot.lane.b32.xlu0 %v844, 40
  %v874 = vpop.permute.xlu0 %873
  %vm877 = vcmask 80896
  %v878 = vsel %vm877, %v62, %v848
  %v879 = vsel %vm877, %v63, %v850
  %vm880 = vcmask 162816
  %v881 = vsel %vm880, %v878, %v856
  %v882 = vsel %vm880, %v879, %v858
  %vm883 = vcmask 244736
  %v884 = vsel %vm883, %v881, %v864
  %v885 = vsel %vm883, %v882, %v866
  %vm886 = vcmask 326656
  %v887 = vsel %vm886, %v884, %v872
  %v888 = vsel %vm886, %v885, %v874
  %v890 = vperm.slane %v40, 0
  %vm892 = vcmask 408576
  %v894 = vsel %vm892, %v887, 0
  %v897 = vsel %vm892, %v888, 0
  %vm899 = vcmask 1041408
  %v901 = vsel %vm899, %v39, 0
  %903 = vmatpush.msra.mxu0 0.0
  %904 = vmatpush.msra.mxu0 0.0
  %905 = vmatpush.msra.mxu0 0.0
  %906 = vmatpush.msra.mxu0 0.0
  %907 = vmatpush.msra.mxu0 0.0
  %908 = vmatpush.msra.mxu0 0.0
  %909 = vmatpush.msra.mxu0 0.0
  %910 = vmatpush.msra.mxu0 0.0
  %911 = vmatpush.msra.mxu0 0.0
  %v912 = vand.u32 %v901, 4294901760
  %913 = vmatpush.msra.mxu0 %v912
  %v914 = vand.u32 %v38, 4294901760
  %915 = vmatpush.msra.mxu0 %v914
  %v916 = vand.u32 %v37, 4294901760
  %917 = vmatpush.msra.mxu0 %v916
  %v918 = vand.u32 %v36, 4294901760
  %919 = vmatpush.msra.mxu0 %v918
  %v920 = vand.u32 %v35, 4294901760
  %921 = vmatpush.msra.mxu0 %v920
  %v922 = vand.u32 %v34, 4294901760
  %923 = vmatpush.msra.mxu0 %v922
  %v924 = vand.u32 %v33, 4294901760
  %925 = vmatpush.msra.mxu0 %v924
  %v926 = vand.u32 %v894, 4294901760
  %v927 = vsub.f32 %v894, %v926
  %v928 = vand.u32 %v927, 4294901760
  %v929 = vsub.f32 %v927, %v928
  %v930 = vand.u32 %v929, 4294901760
  %931 = vmatmul.f32.gmra.mxu0 %v930
  %v932 = vpop.f32.mrf.mxu0
  %v933 = vadd.f32 %v890, %v932
  %v934 = vand.u32 %v897, 4294901760
  %v935 = vsub.f32 %v897, %v934
  %v936 = vand.u32 %v935, 4294901760
  %v937 = vsub.f32 %v935, %v936
  %v938 = vand.u32 %v937, 4294901760
  %939 = vmatmul.f32.gmra.mxu0 %v938
  %v940 = vpop.f32.mrf.mxu0
  %v941 = vadd.f32 %v890, %v940
  %942 = vdwg.mxu0
  %943 = vmatpush.msra.mxu0 0.0
  %944 = vmatpush.msra.mxu0 0.0
  %945 = vmatpush.msra.mxu0 0.0
  %946 = vmatpush.msra.mxu0 0.0
  %947 = vmatpush.msra.mxu0 0.0
  %948 = vmatpush.msra.mxu0 0.0
  %949 = vmatpush.msra.mxu0 0.0
  %950 = vmatpush.msra.mxu0 0.0
  %951 = vmatpush.msra.mxu0 0.0
  %v952 = vand.u32 %v901, 4294901760
  %v953 = vsub.f32 %v901, %v952
  %v954 = vand.u32 %v953, 4294901760
  %v955 = vsub.f32 %v953, %v954
  %v956 = vand.u32 %v955, 4294901760
  %957 = vmatpush.msra.mxu0 %v956
  %v958 = vand.u32 %v38, 4294901760
  %v959 = vsub.f32 %v38, %v958
  %v960 = vand.u32 %v959, 4294901760
  %v961 = vsub.f32 %v959, %v960
  %v962 = vand.u32 %v961, 4294901760
  %963 = vmatpush.msra.mxu0 %v962
  %v964 = vand.u32 %v37, 4294901760
  %v965 = vsub.f32 %v37, %v964
  %v966 = vand.u32 %v965, 4294901760
  %v967 = vsub.f32 %v965, %v966
  %v968 = vand.u32 %v967, 4294901760
  %969 = vmatpush.msra.mxu0 %v968
  %v970 = vand.u32 %v36, 4294901760
  %v971 = vsub.f32 %v36, %v970
  %v972 = vand.u32 %v971, 4294901760
  %v973 = vsub.f32 %v971, %v972
  %v974 = vand.u32 %v973, 4294901760
  %975 = vmatpush.msra.mxu0 %v974
  %v976 = vand.u32 %v35, 4294901760
  %v977 = vsub.f32 %v35, %v976
  %v978 = vand.u32 %v977, 4294901760
  %v979 = vsub.f32 %v977, %v978
  %v980 = vand.u32 %v979, 4294901760
  %981 = vmatpush.msra.mxu0 %v980
  %v982 = vand.u32 %v34, 4294901760
  %v983 = vsub.f32 %v34, %v982
  %v984 = vand.u32 %v983, 4294901760
  %v985 = vsub.f32 %v983, %v984
  %v986 = vand.u32 %v985, 4294901760
  %987 = vmatpush.msra.mxu0 %v986
  %v988 = vand.u32 %v33, 4294901760
  %v989 = vsub.f32 %v33, %v988
  %v990 = vand.u32 %v989, 4294901760
  %v991 = vsub.f32 %v989, %v990
  %v992 = vand.u32 %v991, 4294901760
  %993 = vmatpush.msra.mxu0 %v992
  %v994 = vand.u32 %v894, 4294901760
  %995 = vmatmul.f32.gmra.mxu0 %v994
  %v996 = vpop.f32.mrf.mxu0
  %v997 = vadd.f32 %v933, %v996
  %v998 = vand.u32 %v897, 4294901760
  %999 = vmatmul.f32.gmra.mxu0 %v998
  %v1000 = vpop.f32.mrf.mxu0
  %v1001 = vadd.f32 %v941, %v1000
  %1002 = vdwg.mxu0
  %1003 = vmatpush.msra.mxu0 0.0
  %1004 = vmatpush.msra.mxu0 0.0
  %1005 = vmatpush.msra.mxu0 0.0
  %1006 = vmatpush.msra.mxu0 0.0
  %1007 = vmatpush.msra.mxu0 0.0
  %1008 = vmatpush.msra.mxu0 0.0
  %1009 = vmatpush.msra.mxu0 0.0
  %1010 = vmatpush.msra.mxu0 0.0
  %1011 = vmatpush.msra.mxu0 0.0
  %v1012 = vand.u32 %v901, 4294901760
  %v1013 = vsub.f32 %v901, %v1012
  %1014 = vmatpush.msra.mxu0 %v1013
  %v1015 = vand.u32 %v38, 4294901760
  %v1016 = vsub.f32 %v38, %v1015
  %1017 = vmatpush.msra.mxu0 %v1016
  %v1018 = vand.u32 %v37, 4294901760
  %v1019 = vsub.f32 %v37, %v1018
  %1020 = vmatpush.msra.mxu0 %v1019
  %v1021 = vand.u32 %v36, 4294901760
  %v1022 = vsub.f32 %v36, %v1021
  %1023 = vmatpush.msra.mxu0 %v1022
  %v1024 = vand.u32 %v35, 4294901760
  %v1025 = vsub.f32 %v35, %v1024
  %1026 = vmatpush.msra.mxu0 %v1025
  %v1027 = vand.u32 %v34, 4294901760
  %v1028 = vsub.f32 %v34, %v1027
  %1029 = vmatpush.msra.mxu0 %v1028
  %v1030 = vand.u32 %v33, 4294901760
  %v1031 = vsub.f32 %v33, %v1030
  %1032 = vmatpush.msra.mxu0 %v1031
  %v1033 = vand.u32 %v894, 4294901760
  %v1034 = vsub.f32 %v894, %v1033
  %1035 = vmatmul.f32.gmra.mxu0 %v1034
  %v1036 = vpop.f32.mrf.mxu0
  %v1037 = vadd.f32 %v997, %v1036
  %v1038 = vand.u32 %v897, 4294901760
  %v1039 = vsub.f32 %v897, %v1038
  %1040 = vmatmul.f32.gmra.mxu0 %v1039
  %v1041 = vpop.f32.mrf.mxu0
  %v1042 = vadd.f32 %v1001, %v1041
  %1043 = vdwg.mxu0
  %1044 = vmatpush.msra.mxu0 0.0
  %1045 = vmatpush.msra.mxu0 0.0
  %1046 = vmatpush.msra.mxu0 0.0
  %1047 = vmatpush.msra.mxu0 0.0
  %1048 = vmatpush.msra.mxu0 0.0
  %1049 = vmatpush.msra.mxu0 0.0
  %1050 = vmatpush.msra.mxu0 0.0
  %1051 = vmatpush.msra.mxu0 0.0
  %1052 = vmatpush.msra.mxu0 0.0
  %v1053 = vand.u32 %v901, 4294901760
  %1054 = vmatpush.msra.mxu0 %v1053
  %v1055 = vand.u32 %v38, 4294901760
  %1056 = vmatpush.msra.mxu0 %v1055
  %v1057 = vand.u32 %v37, 4294901760
  %1058 = vmatpush.msra.mxu0 %v1057
  %v1059 = vand.u32 %v36, 4294901760
  %1060 = vmatpush.msra.mxu0 %v1059
  %v1061 = vand.u32 %v35, 4294901760
  %1062 = vmatpush.msra.mxu0 %v1061
  %v1063 = vand.u32 %v34, 4294901760
  %1064 = vmatpush.msra.mxu0 %v1063
  %v1065 = vand.u32 %v33, 4294901760
  %1066 = vmatpush.msra.mxu0 %v1065
  %v1067 = vand.u32 %v894, 4294901760
  %v1068 = vsub.f32 %v894, %v1067
  %v1069 = vand.u32 %v1068, 4294901760
  %1070 = vmatmul.f32.gmra.mxu0 %v1069
  %v1071 = vpop.f32.mrf.mxu0
  %v1072 = vadd.f32 %v1037, %v1071
  %v1073 = vand.u32 %v897, 4294901760
  %v1074 = vsub.f32 %v897, %v1073
  %v1075 = vand.u32 %v1074, 4294901760
  %1076 = vmatmul.f32.gmra.mxu0 %v1075
  %v1077 = vpop.f32.mrf.mxu0
  %v1078 = vadd.f32 %v1042, %v1077
  %1079 = vdwg.mxu0
  %1080 = vmatpush.msra.mxu0 0.0
  %1081 = vmatpush.msra.mxu0 0.0
  %1082 = vmatpush.msra.mxu0 0.0
  %1083 = vmatpush.msra.mxu0 0.0
  %1084 = vmatpush.msra.mxu0 0.0
  %1085 = vmatpush.msra.mxu0 0.0
  %1086 = vmatpush.msra.mxu0 0.0
  %1087 = vmatpush.msra.mxu0 0.0
  %1088 = vmatpush.msra.mxu0 0.0
  %v1089 = vand.u32 %v901, 4294901760
  %v1090 = vsub.f32 %v901, %v1089
  %v1091 = vand.u32 %v1090, 4294901760
  %1092 = vmatpush.msra.mxu0 %v1091
  %v1093 = vand.u32 %v38, 4294901760
  %v1094 = vsub.f32 %v38, %v1093
  %v1095 = vand.u32 %v1094, 4294901760
  %1096 = vmatpush.msra.mxu0 %v1095
  %v1097 = vand.u32 %v37, 4294901760
  %v1098 = vsub.f32 %v37, %v1097
  %v1099 = vand.u32 %v1098, 4294901760
  %1100 = vmatpush.msra.mxu0 %v1099
  %v1101 = vand.u32 %v36, 4294901760
  %v1102 = vsub.f32 %v36, %v1101
  %v1103 = vand.u32 %v1102, 4294901760
  %1104 = vmatpush.msra.mxu0 %v1103
  %v1105 = vand.u32 %v35, 4294901760
  %v1106 = vsub.f32 %v35, %v1105
  %v1107 = vand.u32 %v1106, 4294901760
  %1108 = vmatpush.msra.mxu0 %v1107
  %v1109 = vand.u32 %v34, 4294901760
  %v1110 = vsub.f32 %v34, %v1109
  %v1111 = vand.u32 %v1110, 4294901760
  %1112 = vmatpush.msra.mxu0 %v1111
  %v1113 = vand.u32 %v33, 4294901760
  %v1114 = vsub.f32 %v33, %v1113
  %v1115 = vand.u32 %v1114, 4294901760
  %1116 = vmatpush.msra.mxu0 %v1115
  %v1117 = vand.u32 %v894, 4294901760
  %1118 = vmatmul.f32.gmra.mxu0 %v1117
  %v1119 = vpop.f32.mrf.mxu0
  %v1120 = vadd.f32 %v1072, %v1119
  %v1121 = vand.u32 %v897, 4294901760
  %1122 = vmatmul.f32.gmra.mxu0 %v1121
  %v1123 = vpop.f32.mrf.mxu0
  %v1124 = vadd.f32 %v1078, %v1123
  %1125 = vdwg.mxu0
  %1126 = vmatpush.msra.mxu0 0.0
  %1127 = vmatpush.msra.mxu0 0.0
  %1128 = vmatpush.msra.mxu0 0.0
  %1129 = vmatpush.msra.mxu0 0.0
  %1130 = vmatpush.msra.mxu0 0.0
  %1131 = vmatpush.msra.mxu0 0.0
  %1132 = vmatpush.msra.mxu0 0.0
  %1133 = vmatpush.msra.mxu0 0.0
  %1134 = vmatpush.msra.mxu0 0.0
  %v1135 = vand.u32 %v901, 4294901760
  %1136 = vmatpush.msra.mxu0 %v1135
  %v1137 = vand.u32 %v38, 4294901760
  %1138 = vmatpush.msra.mxu0 %v1137
  %v1139 = vand.u32 %v37, 4294901760
  %1140 = vmatpush.msra.mxu0 %v1139
  %v1141 = vand.u32 %v36, 4294901760
  %1142 = vmatpush.msra.mxu0 %v1141
  %v1143 = vand.u32 %v35, 4294901760
  %1144 = vmatpush.msra.mxu0 %v1143
  %v1145 = vand.u32 %v34, 4294901760
  %1146 = vmatpush.msra.mxu0 %v1145
  %v1147 = vand.u32 %v33, 4294901760
  %1148 = vmatpush.msra.mxu0 %v1147
  %v1149 = vand.u32 %v894, 4294901760
  %1150 = vmatmul.f32.gmra.mxu0 %v1149
  %v1151 = vpop.f32.mrf.mxu0
  %v1152 = vadd.f32 %v1120, %v1151
  %v1153 = vand.u32 %v897, 4294901760
  %1154 = vmatmul.f32.gmra.mxu0 %v1153
  %v1155 = vpop.f32.mrf.mxu0
  %v1156 = vadd.f32 %v1124, %v1155
  %1157 = vdwg.mxu0
  %v1158 = vxor.u32 %v1152, 2147483648
  %v1159 = vxor.u32 %v1156, 2147483648
  %v1160 = vmul.f32 %v1158, 1.442695
  %v1161 = vpow.pop %v1160
  %v1162 = vmul.f32 %v1159, 1.442695
  %v1163 = vpow.pop %v1162
  %v1164 = vadd.f32 %v1161, 1.0
  %v1165 = vadd.f32 %v1163, 1.0
  %v1166 = vrcp.pop %v1164
  %v1167 = vmul.f32 %v1164, %v1166
  %v1168 = vsub.f32 1.0, %v1167
  %v1169 = vmul.f32 %v1166, %v1168
  %v1170 = vadd.f32 %v1166, %v1169
  %vm1171 = vweird.f32 %v1164
  %vm1172 = vweird.f32 %v1166
  %vm1173 = vmor %vm1171, %vm1172
  %v1174 = vsel %vm1173, %v1166, %v1170
  %v1175 = vand.u32 2147483647, %v1164
  %vm1176 = vcmp.eq.f32.partialorder %v1175, 8.507059e+37
  %v1177 = vand.u32 %v1164, 2147483648
  %v1178 = vor.u32 1.1754944e-38, %v1177
  %v1179 = vsel %vm1176, %v1178, %v1174
  %v1180 = vmul.f32 1.0, %v1179
  %v1181 = vrcp.pop %v1165
  %v1182 = vmul.f32 %v1165, %v1181
  %v1183 = vsub.f32 1.0, %v1182
  %v1184 = vmul.f32 %v1181, %v1183
  %v1185 = vadd.f32 %v1181, %v1184
  %vm1186 = vweird.f32 %v1165
  %vm1187 = vweird.f32 %v1181
  %vm1188 = vmor %vm1186, %vm1187
  %v1189 = vsel %vm1188, %v1181, %v1185
  %v1190 = vand.u32 2147483647, %v1165
  %vm1191 = vcmp.eq.f32.partialorder %v1190, 8.507059e+37
  %v1192 = vand.u32 %v1165, 2147483648
  %v1193 = vor.u32 1.1754944e-38, %v1192
  %v1194 = vsel %vm1191, %v1193, %v1189
  %v1195 = vmul.f32 1.0, %v1194
  %v1196 = vmul.f32 %v1180, %v51
  %v1197 = vmul.f32 %v1195, %v52
  %1198 = vmatpush.msra.mxu0 0.0
  %1199 = vmatpush.msra.mxu0 0.0
  %1200 = vmatpush.msra.mxu0 0.0
  %1201 = vmatpush.msra.mxu0 0.0
  %1202 = vmatpush.msra.mxu0 0.0
  %1203 = vmatpush.msra.mxu0 0.0
  %1204 = vmatpush.msra.mxu0 0.0
  %1205 = vmatpush.msra.mxu0 0.0
  %1206 = vmatpush.msra.mxu0 0.0
  %1207 = vmatpush.msra.mxu0 0.0
  %1208 = vmatpush.msra.mxu0 0.0
  %1209 = vmatpush.msra.mxu0 0.0
  %1210 = vmatpush.msra.mxu0 0.0
  %1211 = vmatpush.msra.mxu0 0.0
  %v1212 = vand.u32 %v1197, 4294901760
  %1213 = vmatpush.msra.mxu0 %v1212
  %v1214 = vand.u32 %v1196, 4294901760
  %1215 = vmatpush.msra.mxu0 %v1214
  %v1216 = vand.u32 %v66, 4294901760
  %v1217 = vsub.f32 %v66, %v1216
  %v1218 = vand.u32 %v1217, 4294901760
  %v1219 = vsub.f32 %v1217, %v1218
  %v1220 = vand.u32 %v1219, 4294901760
  %1221 = vmatmul.f32.gmra.mxu0 %v1220
  %v1222 = vpop.f32.mrf.mxu0
  %v1223 = vadd.f32 0.0, %v1222
  %v1224 = vand.u32 %v69, 4294901760
  %v1225 = vsub.f32 %v69, %v1224
  %v1226 = vand.u32 %v1225, 4294901760
  %v1227 = vsub.f32 %v1225, %v1226
  %v1228 = vand.u32 %v1227, 4294901760
  %1229 = vmatmul.f32.gmra.mxu0 %v1228
  %v1230 = vpop.f32.mrf.mxu0
  %v1231 = vadd.f32 0.0, %v1230
  %1232 = vdwg.mxu0
  %1233 = vmatpush.msra.mxu0 0.0
  %1234 = vmatpush.msra.mxu0 0.0
  %1235 = vmatpush.msra.mxu0 0.0
  %1236 = vmatpush.msra.mxu0 0.0
  %1237 = vmatpush.msra.mxu0 0.0
  %1238 = vmatpush.msra.mxu0 0.0
  %1239 = vmatpush.msra.mxu0 0.0
  %1240 = vmatpush.msra.mxu0 0.0
  %1241 = vmatpush.msra.mxu0 0.0
  %1242 = vmatpush.msra.mxu0 0.0
  %1243 = vmatpush.msra.mxu0 0.0
  %1244 = vmatpush.msra.mxu0 0.0
  %1245 = vmatpush.msra.mxu0 0.0
  %1246 = vmatpush.msra.mxu0 0.0
  %v1247 = vand.u32 %v1197, 4294901760
  %v1248 = vsub.f32 %v1197, %v1247
  %v1249 = vand.u32 %v1248, 4294901760
  %v1250 = vsub.f32 %v1248, %v1249
  %v1251 = vand.u32 %v1250, 4294901760
  %1252 = vmatpush.msra.mxu0 %v1251
  %v1253 = vand.u32 %v1196, 4294901760
  %v1254 = vsub.f32 %v1196, %v1253
  %v1255 = vand.u32 %v1254, 4294901760
  %v1256 = vsub.f32 %v1254, %v1255
  %v1257 = vand.u32 %v1256, 4294901760
  %1258 = vmatpush.msra.mxu0 %v1257
  %v1259 = vand.u32 %v66, 4294901760
  %1260 = vmatmul.f32.gmra.mxu0 %v1259
  %v1261 = vpop.f32.mrf.mxu0
  %v1262 = vadd.f32 %v1223, %v1261
  %v1263 = vand.u32 %v69, 4294901760
  %1264 = vmatmul.f32.gmra.mxu0 %v1263
  %v1265 = vpop.f32.mrf.mxu0
  %v1266 = vadd.f32 %v1231, %v1265
  %1267 = vdwg.mxu0
  %1268 = vmatpush.msra.mxu0 0.0
  %1269 = vmatpush.msra.mxu0 0.0
  %1270 = vmatpush.msra.mxu0 0.0
  %1271 = vmatpush.msra.mxu0 0.0
  %1272 = vmatpush.msra.mxu0 0.0
  %1273 = vmatpush.msra.mxu0 0.0
  %1274 = vmatpush.msra.mxu0 0.0
  %1275 = vmatpush.msra.mxu0 0.0
  %1276 = vmatpush.msra.mxu0 0.0
  %1277 = vmatpush.msra.mxu0 0.0
  %1278 = vmatpush.msra.mxu0 0.0
  %1279 = vmatpush.msra.mxu0 0.0
  %1280 = vmatpush.msra.mxu0 0.0
  %1281 = vmatpush.msra.mxu0 0.0
  %v1282 = vand.u32 %v1197, 4294901760
  %v1283 = vsub.f32 %v1197, %v1282
  %1284 = vmatpush.msra.mxu0 %v1283
  %v1285 = vand.u32 %v1196, 4294901760
  %v1286 = vsub.f32 %v1196, %v1285
  %1287 = vmatpush.msra.mxu0 %v1286
  %v1288 = vand.u32 %v66, 4294901760
  %v1289 = vsub.f32 %v66, %v1288
  %1290 = vmatmul.f32.gmra.mxu0 %v1289
  %v1291 = vpop.f32.mrf.mxu0
  %v1292 = vadd.f32 %v1262, %v1291
  %v1293 = vand.u32 %v69, 4294901760
  %v1294 = vsub.f32 %v69, %v1293
  %1295 = vmatmul.f32.gmra.mxu0 %v1294
  %v1296 = vpop.f32.mrf.mxu0
  %v1297 = vadd.f32 %v1266, %v1296
  %1298 = vdwg.mxu0
  %1299 = vmatpush.msra.mxu0 0.0
  %1300 = vmatpush.msra.mxu0 0.0
  %1301 = vmatpush.msra.mxu0 0.0
  %1302 = vmatpush.msra.mxu0 0.0
  %1303 = vmatpush.msra.mxu0 0.0
  %1304 = vmatpush.msra.mxu0 0.0
  %1305 = vmatpush.msra.mxu0 0.0
  %1306 = vmatpush.msra.mxu0 0.0
  %1307 = vmatpush.msra.mxu0 0.0
  %1308 = vmatpush.msra.mxu0 0.0
  %1309 = vmatpush.msra.mxu0 0.0
  %1310 = vmatpush.msra.mxu0 0.0
  %1311 = vmatpush.msra.mxu0 0.0
  %1312 = vmatpush.msra.mxu0 0.0
  %v1313 = vand.u32 %v1197, 4294901760
  %1314 = vmatpush.msra.mxu0 %v1313
  %v1315 = vand.u32 %v1196, 4294901760
  %1316 = vmatpush.msra.mxu0 %v1315
  %v1317 = vand.u32 %v66, 4294901760
  %v1318 = vsub.f32 %v66, %v1317
  %v1319 = vand.u32 %v1318, 4294901760
  %1320 = vmatmul.f32.gmra.mxu0 %v1319
  %v1321 = vpop.f32.mrf.mxu0
  %v1322 = vadd.f32 %v1292, %v1321
  %v1323 = vand.u32 %v69, 4294901760
  %v1324 = vsub.f32 %v69, %v1323
  %v1325 = vand.u32 %v1324, 4294901760
  %1326 = vmatmul.f32.gmra.mxu0 %v1325
  %v1327 = vpop.f32.mrf.mxu0
  %v1328 = vadd.f32 %v1297, %v1327
  %1329 = vdwg.mxu0
  %1330 = vmatpush.msra.mxu0 0.0
  %1331 = vmatpush.msra.mxu0 0.0
  %1332 = vmatpush.msra.mxu0 0.0
  %1333 = vmatpush.msra.mxu0 0.0
  %1334 = vmatpush.msra.mxu0 0.0
  %1335 = vmatpush.msra.mxu0 0.0
  %1336 = vmatpush.msra.mxu0 0.0
  %1337 = vmatpush.msra.mxu0 0.0
  %1338 = vmatpush.msra.mxu0 0.0
  %1339 = vmatpush.msra.mxu0 0.0
  %1340 = vmatpush.msra.mxu0 0.0
  %1341 = vmatpush.msra.mxu0 0.0
  %1342 = vmatpush.msra.mxu0 0.0
  %1343 = vmatpush.msra.mxu0 0.0
  %v1344 = vand.u32 %v1197, 4294901760
  %v1345 = vsub.f32 %v1197, %v1344
  %v1346 = vand.u32 %v1345, 4294901760
  %1347 = vmatpush.msra.mxu0 %v1346
  %v1348 = vand.u32 %v1196, 4294901760
  %v1349 = vsub.f32 %v1196, %v1348
  %v1350 = vand.u32 %v1349, 4294901760
  %1351 = vmatpush.msra.mxu0 %v1350
  %v1352 = vand.u32 %v66, 4294901760
  %1353 = vmatmul.f32.gmra.mxu0 %v1352
  %v1354 = vpop.f32.mrf.mxu0
  %v1355 = vadd.f32 %v1322, %v1354
  %v1356 = vand.u32 %v69, 4294901760
  %1357 = vmatmul.f32.gmra.mxu0 %v1356
  %v1358 = vpop.f32.mrf.mxu0
  %v1359 = vadd.f32 %v1328, %v1358
  %1360 = vdwg.mxu0
  %1361 = vmatpush.msra.mxu0 0.0
  %1362 = vmatpush.msra.mxu0 0.0
  %1363 = vmatpush.msra.mxu0 0.0
  %1364 = vmatpush.msra.mxu0 0.0
  %1365 = vmatpush.msra.mxu0 0.0
  %1366 = vmatpush.msra.mxu0 0.0
  %1367 = vmatpush.msra.mxu0 0.0
  %1368 = vmatpush.msra.mxu0 0.0
  %1369 = vmatpush.msra.mxu0 0.0
  %1370 = vmatpush.msra.mxu0 0.0
  %1371 = vmatpush.msra.mxu0 0.0
  %1372 = vmatpush.msra.mxu0 0.0
  %1373 = vmatpush.msra.mxu0 0.0
  %1374 = vmatpush.msra.mxu0 0.0
  %v1375 = vand.u32 %v1197, 4294901760
  %1376 = vmatpush.msra.mxu0 %v1375
  %v1377 = vand.u32 %v1196, 4294901760
  %1378 = vmatpush.msra.mxu0 %v1377
  %v1379 = vand.u32 %v66, 4294901760
  %1380 = vmatmul.f32.gmra.mxu0 %v1379
  %v1381 = vpop.f32.mrf.mxu0
  %v1382 = vadd.f32 %v1355, %v1381
  %v1383 = vand.u32 %v69, 4294901760
  %1384 = vmatmul.f32.gmra.mxu0 %v1383
  %v1385 = vpop.f32.mrf.mxu0
  %v1386 = vadd.f32 %v1359, %v1385
  %1387 = vdwg.mxu0
  %1388 = vmatpush.msra.mxu0 0.0
  %1389 = vmatpush.msra.mxu0 0.0
  %1390 = vmatpush.msra.mxu0 0.0
  %1391 = vmatpush.msra.mxu0 0.0
  %1392 = vmatpush.msra.mxu0 0.0
  %1393 = vmatpush.msra.mxu0 0.0
  %1394 = vmatpush.msra.mxu0 0.0
  %1395 = vmatpush.msra.mxu0 0.0
  %1396 = vmatpush.msra.mxu0 0.0
  %1397 = vmatpush.msra.mxu0 0.0
  %1398 = vmatpush.msra.mxu0 0.0
  %1399 = vmatpush.msra.mxu0 0.0
  %1400 = vmatpush.msra.mxu0 0.0
  %1401 = vmatpush.msra.mxu0 0.0
  %v1402 = vand.u32 %v1386, 4294901760
  %1403 = vmatpush.msra.mxu0 %v1402
  %v1404 = vand.u32 %v1382, 4294901760
  %1405 = vmatpush.msra.mxu0 %v1404
  %v1406 = vand.u32 %v66, 4294901760
  %v1407 = vsub.f32 %v66, %v1406
  %v1408 = vand.u32 %v1407, 4294901760
  %v1409 = vsub.f32 %v1407, %v1408
  %v1410 = vand.u32 %v1409, 4294901760
  %1411 = vmatmul.f32.gmra.mxu0 %v1410
  %v1412 = vpop.f32.mrf.mxu0
  %v1413 = vadd.f32 0.0, %v1412
  %v1414 = vand.u32 %v69, 4294901760
  %v1415 = vsub.f32 %v69, %v1414
  %v1416 = vand.u32 %v1415, 4294901760
  %v1417 = vsub.f32 %v1415, %v1416
  %v1418 = vand.u32 %v1417, 4294901760
  %1419 = vmatmul.f32.gmra.mxu0 %v1418
  %v1420 = vpop.f32.mrf.mxu0
  %v1421 = vadd.f32 0.0, %v1420
  %1422 = vdwg.mxu0
  %1423 = vmatpush.msra.mxu0 0.0
  %1424 = vmatpush.msra.mxu0 0.0
  %1425 = vmatpush.msra.mxu0 0.0
  %1426 = vmatpush.msra.mxu0 0.0
  %1427 = vmatpush.msra.mxu0 0.0
  %1428 = vmatpush.msra.mxu0 0.0
  %1429 = vmatpush.msra.mxu0 0.0
  %1430 = vmatpush.msra.mxu0 0.0
  %1431 = vmatpush.msra.mxu0 0.0
  %1432 = vmatpush.msra.mxu0 0.0
  %1433 = vmatpush.msra.mxu0 0.0
  %1434 = vmatpush.msra.mxu0 0.0
  %1435 = vmatpush.msra.mxu0 0.0
  %1436 = vmatpush.msra.mxu0 0.0
  %v1437 = vand.u32 %v1386, 4294901760
  %v1438 = vsub.f32 %v1386, %v1437
  %v1439 = vand.u32 %v1438, 4294901760
  %v1440 = vsub.f32 %v1438, %v1439
  %v1441 = vand.u32 %v1440, 4294901760
  %1442 = vmatpush.msra.mxu0 %v1441
  %v1443 = vand.u32 %v1382, 4294901760
  %v1444 = vsub.f32 %v1382, %v1443
  %v1445 = vand.u32 %v1444, 4294901760
  %v1446 = vsub.f32 %v1444, %v1445
  %v1447 = vand.u32 %v1446, 4294901760
  %1448 = vmatpush.msra.mxu0 %v1447
  %v1449 = vand.u32 %v66, 4294901760
  %1450 = vmatmul.f32.gmra.mxu0 %v1449
  %v1451 = vpop.f32.mrf.mxu0
  %v1452 = vadd.f32 %v1413, %v1451
  %v1453 = vand.u32 %v69, 4294901760
  %1454 = vmatmul.f32.gmra.mxu0 %v1453
  %v1455 = vpop.f32.mrf.mxu0
  %v1456 = vadd.f32 %v1421, %v1455
  %1457 = vdwg.mxu0
  %1458 = vmatpush.msra.mxu0 0.0
  %1459 = vmatpush.msra.mxu0 0.0
  %1460 = vmatpush.msra.mxu0 0.0
  %1461 = vmatpush.msra.mxu0 0.0
  %1462 = vmatpush.msra.mxu0 0.0
  %1463 = vmatpush.msra.mxu0 0.0
  %1464 = vmatpush.msra.mxu0 0.0
  %1465 = vmatpush.msra.mxu0 0.0
  %1466 = vmatpush.msra.mxu0 0.0
  %1467 = vmatpush.msra.mxu0 0.0
  %1468 = vmatpush.msra.mxu0 0.0
  %1469 = vmatpush.msra.mxu0 0.0
  %1470 = vmatpush.msra.mxu0 0.0
  %1471 = vmatpush.msra.mxu0 0.0
  %v1472 = vand.u32 %v1386, 4294901760
  %v1473 = vsub.f32 %v1386, %v1472
  %1474 = vmatpush.msra.mxu0 %v1473
  %v1475 = vand.u32 %v1382, 4294901760
  %v1476 = vsub.f32 %v1382, %v1475
  %1477 = vmatpush.msra.mxu0 %v1476
  %v1478 = vand.u32 %v66, 4294901760
  %v1479 = vsub.f32 %v66, %v1478
  %1480 = vmatmul.f32.gmra.mxu0 %v1479
  %v1481 = vpop.f32.mrf.mxu0
  %v1482 = vadd.f32 %v1452, %v1481
  %v1483 = vand.u32 %v69, 4294901760
  %v1484 = vsub.f32 %v69, %v1483
  %1485 = vmatmul.f32.gmra.mxu0 %v1484
  %v1486 = vpop.f32.mrf.mxu0
  %v1487 = vadd.f32 %v1456, %v1486
  %1488 = vdwg.mxu0
  %1489 = vmatpush.msra.mxu0 0.0
  %1490 = vmatpush.msra.mxu0 0.0
  %1491 = vmatpush.msra.mxu0 0.0
  %1492 = vmatpush.msra.mxu0 0.0
  %1493 = vmatpush.msra.mxu0 0.0
  %1494 = vmatpush.msra.mxu0 0.0
  %1495 = vmatpush.msra.mxu0 0.0
  %1496 = vmatpush.msra.mxu0 0.0
  %1497 = vmatpush.msra.mxu0 0.0
  %1498 = vmatpush.msra.mxu0 0.0
  %1499 = vmatpush.msra.mxu0 0.0
  %1500 = vmatpush.msra.mxu0 0.0
  %1501 = vmatpush.msra.mxu0 0.0
  %1502 = vmatpush.msra.mxu0 0.0
  %v1503 = vand.u32 %v1386, 4294901760
  %1504 = vmatpush.msra.mxu0 %v1503
  %v1505 = vand.u32 %v1382, 4294901760
  %1506 = vmatpush.msra.mxu0 %v1505
  %v1507 = vand.u32 %v66, 4294901760
  %v1508 = vsub.f32 %v66, %v1507
  %v1509 = vand.u32 %v1508, 4294901760
  %1510 = vmatmul.f32.gmra.mxu0 %v1509
  %v1511 = vpop.f32.mrf.mxu0
  %v1512 = vadd.f32 %v1482, %v1511
  %v1513 = vand.u32 %v69, 4294901760
  %v1514 = vsub.f32 %v69, %v1513
  %v1515 = vand.u32 %v1514, 4294901760
  %1516 = vmatmul.f32.gmra.mxu0 %v1515
  %v1517 = vpop.f32.mrf.mxu0
  %v1518 = vadd.f32 %v1487, %v1517
  %1519 = vdwg.mxu0
  %1520 = vmatpush.msra.mxu0 0.0
  %1521 = vmatpush.msra.mxu0 0.0
  %1522 = vmatpush.msra.mxu0 0.0
  %1523 = vmatpush.msra.mxu0 0.0
  %1524 = vmatpush.msra.mxu0 0.0
  %1525 = vmatpush.msra.mxu0 0.0
  %1526 = vmatpush.msra.mxu0 0.0
  %1527 = vmatpush.msra.mxu0 0.0
  %1528 = vmatpush.msra.mxu0 0.0
  %1529 = vmatpush.msra.mxu0 0.0
  %1530 = vmatpush.msra.mxu0 0.0
  %1531 = vmatpush.msra.mxu0 0.0
  %1532 = vmatpush.msra.mxu0 0.0
  %1533 = vmatpush.msra.mxu0 0.0
  %v1534 = vand.u32 %v1386, 4294901760
  %v1535 = vsub.f32 %v1386, %v1534
  %v1536 = vand.u32 %v1535, 4294901760
  %1537 = vmatpush.msra.mxu0 %v1536
  %v1538 = vand.u32 %v1382, 4294901760
  %v1539 = vsub.f32 %v1382, %v1538
  %v1540 = vand.u32 %v1539, 4294901760
  %1541 = vmatpush.msra.mxu0 %v1540
  %v1542 = vand.u32 %v66, 4294901760
  %1543 = vmatmul.f32.gmra.mxu0 %v1542
  %v1544 = vpop.f32.mrf.mxu0
  %v1545 = vadd.f32 %v1512, %v1544
  %v1546 = vand.u32 %v69, 4294901760
  %1547 = vmatmul.f32.gmra.mxu0 %v1546
  %v1548 = vpop.f32.mrf.mxu0
  %v1549 = vadd.f32 %v1518, %v1548
  %1550 = vdwg.mxu0
  %1551 = vmatpush.msra.mxu0 0.0
  %1552 = vmatpush.msra.mxu0 0.0
  %1553 = vmatpush.msra.mxu0 0.0
  %1554 = vmatpush.msra.mxu0 0.0
  %1555 = vmatpush.msra.mxu0 0.0
  %1556 = vmatpush.msra.mxu0 0.0
  %1557 = vmatpush.msra.mxu0 0.0
  %1558 = vmatpush.msra.mxu0 0.0
  %1559 = vmatpush.msra.mxu0 0.0
  %1560 = vmatpush.msra.mxu0 0.0
  %1561 = vmatpush.msra.mxu0 0.0
  %1562 = vmatpush.msra.mxu0 0.0
  %1563 = vmatpush.msra.mxu0 0.0
  %1564 = vmatpush.msra.mxu0 0.0
  %v1565 = vand.u32 %v1386, 4294901760
  %1566 = vmatpush.msra.mxu0 %v1565
  %v1567 = vand.u32 %v1382, 4294901760
  %1568 = vmatpush.msra.mxu0 %v1567
  %v1569 = vand.u32 %v66, 4294901760
  %1570 = vmatmul.f32.gmra.mxu0 %v1569
  %v1571 = vpop.f32.mrf.mxu0
  %v1572 = vadd.f32 %v1545, %v1571
  %v1573 = vand.u32 %v69, 4294901760
  %1574 = vmatmul.f32.gmra.mxu0 %v1573
  %v1575 = vpop.f32.mrf.mxu0
  %v1576 = vadd.f32 %v1549, %v1575
  %1577 = vdwg.mxu0
  %v1578 = vmul.f32 %v1572, 2.0
  %v1579 = vmul.f32 %v1576, 2.0
  %v1580 = vsub.f32 %v1578, %v1196
  %v1581 = vsub.f32 %v1579, %v1197
  %1582 = vmatpush.msra.mxu0 0.0
  %1583 = vmatpush.msra.mxu0 0.0
  %1584 = vmatpush.msra.mxu0 0.0
  %1585 = vmatpush.msra.mxu0 0.0
  %1586 = vmatpush.msra.mxu0 0.0
  %1587 = vmatpush.msra.mxu0 0.0
  %1588 = vmatpush.msra.mxu0 0.0
  %1589 = vmatpush.msra.mxu0 0.0
  %1590 = vmatpush.msra.mxu0 0.0
  %1591 = vmatpush.msra.mxu0 0.0
  %1592 = vmatpush.msra.mxu0 0.0
  %1593 = vmatpush.msra.mxu0 0.0
  %1594 = vmatpush.msra.mxu0 0.0
  %1595 = vmatpush.msra.mxu0 0.0
  %v1596 = vand.u32 %v1386, 4294901760
  %1597 = vmatpush.msra.mxu0 %v1596
  %v1598 = vand.u32 %v1382, 4294901760
  %1599 = vmatpush.msra.mxu0 %v1598
  %v1600 = vand.u32 %v456, 4294901760
  %v1601 = vsub.f32 %v456, %v1600
  %v1602 = vand.u32 %v1601, 4294901760
  %v1603 = vsub.f32 %v1601, %v1602
  %v1604 = vand.u32 %v1603, 4294901760
  %1605 = vmatmul.f32.gmra.mxu0 %v1604
  %v1606 = vpop.f32.mrf.mxu0
  %v1607 = vadd.f32 0.0, %v1606
  %v1608 = vand.u32 %v459, 4294901760
  %v1609 = vsub.f32 %v459, %v1608
  %v1610 = vand.u32 %v1609, 4294901760
  %v1611 = vsub.f32 %v1609, %v1610
  %v1612 = vand.u32 %v1611, 4294901760
  %1613 = vmatmul.f32.gmra.mxu0 %v1612
  %v1614 = vpop.f32.mrf.mxu0
  %v1615 = vadd.f32 0.0, %v1614
  %1616 = vdwg.mxu0
  %1617 = vmatpush.msra.mxu0 0.0
  %1618 = vmatpush.msra.mxu0 0.0
  %1619 = vmatpush.msra.mxu0 0.0
  %1620 = vmatpush.msra.mxu0 0.0
  %1621 = vmatpush.msra.mxu0 0.0
  %1622 = vmatpush.msra.mxu0 0.0
  %1623 = vmatpush.msra.mxu0 0.0
  %1624 = vmatpush.msra.mxu0 0.0
  %1625 = vmatpush.msra.mxu0 0.0
  %1626 = vmatpush.msra.mxu0 0.0
  %1627 = vmatpush.msra.mxu0 0.0
  %1628 = vmatpush.msra.mxu0 0.0
  %1629 = vmatpush.msra.mxu0 0.0
  %1630 = vmatpush.msra.mxu0 0.0
  %v1631 = vand.u32 %v1386, 4294901760
  %v1632 = vsub.f32 %v1386, %v1631
  %v1633 = vand.u32 %v1632, 4294901760
  %v1634 = vsub.f32 %v1632, %v1633
  %v1635 = vand.u32 %v1634, 4294901760
  %1636 = vmatpush.msra.mxu0 %v1635
  %v1637 = vand.u32 %v1382, 4294901760
  %v1638 = vsub.f32 %v1382, %v1637
  %v1639 = vand.u32 %v1638, 4294901760
  %v1640 = vsub.f32 %v1638, %v1639
  %v1641 = vand.u32 %v1640, 4294901760
  %1642 = vmatpush.msra.mxu0 %v1641
  %v1643 = vand.u32 %v456, 4294901760
  %1644 = vmatmul.f32.gmra.mxu0 %v1643
  %v1645 = vpop.f32.mrf.mxu0
  %v1646 = vadd.f32 %v1607, %v1645
  %v1647 = vand.u32 %v459, 4294901760
  %1648 = vmatmul.f32.gmra.mxu0 %v1647
  %v1649 = vpop.f32.mrf.mxu0
  %v1650 = vadd.f32 %v1615, %v1649
  %1651 = vdwg.mxu0
  %1652 = vmatpush.msra.mxu0 0.0
  %1653 = vmatpush.msra.mxu0 0.0
  %1654 = vmatpush.msra.mxu0 0.0
  %1655 = vmatpush.msra.mxu0 0.0
  %1656 = vmatpush.msra.mxu0 0.0
  %1657 = vmatpush.msra.mxu0 0.0
  %1658 = vmatpush.msra.mxu0 0.0
  %1659 = vmatpush.msra.mxu0 0.0
  %1660 = vmatpush.msra.mxu0 0.0
  %1661 = vmatpush.msra.mxu0 0.0
  %1662 = vmatpush.msra.mxu0 0.0
  %1663 = vmatpush.msra.mxu0 0.0
  %1664 = vmatpush.msra.mxu0 0.0
  %1665 = vmatpush.msra.mxu0 0.0
  %v1666 = vand.u32 %v1386, 4294901760
  %v1667 = vsub.f32 %v1386, %v1666
  %1668 = vmatpush.msra.mxu0 %v1667
  %v1669 = vand.u32 %v1382, 4294901760
  %v1670 = vsub.f32 %v1382, %v1669
  %1671 = vmatpush.msra.mxu0 %v1670
  %v1672 = vand.u32 %v456, 4294901760
  %v1673 = vsub.f32 %v456, %v1672
  %1674 = vmatmul.f32.gmra.mxu0 %v1673
  %v1675 = vpop.f32.mrf.mxu0
  %v1676 = vadd.f32 %v1646, %v1675
  %v1677 = vand.u32 %v459, 4294901760
  %v1678 = vsub.f32 %v459, %v1677
  %1679 = vmatmul.f32.gmra.mxu0 %v1678
  %v1680 = vpop.f32.mrf.mxu0
  %v1681 = vadd.f32 %v1650, %v1680
  %1682 = vdwg.mxu0
  %1683 = vmatpush.msra.mxu0 0.0
  %1684 = vmatpush.msra.mxu0 0.0
  %1685 = vmatpush.msra.mxu0 0.0
  %1686 = vmatpush.msra.mxu0 0.0
  %1687 = vmatpush.msra.mxu0 0.0
  %1688 = vmatpush.msra.mxu0 0.0
  %1689 = vmatpush.msra.mxu0 0.0
  %1690 = vmatpush.msra.mxu0 0.0
  %1691 = vmatpush.msra.mxu0 0.0
  %1692 = vmatpush.msra.mxu0 0.0
  %1693 = vmatpush.msra.mxu0 0.0
  %1694 = vmatpush.msra.mxu0 0.0
  %1695 = vmatpush.msra.mxu0 0.0
  %1696 = vmatpush.msra.mxu0 0.0
  %v1697 = vand.u32 %v1386, 4294901760
  %1698 = vmatpush.msra.mxu0 %v1697
  %v1699 = vand.u32 %v1382, 4294901760
  %1700 = vmatpush.msra.mxu0 %v1699
  %v1701 = vand.u32 %v456, 4294901760
  %v1702 = vsub.f32 %v456, %v1701
  %v1703 = vand.u32 %v1702, 4294901760
  %1704 = vmatmul.f32.gmra.mxu0 %v1703
  %v1705 = vpop.f32.mrf.mxu0
  %v1706 = vadd.f32 %v1676, %v1705
  %v1707 = vand.u32 %v459, 4294901760
  %v1708 = vsub.f32 %v459, %v1707
  %v1709 = vand.u32 %v1708, 4294901760
  %1710 = vmatmul.f32.gmra.mxu0 %v1709
  %v1711 = vpop.f32.mrf.mxu0
  %v1712 = vadd.f32 %v1681, %v1711
  %1713 = vdwg.mxu0
  %1714 = vmatpush.msra.mxu0 0.0
  %1715 = vmatpush.msra.mxu0 0.0
  %1716 = vmatpush.msra.mxu0 0.0
  %1717 = vmatpush.msra.mxu0 0.0
  %1718 = vmatpush.msra.mxu0 0.0
  %1719 = vmatpush.msra.mxu0 0.0
  %1720 = vmatpush.msra.mxu0 0.0
  %1721 = vmatpush.msra.mxu0 0.0
  %1722 = vmatpush.msra.mxu0 0.0
  %1723 = vmatpush.msra.mxu0 0.0
  %1724 = vmatpush.msra.mxu0 0.0
  %1725 = vmatpush.msra.mxu0 0.0
  %1726 = vmatpush.msra.mxu0 0.0
  %1727 = vmatpush.msra.mxu0 0.0
  %v1728 = vand.u32 %v1386, 4294901760
  %v1729 = vsub.f32 %v1386, %v1728
  %v1730 = vand.u32 %v1729, 4294901760
  %1731 = vmatpush.msra.mxu0 %v1730
  %v1732 = vand.u32 %v1382, 4294901760
  %v1733 = vsub.f32 %v1382, %v1732
  %v1734 = vand.u32 %v1733, 4294901760
  %1735 = vmatpush.msra.mxu0 %v1734
  %v1736 = vand.u32 %v456, 4294901760
  %1737 = vmatmul.f32.gmra.mxu0 %v1736
  %v1738 = vpop.f32.mrf.mxu0
  %v1739 = vadd.f32 %v1706, %v1738
  %v1740 = vand.u32 %v459, 4294901760
  %1741 = vmatmul.f32.gmra.mxu0 %v1740
  %v1742 = vpop.f32.mrf.mxu0
  %v1743 = vadd.f32 %v1712, %v1742
  %1744 = vdwg.mxu0
  %1745 = vmatpush.msra.mxu0 0.0
  %1746 = vmatpush.msra.mxu0 0.0
  %1747 = vmatpush.msra.mxu0 0.0
  %1748 = vmatpush.msra.mxu0 0.0
  %1749 = vmatpush.msra.mxu0 0.0
  %1750 = vmatpush.msra.mxu0 0.0
  %1751 = vmatpush.msra.mxu0 0.0
  %1752 = vmatpush.msra.mxu0 0.0
  %1753 = vmatpush.msra.mxu0 0.0
  %1754 = vmatpush.msra.mxu0 0.0
  %1755 = vmatpush.msra.mxu0 0.0
  %1756 = vmatpush.msra.mxu0 0.0
  %1757 = vmatpush.msra.mxu0 0.0
  %1758 = vmatpush.msra.mxu0 0.0
  %v1759 = vand.u32 %v1386, 4294901760
  %1760 = vmatpush.msra.mxu0 %v1759
  %v1761 = vand.u32 %v1382, 4294901760
  %1762 = vmatpush.msra.mxu0 %v1761
  %v1763 = vand.u32 %v456, 4294901760
  %1764 = vmatmul.f32.gmra.mxu0 %v1763
  %v1765 = vpop.f32.mrf.mxu0
  %v1766 = vadd.f32 %v1739, %v1765
  %v1767 = vand.u32 %v459, 4294901760
  %1768 = vmatmul.f32.gmra.mxu0 %v1767
  %v1769 = vpop.f32.mrf.mxu0
  %v1770 = vadd.f32 %v1743, %v1769
  %1771 = vdwg.mxu0
  %1772 = vmatpush.msra.mxu0 0.0
  %1773 = vmatpush.msra.mxu0 0.0
  %1774 = vmatpush.msra.mxu0 0.0
  %1775 = vmatpush.msra.mxu0 0.0
  %1776 = vmatpush.msra.mxu0 0.0
  %1777 = vmatpush.msra.mxu0 0.0
  %1778 = vmatpush.msra.mxu0 0.0
  %1779 = vmatpush.msra.mxu0 0.0
  %1780 = vmatpush.msra.mxu0 0.0
  %1781 = vmatpush.msra.mxu0 0.0
  %1782 = vmatpush.msra.mxu0 0.0
  %1783 = vmatpush.msra.mxu0 0.0
  %1784 = vmatpush.msra.mxu0 0.0
  %1785 = vmatpush.msra.mxu0 0.0
  %v1786 = vand.u32 %v1770, 4294901760
  %1787 = vmatpush.msra.mxu0 %v1786
  %v1788 = vand.u32 %v1766, 4294901760
  %1789 = vmatpush.msra.mxu0 %v1788
  %v1790 = vand.u32 %v456, 4294901760
  %v1791 = vsub.f32 %v456, %v1790
  %v1792 = vand.u32 %v1791, 4294901760
  %v1793 = vsub.f32 %v1791, %v1792
  %v1794 = vand.u32 %v1793, 4294901760
  %1795 = vmatmul.f32.gmra.mxu0 %v1794
  %v1796 = vpop.f32.mrf.mxu0
  %v1797 = vadd.f32 0.0, %v1796
  %v1798 = vand.u32 %v459, 4294901760
  %v1799 = vsub.f32 %v459, %v1798
  %v1800 = vand.u32 %v1799, 4294901760
  %v1801 = vsub.f32 %v1799, %v1800
  %v1802 = vand.u32 %v1801, 4294901760
  %1803 = vmatmul.f32.gmra.mxu0 %v1802
  %v1804 = vpop.f32.mrf.mxu0
  %v1805 = vadd.f32 0.0, %v1804
  %1806 = vdwg.mxu0
  %1807 = vmatpush.msra.mxu0 0.0
  %1808 = vmatpush.msra.mxu0 0.0
  %1809 = vmatpush.msra.mxu0 0.0
  %1810 = vmatpush.msra.mxu0 0.0
  %1811 = vmatpush.msra.mxu0 0.0
  %1812 = vmatpush.msra.mxu0 0.0
  %1813 = vmatpush.msra.mxu0 0.0
  %1814 = vmatpush.msra.mxu0 0.0
  %1815 = vmatpush.msra.mxu0 0.0
  %1816 = vmatpush.msra.mxu0 0.0
  %1817 = vmatpush.msra.mxu0 0.0
  %1818 = vmatpush.msra.mxu0 0.0
  %1819 = vmatpush.msra.mxu0 0.0
  %1820 = vmatpush.msra.mxu0 0.0
  %v1821 = vand.u32 %v1770, 4294901760
  %v1822 = vsub.f32 %v1770, %v1821
  %v1823 = vand.u32 %v1822, 4294901760
  %v1824 = vsub.f32 %v1822, %v1823
  %v1825 = vand.u32 %v1824, 4294901760
  %1826 = vmatpush.msra.mxu0 %v1825
  %v1827 = vand.u32 %v1766, 4294901760
  %v1828 = vsub.f32 %v1766, %v1827
  %v1829 = vand.u32 %v1828, 4294901760
  %v1830 = vsub.f32 %v1828, %v1829
  %v1831 = vand.u32 %v1830, 4294901760
  %1832 = vmatpush.msra.mxu0 %v1831
  %v1833 = vand.u32 %v456, 4294901760
  %1834 = vmatmul.f32.gmra.mxu0 %v1833
  %v1835 = vpop.f32.mrf.mxu0
  %v1836 = vadd.f32 %v1797, %v1835
  %v1837 = vand.u32 %v459, 4294901760
  %1838 = vmatmul.f32.gmra.mxu0 %v1837
  %v1839 = vpop.f32.mrf.mxu0
  %v1840 = vadd.f32 %v1805, %v1839
  %1841 = vdwg.mxu0
  %1842 = vmatpush.msra.mxu0 0.0
  %1843 = vmatpush.msra.mxu0 0.0
  %1844 = vmatpush.msra.mxu0 0.0
  %1845 = vmatpush.msra.mxu0 0.0
  %1846 = vmatpush.msra.mxu0 0.0
  %1847 = vmatpush.msra.mxu0 0.0
  %1848 = vmatpush.msra.mxu0 0.0
  %1849 = vmatpush.msra.mxu0 0.0
  %1850 = vmatpush.msra.mxu0 0.0
  %1851 = vmatpush.msra.mxu0 0.0
  %1852 = vmatpush.msra.mxu0 0.0
  %1853 = vmatpush.msra.mxu0 0.0
  %1854 = vmatpush.msra.mxu0 0.0
  %1855 = vmatpush.msra.mxu0 0.0
  %v1856 = vand.u32 %v1770, 4294901760
  %v1857 = vsub.f32 %v1770, %v1856
  %1858 = vmatpush.msra.mxu0 %v1857
  %v1859 = vand.u32 %v1766, 4294901760
  %v1860 = vsub.f32 %v1766, %v1859
  %1861 = vmatpush.msra.mxu0 %v1860
  %v1862 = vand.u32 %v456, 4294901760
  %v1863 = vsub.f32 %v456, %v1862
  %1864 = vmatmul.f32.gmra.mxu0 %v1863
  %v1865 = vpop.f32.mrf.mxu0
  %v1866 = vadd.f32 %v1836, %v1865
  %v1867 = vand.u32 %v459, 4294901760
  %v1868 = vsub.f32 %v459, %v1867
  %1869 = vmatmul.f32.gmra.mxu0 %v1868
  %v1870 = vpop.f32.mrf.mxu0
  %v1871 = vadd.f32 %v1840, %v1870
  %1872 = vdwg.mxu0
  %1873 = vmatpush.msra.mxu0 0.0
  %1874 = vmatpush.msra.mxu0 0.0
  %1875 = vmatpush.msra.mxu0 0.0
  %1876 = vmatpush.msra.mxu0 0.0
  %1877 = vmatpush.msra.mxu0 0.0
  %1878 = vmatpush.msra.mxu0 0.0
  %1879 = vmatpush.msra.mxu0 0.0
  %1880 = vmatpush.msra.mxu0 0.0
  %1881 = vmatpush.msra.mxu0 0.0
  %1882 = vmatpush.msra.mxu0 0.0
  %1883 = vmatpush.msra.mxu0 0.0
  %1884 = vmatpush.msra.mxu0 0.0
  %1885 = vmatpush.msra.mxu0 0.0
  %1886 = vmatpush.msra.mxu0 0.0
  %v1887 = vand.u32 %v1770, 4294901760
  %1888 = vmatpush.msra.mxu0 %v1887
  %v1889 = vand.u32 %v1766, 4294901760
  %1890 = vmatpush.msra.mxu0 %v1889
  %v1891 = vand.u32 %v456, 4294901760
  %v1892 = vsub.f32 %v456, %v1891
  %v1893 = vand.u32 %v1892, 4294901760
  %1894 = vmatmul.f32.gmra.mxu0 %v1893
  %v1895 = vpop.f32.mrf.mxu0
  %v1896 = vadd.f32 %v1866, %v1895
  %v1897 = vand.u32 %v459, 4294901760
  %v1898 = vsub.f32 %v459, %v1897
  %v1899 = vand.u32 %v1898, 4294901760
  %1900 = vmatmul.f32.gmra.mxu0 %v1899
  %v1901 = vpop.f32.mrf.mxu0
  %v1902 = vadd.f32 %v1871, %v1901
  %1903 = vdwg.mxu0
  %1904 = vmatpush.msra.mxu0 0.0
  %1905 = vmatpush.msra.mxu0 0.0
  %1906 = vmatpush.msra.mxu0 0.0
  %1907 = vmatpush.msra.mxu0 0.0
  %1908 = vmatpush.msra.mxu0 0.0
  %1909 = vmatpush.msra.mxu0 0.0
  %1910 = vmatpush.msra.mxu0 0.0
  %1911 = vmatpush.msra.mxu0 0.0
  %1912 = vmatpush.msra.mxu0 0.0
  %1913 = vmatpush.msra.mxu0 0.0
  %1914 = vmatpush.msra.mxu0 0.0
  %1915 = vmatpush.msra.mxu0 0.0
  %1916 = vmatpush.msra.mxu0 0.0
  %1917 = vmatpush.msra.mxu0 0.0
  %v1918 = vand.u32 %v1770, 4294901760
  %v1919 = vsub.f32 %v1770, %v1918
  %v1920 = vand.u32 %v1919, 4294901760
  %1921 = vmatpush.msra.mxu0 %v1920
  %v1922 = vand.u32 %v1766, 4294901760
  %v1923 = vsub.f32 %v1766, %v1922
  %v1924 = vand.u32 %v1923, 4294901760
  %1925 = vmatpush.msra.mxu0 %v1924
  %v1926 = vand.u32 %v456, 4294901760
  %1927 = vmatmul.f32.gmra.mxu0 %v1926
  %v1928 = vpop.f32.mrf.mxu0
  %v1929 = vadd.f32 %v1896, %v1928
  %v1930 = vand.u32 %v459, 4294901760
  %1931 = vmatmul.f32.gmra.mxu0 %v1930
  %v1932 = vpop.f32.mrf.mxu0
  %v1933 = vadd.f32 %v1902, %v1932
  %1934 = vdwg.mxu0
  %1935 = vmatpush.msra.mxu0 0.0
  %1936 = vmatpush.msra.mxu0 0.0
  %1937 = vmatpush.msra.mxu0 0.0
  %1938 = vmatpush.msra.mxu0 0.0
  %1939 = vmatpush.msra.mxu0 0.0
  %1940 = vmatpush.msra.mxu0 0.0
  %1941 = vmatpush.msra.mxu0 0.0
  %1942 = vmatpush.msra.mxu0 0.0
  %1943 = vmatpush.msra.mxu0 0.0
  %1944 = vmatpush.msra.mxu0 0.0
  %1945 = vmatpush.msra.mxu0 0.0
  %1946 = vmatpush.msra.mxu0 0.0
  %1947 = vmatpush.msra.mxu0 0.0
  %1948 = vmatpush.msra.mxu0 0.0
  %v1949 = vand.u32 %v1770, 4294901760
  %1950 = vmatpush.msra.mxu0 %v1949
  %v1951 = vand.u32 %v1766, 4294901760
  %1952 = vmatpush.msra.mxu0 %v1951
  %v1953 = vand.u32 %v456, 4294901760
  %1954 = vmatmul.f32.gmra.mxu0 %v1953
  %v1955 = vpop.f32.mrf.mxu0
  %v1956 = vadd.f32 %v1929, %v1955
  %v1957 = vand.u32 %v459, 4294901760
  %1958 = vmatmul.f32.gmra.mxu0 %v1957
  %v1959 = vpop.f32.mrf.mxu0
  %v1960 = vadd.f32 %v1933, %v1959
  %1961 = vdwg.mxu0
  %v1962 = vmul.f32 %v1956, 2.0
  %v1963 = vmul.f32 %v1960, 2.0
  %v1964 = vsub.f32 %v1962, %v1382
  %v1965 = vsub.f32 %v1963, %v1386
  %1968 = vrot.lane.b32.xlu0 %v1196, 2
  %v1969 = vpop.permute.xlu0 %1968
  %1970 = vrot.lane.b32.xlu0 %v1197, 2
  %v1971 = vpop.permute.xlu0 %1970
  %1976 = vrot.lane.b32.xlu0 %v1382, 12
  %v1977 = vpop.permute.xlu0 %1976
  %1978 = vrot.lane.b32.xlu0 %v1386, 12
  %v1979 = vpop.permute.xlu0 %1978
  %1984 = vrot.lane.b32.xlu0 %v1580, 22
  %v1985 = vpop.permute.xlu0 %1984
  %1986 = vrot.lane.b32.xlu0 %v1581, 22
  %v1987 = vpop.permute.xlu0 %1986
  %1992 = vrot.lane.b32.xlu0 %v1766, 32
  %v1993 = vpop.permute.xlu0 %1992
  %1994 = vrot.lane.b32.xlu0 %v1770, 32
  %v1995 = vpop.permute.xlu0 %1994
  %2000 = vrot.lane.b32.xlu0 %v1964, 42
  %v2001 = vpop.permute.xlu0 %2000
  %2002 = vrot.lane.b32.xlu0 %v1965, 42
  %v2003 = vpop.permute.xlu0 %2002
  %v2006 = vsel %vm61, %v62, %v1969
  %v2007 = vsel %vm61, %v63, %v1971
  %v2008 = vsel %vm877, %v2006, %v848
  %v2009 = vsel %vm877, %v2007, %v850
  %vm2010 = vcmask 97280
  %v2011 = vsel %vm2010, %v2008, %v1977
  %v2012 = vsel %vm2010, %v2009, %v1979
  %v2013 = vsel %vm880, %v2011, %v856
  %v2014 = vsel %vm880, %v2012, %v858
  %vm2015 = vcmask 179200
  %v2016 = vsel %vm2015, %v2013, %v1985
  %v2017 = vsel %vm2015, %v2014, %v1987
  %v2018 = vsel %vm883, %v2016, %v864
  %v2019 = vsel %vm883, %v2017, %v866
  %vm2020 = vcmask 261120
  %v2021 = vsel %vm2020, %v2018, %v1993
  %v2022 = vsel %vm2020, %v2019, %v1995
  %v2023 = vsel %vm886, %v2021, %v872
  %v2024 = vsel %vm886, %v2022, %v874
  %vm2025 = vcmask 343040
  %v2026 = vsel %vm2025, %v2023, %v2001
  %v2027 = vsel %vm2025, %v2024, %v2003
  %v2029 = vperm.slane %v48, 0
  %v2032 = vsel %vm892, %v2026, 0
  %v2035 = vsel %vm892, %v2027, 0
  %v2038 = vsel %vm899, %v47, 0
  %2040 = vmatpush.msra.mxu0 0.0
  %2041 = vmatpush.msra.mxu0 0.0
  %2042 = vmatpush.msra.mxu0 0.0
  %2043 = vmatpush.msra.mxu0 0.0
  %2044 = vmatpush.msra.mxu0 0.0
  %2045 = vmatpush.msra.mxu0 0.0
  %2046 = vmatpush.msra.mxu0 0.0
  %2047 = vmatpush.msra.mxu0 0.0
  %2048 = vmatpush.msra.mxu0 0.0
  %v2049 = vand.u32 %v2038, 4294901760
  %2050 = vmatpush.msra.mxu0 %v2049
  %v2051 = vand.u32 %v46, 4294901760
  %2052 = vmatpush.msra.mxu0 %v2051
  %v2053 = vand.u32 %v45, 4294901760
  %2054 = vmatpush.msra.mxu0 %v2053
  %v2055 = vand.u32 %v44, 4294901760
  %2056 = vmatpush.msra.mxu0 %v2055
  %v2057 = vand.u32 %v43, 4294901760
  %2058 = vmatpush.msra.mxu0 %v2057
  %v2059 = vand.u32 %v42, 4294901760
  %2060 = vmatpush.msra.mxu0 %v2059
  %v2061 = vand.u32 %v41, 4294901760
  %2062 = vmatpush.msra.mxu0 %v2061
  %v2063 = vand.u32 %v2032, 4294901760
  %v2064 = vsub.f32 %v2032, %v2063
  %v2065 = vand.u32 %v2064, 4294901760
  %v2066 = vsub.f32 %v2064, %v2065
  %v2067 = vand.u32 %v2066, 4294901760
  %2068 = vmatmul.f32.gmra.mxu0 %v2067
  %v2069 = vpop.f32.mrf.mxu0
  %v2070 = vadd.f32 %v2029, %v2069
  %v2071 = vand.u32 %v2035, 4294901760
  %v2072 = vsub.f32 %v2035, %v2071
  %v2073 = vand.u32 %v2072, 4294901760
  %v2074 = vsub.f32 %v2072, %v2073
  %v2075 = vand.u32 %v2074, 4294901760
  %2076 = vmatmul.f32.gmra.mxu0 %v2075
  %v2077 = vpop.f32.mrf.mxu0
  %v2078 = vadd.f32 %v2029, %v2077
  %2079 = vdwg.mxu0
  %2080 = vmatpush.msra.mxu0 0.0
  %2081 = vmatpush.msra.mxu0 0.0
  %2082 = vmatpush.msra.mxu0 0.0
  %2083 = vmatpush.msra.mxu0 0.0
  %2084 = vmatpush.msra.mxu0 0.0
  %2085 = vmatpush.msra.mxu0 0.0
  %2086 = vmatpush.msra.mxu0 0.0
  %2087 = vmatpush.msra.mxu0 0.0
  %2088 = vmatpush.msra.mxu0 0.0
  %v2089 = vand.u32 %v2038, 4294901760
  %v2090 = vsub.f32 %v2038, %v2089
  %v2091 = vand.u32 %v2090, 4294901760
  %v2092 = vsub.f32 %v2090, %v2091
  %v2093 = vand.u32 %v2092, 4294901760
  %2094 = vmatpush.msra.mxu0 %v2093
  %v2095 = vand.u32 %v46, 4294901760
  %v2096 = vsub.f32 %v46, %v2095
  %v2097 = vand.u32 %v2096, 4294901760
  %v2098 = vsub.f32 %v2096, %v2097
  %v2099 = vand.u32 %v2098, 4294901760
  %2100 = vmatpush.msra.mxu0 %v2099
  %v2101 = vand.u32 %v45, 4294901760
  %v2102 = vsub.f32 %v45, %v2101
  %v2103 = vand.u32 %v2102, 4294901760
  %v2104 = vsub.f32 %v2102, %v2103
  %v2105 = vand.u32 %v2104, 4294901760
  %2106 = vmatpush.msra.mxu0 %v2105
  %v2107 = vand.u32 %v44, 4294901760
  %v2108 = vsub.f32 %v44, %v2107
  %v2109 = vand.u32 %v2108, 4294901760
  %v2110 = vsub.f32 %v2108, %v2109
  %v2111 = vand.u32 %v2110, 4294901760
  %2112 = vmatpush.msra.mxu0 %v2111
  %v2113 = vand.u32 %v43, 4294901760
  %v2114 = vsub.f32 %v43, %v2113
  %v2115 = vand.u32 %v2114, 4294901760
  %v2116 = vsub.f32 %v2114, %v2115
  %v2117 = vand.u32 %v2116, 4294901760
  %2118 = vmatpush.msra.mxu0 %v2117
  %v2119 = vand.u32 %v42, 4294901760
  %v2120 = vsub.f32 %v42, %v2119
  %v2121 = vand.u32 %v2120, 4294901760
  %v2122 = vsub.f32 %v2120, %v2121
  %v2123 = vand.u32 %v2122, 4294901760
  %2124 = vmatpush.msra.mxu0 %v2123
  %v2125 = vand.u32 %v41, 4294901760
  %v2126 = vsub.f32 %v41, %v2125
  %v2127 = vand.u32 %v2126, 4294901760
  %v2128 = vsub.f32 %v2126, %v2127
  %v2129 = vand.u32 %v2128, 4294901760
  %2130 = vmatpush.msra.mxu0 %v2129
  %v2131 = vand.u32 %v2032, 4294901760
  %2132 = vmatmul.f32.gmra.mxu0 %v2131
  %v2133 = vpop.f32.mrf.mxu0
  %v2134 = vadd.f32 %v2070, %v2133
  %v2135 = vand.u32 %v2035, 4294901760
  %2136 = vmatmul.f32.gmra.mxu0 %v2135
  %v2137 = vpop.f32.mrf.mxu0
  %v2138 = vadd.f32 %v2078, %v2137
  %2139 = vdwg.mxu0
  %2140 = vmatpush.msra.mxu0 0.0
  %2141 = vmatpush.msra.mxu0 0.0
  %2142 = vmatpush.msra.mxu0 0.0
  %2143 = vmatpush.msra.mxu0 0.0
  %2144 = vmatpush.msra.mxu0 0.0
  %2145 = vmatpush.msra.mxu0 0.0
  %2146 = vmatpush.msra.mxu0 0.0
  %2147 = vmatpush.msra.mxu0 0.0
  %2148 = vmatpush.msra.mxu0 0.0
  %v2149 = vand.u32 %v2038, 4294901760
  %v2150 = vsub.f32 %v2038, %v2149
  %2151 = vmatpush.msra.mxu0 %v2150
  %v2152 = vand.u32 %v46, 4294901760
  %v2153 = vsub.f32 %v46, %v2152
  %2154 = vmatpush.msra.mxu0 %v2153
  %v2155 = vand.u32 %v45, 4294901760
  %v2156 = vsub.f32 %v45, %v2155
  %2157 = vmatpush.msra.mxu0 %v2156
  %v2158 = vand.u32 %v44, 4294901760
  %v2159 = vsub.f32 %v44, %v2158
  %2160 = vmatpush.msra.mxu0 %v2159
  %v2161 = vand.u32 %v43, 4294901760
  %v2162 = vsub.f32 %v43, %v2161
  %2163 = vmatpush.msra.mxu0 %v2162
  %v2164 = vand.u32 %v42, 4294901760
  %v2165 = vsub.f32 %v42, %v2164
  %2166 = vmatpush.msra.mxu0 %v2165
  %v2167 = vand.u32 %v41, 4294901760
  %v2168 = vsub.f32 %v41, %v2167
  %2169 = vmatpush.msra.mxu0 %v2168
  %v2170 = vand.u32 %v2032, 4294901760
  %v2171 = vsub.f32 %v2032, %v2170
  %2172 = vmatmul.f32.gmra.mxu0 %v2171
  %v2173 = vpop.f32.mrf.mxu0
  %v2174 = vadd.f32 %v2134, %v2173
  %v2175 = vand.u32 %v2035, 4294901760
  %v2176 = vsub.f32 %v2035, %v2175
  %2177 = vmatmul.f32.gmra.mxu0 %v2176
  %v2178 = vpop.f32.mrf.mxu0
  %v2179 = vadd.f32 %v2138, %v2178
  %2180 = vdwg.mxu0
  %2181 = vmatpush.msra.mxu0 0.0
  %2182 = vmatpush.msra.mxu0 0.0
  %2183 = vmatpush.msra.mxu0 0.0
  %2184 = vmatpush.msra.mxu0 0.0
  %2185 = vmatpush.msra.mxu0 0.0
  %2186 = vmatpush.msra.mxu0 0.0
  %2187 = vmatpush.msra.mxu0 0.0
  %2188 = vmatpush.msra.mxu0 0.0
  %2189 = vmatpush.msra.mxu0 0.0
  %v2190 = vand.u32 %v2038, 4294901760
  %2191 = vmatpush.msra.mxu0 %v2190
  %v2192 = vand.u32 %v46, 4294901760
  %2193 = vmatpush.msra.mxu0 %v2192
  %v2194 = vand.u32 %v45, 4294901760
  %2195 = vmatpush.msra.mxu0 %v2194
  %v2196 = vand.u32 %v44, 4294901760
  %2197 = vmatpush.msra.mxu0 %v2196
  %v2198 = vand.u32 %v43, 4294901760
  %2199 = vmatpush.msra.mxu0 %v2198
  %v2200 = vand.u32 %v42, 4294901760
  %2201 = vmatpush.msra.mxu0 %v2200
  %v2202 = vand.u32 %v41, 4294901760
  %2203 = vmatpush.msra.mxu0 %v2202
  %v2204 = vand.u32 %v2032, 4294901760
  %v2205 = vsub.f32 %v2032, %v2204
  %v2206 = vand.u32 %v2205, 4294901760
  %2207 = vmatmul.f32.gmra.mxu0 %v2206
  %v2208 = vpop.f32.mrf.mxu0
  %v2209 = vadd.f32 %v2174, %v2208
  %v2210 = vand.u32 %v2035, 4294901760
  %v2211 = vsub.f32 %v2035, %v2210
  %v2212 = vand.u32 %v2211, 4294901760
  %2213 = vmatmul.f32.gmra.mxu0 %v2212
  %v2214 = vpop.f32.mrf.mxu0
  %v2215 = vadd.f32 %v2179, %v2214
  %2216 = vdwg.mxu0
  %2217 = vmatpush.msra.mxu0 0.0
  %2218 = vmatpush.msra.mxu0 0.0
  %2219 = vmatpush.msra.mxu0 0.0
  %2220 = vmatpush.msra.mxu0 0.0
  %2221 = vmatpush.msra.mxu0 0.0
  %2222 = vmatpush.msra.mxu0 0.0
  %2223 = vmatpush.msra.mxu0 0.0
  %2224 = vmatpush.msra.mxu0 0.0
  %2225 = vmatpush.msra.mxu0 0.0
  %v2226 = vand.u32 %v2038, 4294901760
  %v2227 = vsub.f32 %v2038, %v2226
  %v2228 = vand.u32 %v2227, 4294901760
  %2229 = vmatpush.msra.mxu0 %v2228
  %v2230 = vand.u32 %v46, 4294901760
  %v2231 = vsub.f32 %v46, %v2230
  %v2232 = vand.u32 %v2231, 4294901760
  %2233 = vmatpush.msra.mxu0 %v2232
  %v2234 = vand.u32 %v45, 4294901760
  %v2235 = vsub.f32 %v45, %v2234
  %v2236 = vand.u32 %v2235, 4294901760
  %2237 = vmatpush.msra.mxu0 %v2236
  %v2238 = vand.u32 %v44, 4294901760
  %v2239 = vsub.f32 %v44, %v2238
  %v2240 = vand.u32 %v2239, 4294901760
  %2241 = vmatpush.msra.mxu0 %v2240
  %v2242 = vand.u32 %v43, 4294901760
  %v2243 = vsub.f32 %v43, %v2242
  %v2244 = vand.u32 %v2243, 4294901760
  %2245 = vmatpush.msra.mxu0 %v2244
  %v2246 = vand.u32 %v42, 4294901760
  %v2247 = vsub.f32 %v42, %v2246
  %v2248 = vand.u32 %v2247, 4294901760
  %2249 = vmatpush.msra.mxu0 %v2248
  %v2250 = vand.u32 %v41, 4294901760
  %v2251 = vsub.f32 %v41, %v2250
  %v2252 = vand.u32 %v2251, 4294901760
  %2253 = vmatpush.msra.mxu0 %v2252
  %v2254 = vand.u32 %v2032, 4294901760
  %2255 = vmatmul.f32.gmra.mxu0 %v2254
  %v2256 = vpop.f32.mrf.mxu0
  %v2257 = vadd.f32 %v2209, %v2256
  %v2258 = vand.u32 %v2035, 4294901760
  %2259 = vmatmul.f32.gmra.mxu0 %v2258
  %v2260 = vpop.f32.mrf.mxu0
  %v2261 = vadd.f32 %v2215, %v2260
  %2262 = vdwg.mxu0
  %2263 = vmatpush.msra.mxu0 0.0
  %2264 = vmatpush.msra.mxu0 0.0
  %2265 = vmatpush.msra.mxu0 0.0
  %2266 = vmatpush.msra.mxu0 0.0
  %2267 = vmatpush.msra.mxu0 0.0
  %2268 = vmatpush.msra.mxu0 0.0
  %2269 = vmatpush.msra.mxu0 0.0
  %2270 = vmatpush.msra.mxu0 0.0
  %2271 = vmatpush.msra.mxu0 0.0
  %v2272 = vand.u32 %v2038, 4294901760
  %2273 = vmatpush.msra.mxu0 %v2272
  %v2274 = vand.u32 %v46, 4294901760
  %2275 = vmatpush.msra.mxu0 %v2274
  %v2276 = vand.u32 %v45, 4294901760
  %2277 = vmatpush.msra.mxu0 %v2276
  %v2278 = vand.u32 %v44, 4294901760
  %2279 = vmatpush.msra.mxu0 %v2278
  %v2280 = vand.u32 %v43, 4294901760
  %2281 = vmatpush.msra.mxu0 %v2280
  %v2282 = vand.u32 %v42, 4294901760
  %2283 = vmatpush.msra.mxu0 %v2282
  %v2284 = vand.u32 %v41, 4294901760
  %2285 = vmatpush.msra.mxu0 %v2284
  %v2286 = vand.u32 %v2032, 4294901760
  %2287 = vmatmul.f32.gmra.mxu0 %v2286
  %v2288 = vpop.f32.mrf.mxu0
  %v2289 = vadd.f32 %v2257, %v2288
  %v2290 = vand.u32 %v2035, 4294901760
  %2291 = vmatmul.f32.gmra.mxu0 %v2290
  %v2292 = vpop.f32.mrf.mxu0
  %v2293 = vadd.f32 %v2261, %v2292
  %2294 = vdwg.mxu0
  %v2295 = vtanh.pop %v2289
  %v2296 = vtanh.pop %v2293
  %2297 = vrot.lane.b32.xlu0 %v51, 8
  %v2298 = vpop.permute.xlu0 %2297
  %2299 = vrot.lane.b32.xlu0 %v52, 8
  %v2300 = vpop.permute.xlu0 %2299
  %v2303 = vmul.f32 %v1180, %v2298
  %v2304 = vmul.f32 %v1195, %v2300
  %v2305 = vsub.f32 1.0, %v1180
  %v2306 = vsub.f32 1.0, %v1195
  %2309 = vrot.lane.b32.xlu0 %v2295, 8
  %v2310 = vpop.permute.xlu0 %2309
  %2311 = vrot.lane.b32.xlu0 %v2296, 8
  %v2312 = vpop.permute.xlu0 %2311
  %v2315 = vmul.f32 %v2305, %v2310
  %v2316 = vmul.f32 %v2306, %v2312
  %v2317 = vadd.f32 %v2303, %v2315
  %v2318 = vadd.f32 %v2304, %v2316
  %2321 = vrot.lane.b32.xlu0 %v2317, 120
  %v2322 = vpop.permute.xlu0 %2321
  %2323 = vrot.lane.b32.xlu0 %v2318, 120
  %v2324 = vpop.permute.xlu0 %2323
  %vm2327 = vcmask 64512
  %2328 = vst.msk [vmem:[%s8] sm:$0xff] %vm2327, %v2322
  %2329 = vst.msk [vmem:[%s8 + $0x8] sm:$0xff] %vm2327, %v2324
  %2330 = vst.msk [vmem:[%s7] sm:$0xff] %vm2327, %v2322
  %2331 = vst.msk [vmem:[%s7 + $0x8] sm:$0xff] %vm2327, %v2324
  %s2332 = scalar_lea.vmem %s0, 16
  %v2333 = vld [vmem:[%s2332] sm:$0xff]
  %v2334 = vld [vmem:[%s2332 + $0x8] sm:$0xff]
  %s2335 = scalar_lea.vmem %s1, 16
  %v2336 = vld [vmem:[%s2335] sm:$0xff]
  %v2337 = vld [vmem:[%s2335 + $0x8] sm:$0xff]
  %2340 = vrot.lane.b32.xlu0 %v2336, 2
  %v2341 = vpop.permute.xlu0 %2340
  %2342 = vrot.lane.b32.xlu0 %v2337, 2
  %v2343 = vpop.permute.xlu0 %2342
  %v2346 = vsel %vm61, %v2333, %v2341
  %v2347 = vsel %vm61, %v2334, %v2343
  %2348 = vmatpush.msra.mxu0 0.0
  %2349 = vmatpush.msra.mxu0 0.0
  %2350 = vmatpush.msra.mxu0 0.0
  %2351 = vmatpush.msra.mxu0 0.0
  %2352 = vmatpush.msra.mxu0 0.0
  %2353 = vmatpush.msra.mxu0 0.0
  %2354 = vmatpush.msra.mxu0 0.0
  %2355 = vmatpush.msra.mxu0 0.0
  %2356 = vmatpush.msra.mxu0 0.0
  %2357 = vmatpush.msra.mxu0 0.0
  %2358 = vmatpush.msra.mxu0 0.0
  %2359 = vmatpush.msra.mxu0 0.0
  %2360 = vmatpush.msra.mxu0 0.0
  %2361 = vmatpush.msra.mxu0 0.0
  %v2362 = vand.u32 %v2347, 4294901760
  %2363 = vmatpush.msra.mxu0 %v2362
  %v2364 = vand.u32 %v2346, 4294901760
  %2365 = vmatpush.msra.mxu0 %v2364
  %v2366 = vand.u32 %v66, 4294901760
  %v2367 = vsub.f32 %v66, %v2366
  %v2368 = vand.u32 %v2367, 4294901760
  %v2369 = vsub.f32 %v2367, %v2368
  %v2370 = vand.u32 %v2369, 4294901760
  %2371 = vmatmul.f32.gmra.mxu0 %v2370
  %v2372 = vpop.f32.mrf.mxu0
  %v2373 = vadd.f32 0.0, %v2372
  %v2374 = vand.u32 %v69, 4294901760
  %v2375 = vsub.f32 %v69, %v2374
  %v2376 = vand.u32 %v2375, 4294901760
  %v2377 = vsub.f32 %v2375, %v2376
  %v2378 = vand.u32 %v2377, 4294901760
  %2379 = vmatmul.f32.gmra.mxu0 %v2378
  %v2380 = vpop.f32.mrf.mxu0
  %v2381 = vadd.f32 0.0, %v2380
  %2382 = vdwg.mxu0
  %2383 = vmatpush.msra.mxu0 0.0
  %2384 = vmatpush.msra.mxu0 0.0
  %2385 = vmatpush.msra.mxu0 0.0
  %2386 = vmatpush.msra.mxu0 0.0
  %2387 = vmatpush.msra.mxu0 0.0
  %2388 = vmatpush.msra.mxu0 0.0
  %2389 = vmatpush.msra.mxu0 0.0
  %2390 = vmatpush.msra.mxu0 0.0
  %2391 = vmatpush.msra.mxu0 0.0
  %2392 = vmatpush.msra.mxu0 0.0
  %2393 = vmatpush.msra.mxu0 0.0
  %2394 = vmatpush.msra.mxu0 0.0
  %2395 = vmatpush.msra.mxu0 0.0
  %2396 = vmatpush.msra.mxu0 0.0
  %v2397 = vand.u32 %v2347, 4294901760
  %v2398 = vsub.f32 %v2347, %v2397
  %v2399 = vand.u32 %v2398, 4294901760
  %v2400 = vsub.f32 %v2398, %v2399
  %v2401 = vand.u32 %v2400, 4294901760
  %2402 = vmatpush.msra.mxu0 %v2401
  %v2403 = vand.u32 %v2346, 4294901760
  %v2404 = vsub.f32 %v2346, %v2403
  %v2405 = vand.u32 %v2404, 4294901760
  %v2406 = vsub.f32 %v2404, %v2405
  %v2407 = vand.u32 %v2406, 4294901760
  %2408 = vmatpush.msra.mxu0 %v2407
  %v2409 = vand.u32 %v66, 4294901760
  %2410 = vmatmul.f32.gmra.mxu0 %v2409
  %v2411 = vpop.f32.mrf.mxu0
  %v2412 = vadd.f32 %v2373, %v2411
  %v2413 = vand.u32 %v69, 4294901760
  %2414 = vmatmul.f32.gmra.mxu0 %v2413
  %v2415 = vpop.f32.mrf.mxu0
  %v2416 = vadd.f32 %v2381, %v2415
  %2417 = vdwg.mxu0
  %2418 = vmatpush.msra.mxu0 0.0
  %2419 = vmatpush.msra.mxu0 0.0
  %2420 = vmatpush.msra.mxu0 0.0
  %2421 = vmatpush.msra.mxu0 0.0
  %2422 = vmatpush.msra.mxu0 0.0
  %2423 = vmatpush.msra.mxu0 0.0
  %2424 = vmatpush.msra.mxu0 0.0
  %2425 = vmatpush.msra.mxu0 0.0
  %2426 = vmatpush.msra.mxu0 0.0
  %2427 = vmatpush.msra.mxu0 0.0
  %2428 = vmatpush.msra.mxu0 0.0
  %2429 = vmatpush.msra.mxu0 0.0
  %2430 = vmatpush.msra.mxu0 0.0
  %2431 = vmatpush.msra.mxu0 0.0
  %v2432 = vand.u32 %v2347, 4294901760
  %v2433 = vsub.f32 %v2347, %v2432
  %2434 = vmatpush.msra.mxu0 %v2433
  %v2435 = vand.u32 %v2346, 4294901760
  %v2436 = vsub.f32 %v2346, %v2435
  %2437 = vmatpush.msra.mxu0 %v2436
  %v2438 = vand.u32 %v66, 4294901760
  %v2439 = vsub.f32 %v66, %v2438
  %2440 = vmatmul.f32.gmra.mxu0 %v2439
  %v2441 = vpop.f32.mrf.mxu0
  %v2442 = vadd.f32 %v2412, %v2441
  %v2443 = vand.u32 %v69, 4294901760
  %v2444 = vsub.f32 %v69, %v2443
  %2445 = vmatmul.f32.gmra.mxu0 %v2444
  %v2446 = vpop.f32.mrf.mxu0
  %v2447 = vadd.f32 %v2416, %v2446
  %2448 = vdwg.mxu0
  %2449 = vmatpush.msra.mxu0 0.0
  %2450 = vmatpush.msra.mxu0 0.0
  %2451 = vmatpush.msra.mxu0 0.0
  %2452 = vmatpush.msra.mxu0 0.0
  %2453 = vmatpush.msra.mxu0 0.0
  %2454 = vmatpush.msra.mxu0 0.0
  %2455 = vmatpush.msra.mxu0 0.0
  %2456 = vmatpush.msra.mxu0 0.0
  %2457 = vmatpush.msra.mxu0 0.0
  %2458 = vmatpush.msra.mxu0 0.0
  %2459 = vmatpush.msra.mxu0 0.0
  %2460 = vmatpush.msra.mxu0 0.0
  %2461 = vmatpush.msra.mxu0 0.0
  %2462 = vmatpush.msra.mxu0 0.0
  %v2463 = vand.u32 %v2347, 4294901760
  %2464 = vmatpush.msra.mxu0 %v2463
  %v2465 = vand.u32 %v2346, 4294901760
  %2466 = vmatpush.msra.mxu0 %v2465
  %v2467 = vand.u32 %v66, 4294901760
  %v2468 = vsub.f32 %v66, %v2467
  %v2469 = vand.u32 %v2468, 4294901760
  %2470 = vmatmul.f32.gmra.mxu0 %v2469
  %v2471 = vpop.f32.mrf.mxu0
  %v2472 = vadd.f32 %v2442, %v2471
  %v2473 = vand.u32 %v69, 4294901760
  %v2474 = vsub.f32 %v69, %v2473
  %v2475 = vand.u32 %v2474, 4294901760
  %2476 = vmatmul.f32.gmra.mxu0 %v2475
  %v2477 = vpop.f32.mrf.mxu0
  %v2478 = vadd.f32 %v2447, %v2477
  %2479 = vdwg.mxu0
  %2480 = vmatpush.msra.mxu0 0.0
  %2481 = vmatpush.msra.mxu0 0.0
  %2482 = vmatpush.msra.mxu0 0.0
  %2483 = vmatpush.msra.mxu0 0.0
  %2484 = vmatpush.msra.mxu0 0.0
  %2485 = vmatpush.msra.mxu0 0.0
  %2486 = vmatpush.msra.mxu0 0.0
  %2487 = vmatpush.msra.mxu0 0.0
  %2488 = vmatpush.msra.mxu0 0.0
  %2489 = vmatpush.msra.mxu0 0.0
  %2490 = vmatpush.msra.mxu0 0.0
  %2491 = vmatpush.msra.mxu0 0.0
  %2492 = vmatpush.msra.mxu0 0.0
  %2493 = vmatpush.msra.mxu0 0.0
  %v2494 = vand.u32 %v2347, 4294901760
  %v2495 = vsub.f32 %v2347, %v2494
  %v2496 = vand.u32 %v2495, 4294901760
  %2497 = vmatpush.msra.mxu0 %v2496
  %v2498 = vand.u32 %v2346, 4294901760
  %v2499 = vsub.f32 %v2346, %v2498
  %v2500 = vand.u32 %v2499, 4294901760
  %2501 = vmatpush.msra.mxu0 %v2500
  %v2502 = vand.u32 %v66, 4294901760
  %2503 = vmatmul.f32.gmra.mxu0 %v2502
  %v2504 = vpop.f32.mrf.mxu0
  %v2505 = vadd.f32 %v2472, %v2504
  %v2506 = vand.u32 %v69, 4294901760
  %2507 = vmatmul.f32.gmra.mxu0 %v2506
  %v2508 = vpop.f32.mrf.mxu0
  %v2509 = vadd.f32 %v2478, %v2508
  %2510 = vdwg.mxu0
  %2511 = vmatpush.msra.mxu0 0.0
  %2512 = vmatpush.msra.mxu0 0.0
  %2513 = vmatpush.msra.mxu0 0.0
  %2514 = vmatpush.msra.mxu0 0.0
  %2515 = vmatpush.msra.mxu0 0.0
  %2516 = vmatpush.msra.mxu0 0.0
  %2517 = vmatpush.msra.mxu0 0.0
  %2518 = vmatpush.msra.mxu0 0.0
  %2519 = vmatpush.msra.mxu0 0.0
  %2520 = vmatpush.msra.mxu0 0.0
  %2521 = vmatpush.msra.mxu0 0.0
  %2522 = vmatpush.msra.mxu0 0.0
  %2523 = vmatpush.msra.mxu0 0.0
  %2524 = vmatpush.msra.mxu0 0.0
  %v2525 = vand.u32 %v2347, 4294901760
  %2526 = vmatpush.msra.mxu0 %v2525
  %v2527 = vand.u32 %v2346, 4294901760
  %2528 = vmatpush.msra.mxu0 %v2527
  %v2529 = vand.u32 %v66, 4294901760
  %2530 = vmatmul.f32.gmra.mxu0 %v2529
  %v2531 = vpop.f32.mrf.mxu0
  %v2532 = vadd.f32 %v2505, %v2531
  %v2533 = vand.u32 %v69, 4294901760
  %2534 = vmatmul.f32.gmra.mxu0 %v2533
  %v2535 = vpop.f32.mrf.mxu0
  %v2536 = vadd.f32 %v2509, %v2535
  %2537 = vdwg.mxu0
  %2538 = vmatpush.msra.mxu0 0.0
  %2539 = vmatpush.msra.mxu0 0.0
  %2540 = vmatpush.msra.mxu0 0.0
  %2541 = vmatpush.msra.mxu0 0.0
  %2542 = vmatpush.msra.mxu0 0.0
  %2543 = vmatpush.msra.mxu0 0.0
  %2544 = vmatpush.msra.mxu0 0.0
  %2545 = vmatpush.msra.mxu0 0.0
  %2546 = vmatpush.msra.mxu0 0.0
  %2547 = vmatpush.msra.mxu0 0.0
  %2548 = vmatpush.msra.mxu0 0.0
  %2549 = vmatpush.msra.mxu0 0.0
  %2550 = vmatpush.msra.mxu0 0.0
  %2551 = vmatpush.msra.mxu0 0.0
  %v2552 = vand.u32 %v2536, 4294901760
  %2553 = vmatpush.msra.mxu0 %v2552
  %v2554 = vand.u32 %v2532, 4294901760
  %2555 = vmatpush.msra.mxu0 %v2554
  %v2556 = vand.u32 %v66, 4294901760
  %v2557 = vsub.f32 %v66, %v2556
  %v2558 = vand.u32 %v2557, 4294901760
  %v2559 = vsub.f32 %v2557, %v2558
  %v2560 = vand.u32 %v2559, 4294901760
  %2561 = vmatmul.f32.gmra.mxu0 %v2560
  %v2562 = vpop.f32.mrf.mxu0
  %v2563 = vadd.f32 0.0, %v2562
  %v2564 = vand.u32 %v69, 4294901760
  %v2565 = vsub.f32 %v69, %v2564
  %v2566 = vand.u32 %v2565, 4294901760
  %v2567 = vsub.f32 %v2565, %v2566
  %v2568 = vand.u32 %v2567, 4294901760
  %2569 = vmatmul.f32.gmra.mxu0 %v2568
  %v2570 = vpop.f32.mrf.mxu0
  %v2571 = vadd.f32 0.0, %v2570
  %2572 = vdwg.mxu0
  %2573 = vmatpush.msra.mxu0 0.0
  %2574 = vmatpush.msra.mxu0 0.0
  %2575 = vmatpush.msra.mxu0 0.0
  %2576 = vmatpush.msra.mxu0 0.0
  %2577 = vmatpush.msra.mxu0 0.0
  %2578 = vmatpush.msra.mxu0 0.0
  %2579 = vmatpush.msra.mxu0 0.0
  %2580 = vmatpush.msra.mxu0 0.0
  %2581 = vmatpush.msra.mxu0 0.0
  %2582 = vmatpush.msra.mxu0 0.0
  %2583 = vmatpush.msra.mxu0 0.0
  %2584 = vmatpush.msra.mxu0 0.0
  %2585 = vmatpush.msra.mxu0 0.0
  %2586 = vmatpush.msra.mxu0 0.0
  %v2587 = vand.u32 %v2536, 4294901760
  %v2588 = vsub.f32 %v2536, %v2587
  %v2589 = vand.u32 %v2588, 4294901760
  %v2590 = vsub.f32 %v2588, %v2589
  %v2591 = vand.u32 %v2590, 4294901760
  %2592 = vmatpush.msra.mxu0 %v2591
  %v2593 = vand.u32 %v2532, 4294901760
  %v2594 = vsub.f32 %v2532, %v2593
  %v2595 = vand.u32 %v2594, 4294901760
  %v2596 = vsub.f32 %v2594, %v2595
  %v2597 = vand.u32 %v2596, 4294901760
  %2598 = vmatpush.msra.mxu0 %v2597
  %v2599 = vand.u32 %v66, 4294901760
  %2600 = vmatmul.f32.gmra.mxu0 %v2599
  %v2601 = vpop.f32.mrf.mxu0
  %v2602 = vadd.f32 %v2563, %v2601
  %v2603 = vand.u32 %v69, 4294901760
  %2604 = vmatmul.f32.gmra.mxu0 %v2603
  %v2605 = vpop.f32.mrf.mxu0
  %v2606 = vadd.f32 %v2571, %v2605
  %2607 = vdwg.mxu0
  %2608 = vmatpush.msra.mxu0 0.0
  %2609 = vmatpush.msra.mxu0 0.0
  %2610 = vmatpush.msra.mxu0 0.0
  %2611 = vmatpush.msra.mxu0 0.0
  %2612 = vmatpush.msra.mxu0 0.0
  %2613 = vmatpush.msra.mxu0 0.0
  %2614 = vmatpush.msra.mxu0 0.0
  %2615 = vmatpush.msra.mxu0 0.0
  %2616 = vmatpush.msra.mxu0 0.0
  %2617 = vmatpush.msra.mxu0 0.0
  %2618 = vmatpush.msra.mxu0 0.0
  %2619 = vmatpush.msra.mxu0 0.0
  %2620 = vmatpush.msra.mxu0 0.0
  %2621 = vmatpush.msra.mxu0 0.0
  %v2622 = vand.u32 %v2536, 4294901760
  %v2623 = vsub.f32 %v2536, %v2622
  %2624 = vmatpush.msra.mxu0 %v2623
  %v2625 = vand.u32 %v2532, 4294901760
  %v2626 = vsub.f32 %v2532, %v2625
  %2627 = vmatpush.msra.mxu0 %v2626
  %v2628 = vand.u32 %v66, 4294901760
  %v2629 = vsub.f32 %v66, %v2628
  %2630 = vmatmul.f32.gmra.mxu0 %v2629
  %v2631 = vpop.f32.mrf.mxu0
  %v2632 = vadd.f32 %v2602, %v2631
  %v2633 = vand.u32 %v69, 4294901760
  %v2634 = vsub.f32 %v69, %v2633
  %2635 = vmatmul.f32.gmra.mxu0 %v2634
  %v2636 = vpop.f32.mrf.mxu0
  %v2637 = vadd.f32 %v2606, %v2636
  %2638 = vdwg.mxu0
  %2639 = vmatpush.msra.mxu0 0.0
  %2640 = vmatpush.msra.mxu0 0.0
  %2641 = vmatpush.msra.mxu0 0.0
  %2642 = vmatpush.msra.mxu0 0.0
  %2643 = vmatpush.msra.mxu0 0.0
  %2644 = vmatpush.msra.mxu0 0.0
  %2645 = vmatpush.msra.mxu0 0.0
  %2646 = vmatpush.msra.mxu0 0.0
  %2647 = vmatpush.msra.mxu0 0.0
  %2648 = vmatpush.msra.mxu0 0.0
  %2649 = vmatpush.msra.mxu0 0.0
  %2650 = vmatpush.msra.mxu0 0.0
  %2651 = vmatpush.msra.mxu0 0.0
  %2652 = vmatpush.msra.mxu0 0.0
  %v2653 = vand.u32 %v2536, 4294901760
  %2654 = vmatpush.msra.mxu0 %v2653
  %v2655 = vand.u32 %v2532, 4294901760
  %2656 = vmatpush.msra.mxu0 %v2655
  %v2657 = vand.u32 %v66, 4294901760
  %v2658 = vsub.f32 %v66, %v2657
  %v2659 = vand.u32 %v2658, 4294901760
  %2660 = vmatmul.f32.gmra.mxu0 %v2659
  %v2661 = vpop.f32.mrf.mxu0
  %v2662 = vadd.f32 %v2632, %v2661
  %v2663 = vand.u32 %v69, 4294901760
  %v2664 = vsub.f32 %v69, %v2663
  %v2665 = vand.u32 %v2664, 4294901760
  %2666 = vmatmul.f32.gmra.mxu0 %v2665
  %v2667 = vpop.f32.mrf.mxu0
  %v2668 = vadd.f32 %v2637, %v2667
  %2669 = vdwg.mxu0
  %2670 = vmatpush.msra.mxu0 0.0
  %2671 = vmatpush.msra.mxu0 0.0
  %2672 = vmatpush.msra.mxu0 0.0
  %2673 = vmatpush.msra.mxu0 0.0
  %2674 = vmatpush.msra.mxu0 0.0
  %2675 = vmatpush.msra.mxu0 0.0
  %2676 = vmatpush.msra.mxu0 0.0
  %2677 = vmatpush.msra.mxu0 0.0
  %2678 = vmatpush.msra.mxu0 0.0
  %2679 = vmatpush.msra.mxu0 0.0
  %2680 = vmatpush.msra.mxu0 0.0
  %2681 = vmatpush.msra.mxu0 0.0
  %2682 = vmatpush.msra.mxu0 0.0
  %2683 = vmatpush.msra.mxu0 0.0
  %v2684 = vand.u32 %v2536, 4294901760
  %v2685 = vsub.f32 %v2536, %v2684
  %v2686 = vand.u32 %v2685, 4294901760
  %2687 = vmatpush.msra.mxu0 %v2686
  %v2688 = vand.u32 %v2532, 4294901760
  %v2689 = vsub.f32 %v2532, %v2688
  %v2690 = vand.u32 %v2689, 4294901760
  %2691 = vmatpush.msra.mxu0 %v2690
  %v2692 = vand.u32 %v66, 4294901760
  %2693 = vmatmul.f32.gmra.mxu0 %v2692
  %v2694 = vpop.f32.mrf.mxu0
  %v2695 = vadd.f32 %v2662, %v2694
  %v2696 = vand.u32 %v69, 4294901760
  %2697 = vmatmul.f32.gmra.mxu0 %v2696
  %v2698 = vpop.f32.mrf.mxu0
  %v2699 = vadd.f32 %v2668, %v2698
  %2700 = vdwg.mxu0
  %2701 = vmatpush.msra.mxu0 0.0
  %2702 = vmatpush.msra.mxu0 0.0
  %2703 = vmatpush.msra.mxu0 0.0
  %2704 = vmatpush.msra.mxu0 0.0
  %2705 = vmatpush.msra.mxu0 0.0
  %2706 = vmatpush.msra.mxu0 0.0
  %2707 = vmatpush.msra.mxu0 0.0
  %2708 = vmatpush.msra.mxu0 0.0
  %2709 = vmatpush.msra.mxu0 0.0
  %2710 = vmatpush.msra.mxu0 0.0
  %2711 = vmatpush.msra.mxu0 0.0
  %2712 = vmatpush.msra.mxu0 0.0
  %2713 = vmatpush.msra.mxu0 0.0
  %2714 = vmatpush.msra.mxu0 0.0
  %v2715 = vand.u32 %v2536, 4294901760
  %2716 = vmatpush.msra.mxu0 %v2715
  %v2717 = vand.u32 %v2532, 4294901760
  %2718 = vmatpush.msra.mxu0 %v2717
  %v2719 = vand.u32 %v66, 4294901760
  %2720 = vmatmul.f32.gmra.mxu0 %v2719
  %v2721 = vpop.f32.mrf.mxu0
  %v2722 = vadd.f32 %v2695, %v2721
  %v2723 = vand.u32 %v69, 4294901760
  %2724 = vmatmul.f32.gmra.mxu0 %v2723
  %v2725 = vpop.f32.mrf.mxu0
  %v2726 = vadd.f32 %v2699, %v2725
  %2727 = vdwg.mxu0
  %v2728 = vmul.f32 %v2722, 2.0
  %v2729 = vmul.f32 %v2726, 2.0
  %v2730 = vsub.f32 %v2728, %v2346
  %v2731 = vsub.f32 %v2729, %v2347
  %2732 = vmatpush.msra.mxu0 0.0
  %2733 = vmatpush.msra.mxu0 0.0
  %2734 = vmatpush.msra.mxu0 0.0
  %2735 = vmatpush.msra.mxu0 0.0
  %2736 = vmatpush.msra.mxu0 0.0
  %2737 = vmatpush.msra.mxu0 0.0
  %2738 = vmatpush.msra.mxu0 0.0
  %2739 = vmatpush.msra.mxu0 0.0
  %2740 = vmatpush.msra.mxu0 0.0
  %2741 = vmatpush.msra.mxu0 0.0
  %2742 = vmatpush.msra.mxu0 0.0
  %2743 = vmatpush.msra.mxu0 0.0
  %2744 = vmatpush.msra.mxu0 0.0
  %2745 = vmatpush.msra.mxu0 0.0
  %v2746 = vand.u32 %v2536, 4294901760
  %2747 = vmatpush.msra.mxu0 %v2746
  %v2748 = vand.u32 %v2532, 4294901760
  %2749 = vmatpush.msra.mxu0 %v2748
  %v2750 = vand.u32 %v456, 4294901760
  %v2751 = vsub.f32 %v456, %v2750
  %v2752 = vand.u32 %v2751, 4294901760
  %v2753 = vsub.f32 %v2751, %v2752
  %v2754 = vand.u32 %v2753, 4294901760
  %2755 = vmatmul.f32.gmra.mxu0 %v2754
  %v2756 = vpop.f32.mrf.mxu0
  %v2757 = vadd.f32 0.0, %v2756
  %v2758 = vand.u32 %v459, 4294901760
  %v2759 = vsub.f32 %v459, %v2758
  %v2760 = vand.u32 %v2759, 4294901760
  %v2761 = vsub.f32 %v2759, %v2760
  %v2762 = vand.u32 %v2761, 4294901760
  %2763 = vmatmul.f32.gmra.mxu0 %v2762
  %v2764 = vpop.f32.mrf.mxu0
  %v2765 = vadd.f32 0.0, %v2764
  %2766 = vdwg.mxu0
  %2767 = vmatpush.msra.mxu0 0.0
  %2768 = vmatpush.msra.mxu0 0.0
  %2769 = vmatpush.msra.mxu0 0.0
  %2770 = vmatpush.msra.mxu0 0.0
  %2771 = vmatpush.msra.mxu0 0.0
  %2772 = vmatpush.msra.mxu0 0.0
  %2773 = vmatpush.msra.mxu0 0.0
  %2774 = vmatpush.msra.mxu0 0.0
  %2775 = vmatpush.msra.mxu0 0.0
  %2776 = vmatpush.msra.mxu0 0.0
  %2777 = vmatpush.msra.mxu0 0.0
  %2778 = vmatpush.msra.mxu0 0.0
  %2779 = vmatpush.msra.mxu0 0.0
  %2780 = vmatpush.msra.mxu0 0.0
  %v2781 = vand.u32 %v2536, 4294901760
  %v2782 = vsub.f32 %v2536, %v2781
  %v2783 = vand.u32 %v2782, 4294901760
  %v2784 = vsub.f32 %v2782, %v2783
  %v2785 = vand.u32 %v2784, 4294901760
  %2786 = vmatpush.msra.mxu0 %v2785
  %v2787 = vand.u32 %v2532, 4294901760
  %v2788 = vsub.f32 %v2532, %v2787
  %v2789 = vand.u32 %v2788, 4294901760
  %v2790 = vsub.f32 %v2788, %v2789
  %v2791 = vand.u32 %v2790, 4294901760
  %2792 = vmatpush.msra.mxu0 %v2791
  %v2793 = vand.u32 %v456, 4294901760
  %2794 = vmatmul.f32.gmra.mxu0 %v2793
  %v2795 = vpop.f32.mrf.mxu0
  %v2796 = vadd.f32 %v2757, %v2795
  %v2797 = vand.u32 %v459, 4294901760
  %2798 = vmatmul.f32.gmra.mxu0 %v2797
  %v2799 = vpop.f32.mrf.mxu0
  %v2800 = vadd.f32 %v2765, %v2799
  %2801 = vdwg.mxu0
  %2802 = vmatpush.msra.mxu0 0.0
  %2803 = vmatpush.msra.mxu0 0.0
  %2804 = vmatpush.msra.mxu0 0.0
  %2805 = vmatpush.msra.mxu0 0.0
  %2806 = vmatpush.msra.mxu0 0.0
  %2807 = vmatpush.msra.mxu0 0.0
  %2808 = vmatpush.msra.mxu0 0.0
  %2809 = vmatpush.msra.mxu0 0.0
  %2810 = vmatpush.msra.mxu0 0.0
  %2811 = vmatpush.msra.mxu0 0.0
  %2812 = vmatpush.msra.mxu0 0.0
  %2813 = vmatpush.msra.mxu0 0.0
  %2814 = vmatpush.msra.mxu0 0.0
  %2815 = vmatpush.msra.mxu0 0.0
  %v2816 = vand.u32 %v2536, 4294901760
  %v2817 = vsub.f32 %v2536, %v2816
  %2818 = vmatpush.msra.mxu0 %v2817
  %v2819 = vand.u32 %v2532, 4294901760
  %v2820 = vsub.f32 %v2532, %v2819
  %2821 = vmatpush.msra.mxu0 %v2820
  %v2822 = vand.u32 %v456, 4294901760
  %v2823 = vsub.f32 %v456, %v2822
  %2824 = vmatmul.f32.gmra.mxu0 %v2823
  %v2825 = vpop.f32.mrf.mxu0
  %v2826 = vadd.f32 %v2796, %v2825
  %v2827 = vand.u32 %v459, 4294901760
  %v2828 = vsub.f32 %v459, %v2827
  %2829 = vmatmul.f32.gmra.mxu0 %v2828
  %v2830 = vpop.f32.mrf.mxu0
  %v2831 = vadd.f32 %v2800, %v2830
  %2832 = vdwg.mxu0
  %2833 = vmatpush.msra.mxu0 0.0
  %2834 = vmatpush.msra.mxu0 0.0
  %2835 = vmatpush.msra.mxu0 0.0
  %2836 = vmatpush.msra.mxu0 0.0
  %2837 = vmatpush.msra.mxu0 0.0
  %2838 = vmatpush.msra.mxu0 0.0
  %2839 = vmatpush.msra.mxu0 0.0
  %2840 = vmatpush.msra.mxu0 0.0
  %2841 = vmatpush.msra.mxu0 0.0
  %2842 = vmatpush.msra.mxu0 0.0
  %2843 = vmatpush.msra.mxu0 0.0
  %2844 = vmatpush.msra.mxu0 0.0
  %2845 = vmatpush.msra.mxu0 0.0
  %2846 = vmatpush.msra.mxu0 0.0
  %v2847 = vand.u32 %v2536, 4294901760
  %2848 = vmatpush.msra.mxu0 %v2847
  %v2849 = vand.u32 %v2532, 4294901760
  %2850 = vmatpush.msra.mxu0 %v2849
  %v2851 = vand.u32 %v456, 4294901760
  %v2852 = vsub.f32 %v456, %v2851
  %v2853 = vand.u32 %v2852, 4294901760
  %2854 = vmatmul.f32.gmra.mxu0 %v2853
  %v2855 = vpop.f32.mrf.mxu0
  %v2856 = vadd.f32 %v2826, %v2855
  %v2857 = vand.u32 %v459, 4294901760
  %v2858 = vsub.f32 %v459, %v2857
  %v2859 = vand.u32 %v2858, 4294901760
  %2860 = vmatmul.f32.gmra.mxu0 %v2859
  %v2861 = vpop.f32.mrf.mxu0
  %v2862 = vadd.f32 %v2831, %v2861
  %2863 = vdwg.mxu0
  %2864 = vmatpush.msra.mxu0 0.0
  %2865 = vmatpush.msra.mxu0 0.0
  %2866 = vmatpush.msra.mxu0 0.0
  %2867 = vmatpush.msra.mxu0 0.0
  %2868 = vmatpush.msra.mxu0 0.0
  %2869 = vmatpush.msra.mxu0 0.0
  %2870 = vmatpush.msra.mxu0 0.0
  %2871 = vmatpush.msra.mxu0 0.0
  %2872 = vmatpush.msra.mxu0 0.0
  %2873 = vmatpush.msra.mxu0 0.0
  %2874 = vmatpush.msra.mxu0 0.0
  %2875 = vmatpush.msra.mxu0 0.0
  %2876 = vmatpush.msra.mxu0 0.0
  %2877 = vmatpush.msra.mxu0 0.0
  %v2878 = vand.u32 %v2536, 4294901760
  %v2879 = vsub.f32 %v2536, %v2878
  %v2880 = vand.u32 %v2879, 4294901760
  %2881 = vmatpush.msra.mxu0 %v2880
  %v2882 = vand.u32 %v2532, 4294901760
  %v2883 = vsub.f32 %v2532, %v2882
  %v2884 = vand.u32 %v2883, 4294901760
  %2885 = vmatpush.msra.mxu0 %v2884
  %v2886 = vand.u32 %v456, 4294901760
  %2887 = vmatmul.f32.gmra.mxu0 %v2886
  %v2888 = vpop.f32.mrf.mxu0
  %v2889 = vadd.f32 %v2856, %v2888
  %v2890 = vand.u32 %v459, 4294901760
  %2891 = vmatmul.f32.gmra.mxu0 %v2890
  %v2892 = vpop.f32.mrf.mxu0
  %v2893 = vadd.f32 %v2862, %v2892
  %2894 = vdwg.mxu0
  %2895 = vmatpush.msra.mxu0 0.0
  %2896 = vmatpush.msra.mxu0 0.0
  %2897 = vmatpush.msra.mxu0 0.0
  %2898 = vmatpush.msra.mxu0 0.0
  %2899 = vmatpush.msra.mxu0 0.0
  %2900 = vmatpush.msra.mxu0 0.0
  %2901 = vmatpush.msra.mxu0 0.0
  %2902 = vmatpush.msra.mxu0 0.0
  %2903 = vmatpush.msra.mxu0 0.0
  %2904 = vmatpush.msra.mxu0 0.0
  %2905 = vmatpush.msra.mxu0 0.0
  %2906 = vmatpush.msra.mxu0 0.0
  %2907 = vmatpush.msra.mxu0 0.0
  %2908 = vmatpush.msra.mxu0 0.0
  %v2909 = vand.u32 %v2536, 4294901760
  %2910 = vmatpush.msra.mxu0 %v2909
  %v2911 = vand.u32 %v2532, 4294901760
  %2912 = vmatpush.msra.mxu0 %v2911
  %v2913 = vand.u32 %v456, 4294901760
  %2914 = vmatmul.f32.gmra.mxu0 %v2913
  %v2915 = vpop.f32.mrf.mxu0
  %v2916 = vadd.f32 %v2889, %v2915
  %v2917 = vand.u32 %v459, 4294901760
  %2918 = vmatmul.f32.gmra.mxu0 %v2917
  %v2919 = vpop.f32.mrf.mxu0
  %v2920 = vadd.f32 %v2893, %v2919
  %2921 = vdwg.mxu0
  %2922 = vmatpush.msra.mxu0 0.0
  %2923 = vmatpush.msra.mxu0 0.0
  %2924 = vmatpush.msra.mxu0 0.0
  %2925 = vmatpush.msra.mxu0 0.0
  %2926 = vmatpush.msra.mxu0 0.0
  %2927 = vmatpush.msra.mxu0 0.0
  %2928 = vmatpush.msra.mxu0 0.0
  %2929 = vmatpush.msra.mxu0 0.0
  %2930 = vmatpush.msra.mxu0 0.0
  %2931 = vmatpush.msra.mxu0 0.0
  %2932 = vmatpush.msra.mxu0 0.0
  %2933 = vmatpush.msra.mxu0 0.0
  %2934 = vmatpush.msra.mxu0 0.0
  %2935 = vmatpush.msra.mxu0 0.0
  %v2936 = vand.u32 %v2920, 4294901760
  %2937 = vmatpush.msra.mxu0 %v2936
  %v2938 = vand.u32 %v2916, 4294901760
  %2939 = vmatpush.msra.mxu0 %v2938
  %v2940 = vand.u32 %v456, 4294901760
  %v2941 = vsub.f32 %v456, %v2940
  %v2942 = vand.u32 %v2941, 4294901760
  %v2943 = vsub.f32 %v2941, %v2942
  %v2944 = vand.u32 %v2943, 4294901760
  %2945 = vmatmul.f32.gmra.mxu0 %v2944
  %v2946 = vpop.f32.mrf.mxu0
  %v2947 = vadd.f32 0.0, %v2946
  %v2948 = vand.u32 %v459, 4294901760
  %v2949 = vsub.f32 %v459, %v2948
  %v2950 = vand.u32 %v2949, 4294901760
  %v2951 = vsub.f32 %v2949, %v2950
  %v2952 = vand.u32 %v2951, 4294901760
  %2953 = vmatmul.f32.gmra.mxu0 %v2952
  %v2954 = vpop.f32.mrf.mxu0
  %v2955 = vadd.f32 0.0, %v2954
  %2956 = vdwg.mxu0
  %2957 = vmatpush.msra.mxu0 0.0
  %2958 = vmatpush.msra.mxu0 0.0
  %2959 = vmatpush.msra.mxu0 0.0
  %2960 = vmatpush.msra.mxu0 0.0
  %2961 = vmatpush.msra.mxu0 0.0
  %2962 = vmatpush.msra.mxu0 0.0
  %2963 = vmatpush.msra.mxu0 0.0
  %2964 = vmatpush.msra.mxu0 0.0
  %2965 = vmatpush.msra.mxu0 0.0
  %2966 = vmatpush.msra.mxu0 0.0
  %2967 = vmatpush.msra.mxu0 0.0
  %2968 = vmatpush.msra.mxu0 0.0
  %2969 = vmatpush.msra.mxu0 0.0
  %2970 = vmatpush.msra.mxu0 0.0
  %v2971 = vand.u32 %v2920, 4294901760
  %v2972 = vsub.f32 %v2920, %v2971
  %v2973 = vand.u32 %v2972, 4294901760
  %v2974 = vsub.f32 %v2972, %v2973
  %v2975 = vand.u32 %v2974, 4294901760
  %2976 = vmatpush.msra.mxu0 %v2975
  %v2977 = vand.u32 %v2916, 4294901760
  %v2978 = vsub.f32 %v2916, %v2977
  %v2979 = vand.u32 %v2978, 4294901760
  %v2980 = vsub.f32 %v2978, %v2979
  %v2981 = vand.u32 %v2980, 4294901760
  %2982 = vmatpush.msra.mxu0 %v2981
  %v2983 = vand.u32 %v456, 4294901760
  %2984 = vmatmul.f32.gmra.mxu0 %v2983
  %v2985 = vpop.f32.mrf.mxu0
  %v2986 = vadd.f32 %v2947, %v2985
  %v2987 = vand.u32 %v459, 4294901760
  %2988 = vmatmul.f32.gmra.mxu0 %v2987
  %v2989 = vpop.f32.mrf.mxu0
  %v2990 = vadd.f32 %v2955, %v2989
  %2991 = vdwg.mxu0
  %2992 = vmatpush.msra.mxu0 0.0
  %2993 = vmatpush.msra.mxu0 0.0
  %2994 = vmatpush.msra.mxu0 0.0
  %2995 = vmatpush.msra.mxu0 0.0
  %2996 = vmatpush.msra.mxu0 0.0
  %2997 = vmatpush.msra.mxu0 0.0
  %2998 = vmatpush.msra.mxu0 0.0
  %2999 = vmatpush.msra.mxu0 0.0
  %3000 = vmatpush.msra.mxu0 0.0
  %3001 = vmatpush.msra.mxu0 0.0
  %3002 = vmatpush.msra.mxu0 0.0
  %3003 = vmatpush.msra.mxu0 0.0
  %3004 = vmatpush.msra.mxu0 0.0
  %3005 = vmatpush.msra.mxu0 0.0
  %v3006 = vand.u32 %v2920, 4294901760
  %v3007 = vsub.f32 %v2920, %v3006
  %3008 = vmatpush.msra.mxu0 %v3007
  %v3009 = vand.u32 %v2916, 4294901760
  %v3010 = vsub.f32 %v2916, %v3009
  %3011 = vmatpush.msra.mxu0 %v3010
  %v3012 = vand.u32 %v456, 4294901760
  %v3013 = vsub.f32 %v456, %v3012
  %3014 = vmatmul.f32.gmra.mxu0 %v3013
  %v3015 = vpop.f32.mrf.mxu0
  %v3016 = vadd.f32 %v2986, %v3015
  %v3017 = vand.u32 %v459, 4294901760
  %v3018 = vsub.f32 %v459, %v3017
  %3019 = vmatmul.f32.gmra.mxu0 %v3018
  %v3020 = vpop.f32.mrf.mxu0
  %v3021 = vadd.f32 %v2990, %v3020
  %3022 = vdwg.mxu0
  %3023 = vmatpush.msra.mxu0 0.0
  %3024 = vmatpush.msra.mxu0 0.0
  %3025 = vmatpush.msra.mxu0 0.0
  %3026 = vmatpush.msra.mxu0 0.0
  %3027 = vmatpush.msra.mxu0 0.0
  %3028 = vmatpush.msra.mxu0 0.0
  %3029 = vmatpush.msra.mxu0 0.0
  %3030 = vmatpush.msra.mxu0 0.0
  %3031 = vmatpush.msra.mxu0 0.0
  %3032 = vmatpush.msra.mxu0 0.0
  %3033 = vmatpush.msra.mxu0 0.0
  %3034 = vmatpush.msra.mxu0 0.0
  %3035 = vmatpush.msra.mxu0 0.0
  %3036 = vmatpush.msra.mxu0 0.0
  %v3037 = vand.u32 %v2920, 4294901760
  %3038 = vmatpush.msra.mxu0 %v3037
  %v3039 = vand.u32 %v2916, 4294901760
  %3040 = vmatpush.msra.mxu0 %v3039
  %v3041 = vand.u32 %v456, 4294901760
  %v3042 = vsub.f32 %v456, %v3041
  %v3043 = vand.u32 %v3042, 4294901760
  %3044 = vmatmul.f32.gmra.mxu0 %v3043
  %v3045 = vpop.f32.mrf.mxu0
  %v3046 = vadd.f32 %v3016, %v3045
  %v3047 = vand.u32 %v459, 4294901760
  %v3048 = vsub.f32 %v459, %v3047
  %v3049 = vand.u32 %v3048, 4294901760
  %3050 = vmatmul.f32.gmra.mxu0 %v3049
  %v3051 = vpop.f32.mrf.mxu0
  %v3052 = vadd.f32 %v3021, %v3051
  %3053 = vdwg.mxu0
  %3054 = vmatpush.msra.mxu0 0.0
  %3055 = vmatpush.msra.mxu0 0.0
  %3056 = vmatpush.msra.mxu0 0.0
  %3057 = vmatpush.msra.mxu0 0.0
  %3058 = vmatpush.msra.mxu0 0.0
  %3059 = vmatpush.msra.mxu0 0.0
  %3060 = vmatpush.msra.mxu0 0.0
  %3061 = vmatpush.msra.mxu0 0.0
  %3062 = vmatpush.msra.mxu0 0.0
  %3063 = vmatpush.msra.mxu0 0.0
  %3064 = vmatpush.msra.mxu0 0.0
  %3065 = vmatpush.msra.mxu0 0.0
  %3066 = vmatpush.msra.mxu0 0.0
  %3067 = vmatpush.msra.mxu0 0.0
  %v3068 = vand.u32 %v2920, 4294901760
  %v3069 = vsub.f32 %v2920, %v3068
  %v3070 = vand.u32 %v3069, 4294901760
  %3071 = vmatpush.msra.mxu0 %v3070
  %v3072 = vand.u32 %v2916, 4294901760
  %v3073 = vsub.f32 %v2916, %v3072
  %v3074 = vand.u32 %v3073, 4294901760
  %3075 = vmatpush.msra.mxu0 %v3074
  %v3076 = vand.u32 %v456, 4294901760
  %3077 = vmatmul.f32.gmra.mxu0 %v3076
  %v3078 = vpop.f32.mrf.mxu0
  %v3079 = vadd.f32 %v3046, %v3078
  %v3080 = vand.u32 %v459, 4294901760
  %3081 = vmatmul.f32.gmra.mxu0 %v3080
  %v3082 = vpop.f32.mrf.mxu0
  %v3083 = vadd.f32 %v3052, %v3082
  %3084 = vdwg.mxu0
  %3085 = vmatpush.msra.mxu0 0.0
  %3086 = vmatpush.msra.mxu0 0.0
  %3087 = vmatpush.msra.mxu0 0.0
  %3088 = vmatpush.msra.mxu0 0.0
  %3089 = vmatpush.msra.mxu0 0.0
  %3090 = vmatpush.msra.mxu0 0.0
  %3091 = vmatpush.msra.mxu0 0.0
  %3092 = vmatpush.msra.mxu0 0.0
  %3093 = vmatpush.msra.mxu0 0.0
  %3094 = vmatpush.msra.mxu0 0.0
  %3095 = vmatpush.msra.mxu0 0.0
  %3096 = vmatpush.msra.mxu0 0.0
  %3097 = vmatpush.msra.mxu0 0.0
  %3098 = vmatpush.msra.mxu0 0.0
  %v3099 = vand.u32 %v2920, 4294901760
  %3100 = vmatpush.msra.mxu0 %v3099
  %v3101 = vand.u32 %v2916, 4294901760
  %3102 = vmatpush.msra.mxu0 %v3101
  %v3103 = vand.u32 %v456, 4294901760
  %3104 = vmatmul.f32.gmra.mxu0 %v3103
  %v3105 = vpop.f32.mrf.mxu0
  %v3106 = vadd.f32 %v3079, %v3105
  %v3107 = vand.u32 %v459, 4294901760
  %3108 = vmatmul.f32.gmra.mxu0 %v3107
  %v3109 = vpop.f32.mrf.mxu0
  %v3110 = vadd.f32 %v3083, %v3109
  %3111 = vdwg.mxu0
  %v3112 = vmul.f32 %v3106, 2.0
  %v3113 = vmul.f32 %v3110, 2.0
  %v3114 = vsub.f32 %v3112, %v2532
  %v3115 = vsub.f32 %v3113, %v2536
  %3118 = vrot.lane.b32.xlu0 %v2532, 10
  %v3119 = vpop.permute.xlu0 %3118
  %3120 = vrot.lane.b32.xlu0 %v2536, 10
  %v3121 = vpop.permute.xlu0 %3120
  %3126 = vrot.lane.b32.xlu0 %v2730, 20
  %v3127 = vpop.permute.xlu0 %3126
  %3128 = vrot.lane.b32.xlu0 %v2731, 20
  %v3129 = vpop.permute.xlu0 %3128
  %3134 = vrot.lane.b32.xlu0 %v2916, 30
  %v3135 = vpop.permute.xlu0 %3134
  %3136 = vrot.lane.b32.xlu0 %v2920, 30
  %v3137 = vpop.permute.xlu0 %3136
  %3142 = vrot.lane.b32.xlu0 %v3114, 40
  %v3143 = vpop.permute.xlu0 %3142
  %3144 = vrot.lane.b32.xlu0 %v3115, 40
  %v3145 = vpop.permute.xlu0 %3144
  %v3148 = vsel %vm877, %v2346, %v3119
  %v3149 = vsel %vm877, %v2347, %v3121
  %v3150 = vsel %vm880, %v3148, %v3127
  %v3151 = vsel %vm880, %v3149, %v3129
  %v3152 = vsel %vm883, %v3150, %v3135
  %v3153 = vsel %vm883, %v3151, %v3137
  %v3154 = vsel %vm886, %v3152, %v3143
  %v3155 = vsel %vm886, %v3153, %v3145
  %v3157 = vsel %vm892, %v3154, 0
  %v3160 = vsel %vm892, %v3155, 0
  %3162 = vmatpush.msra.mxu0 0.0
  %3163 = vmatpush.msra.mxu0 0.0
  %3164 = vmatpush.msra.mxu0 0.0
  %3165 = vmatpush.msra.mxu0 0.0
  %3166 = vmatpush.msra.mxu0 0.0
  %3167 = vmatpush.msra.mxu0 0.0
  %3168 = vmatpush.msra.mxu0 0.0
  %3169 = vmatpush.msra.mxu0 0.0
  %3170 = vmatpush.msra.mxu0 0.0
  %v3171 = vand.u32 %v901, 4294901760
  %3172 = vmatpush.msra.mxu0 %v3171
  %v3173 = vand.u32 %v38, 4294901760
  %3174 = vmatpush.msra.mxu0 %v3173
  %v3175 = vand.u32 %v37, 4294901760
  %3176 = vmatpush.msra.mxu0 %v3175
  %v3177 = vand.u32 %v36, 4294901760
  %3178 = vmatpush.msra.mxu0 %v3177
  %v3179 = vand.u32 %v35, 4294901760
  %3180 = vmatpush.msra.mxu0 %v3179
  %v3181 = vand.u32 %v34, 4294901760
  %3182 = vmatpush.msra.mxu0 %v3181
  %v3183 = vand.u32 %v33, 4294901760
  %3184 = vmatpush.msra.mxu0 %v3183
  %v3185 = vand.u32 %v3157, 4294901760
  %v3186 = vsub.f32 %v3157, %v3185
  %v3187 = vand.u32 %v3186, 4294901760
  %v3188 = vsub.f32 %v3186, %v3187
  %v3189 = vand.u32 %v3188, 4294901760
  %3190 = vmatmul.f32.gmra.mxu0 %v3189
  %v3191 = vpop.f32.mrf.mxu0
  %v3192 = vadd.f32 %v890, %v3191
  %v3193 = vand.u32 %v3160, 4294901760
  %v3194 = vsub.f32 %v3160, %v3193
  %v3195 = vand.u32 %v3194, 4294901760
  %v3196 = vsub.f32 %v3194, %v3195
  %v3197 = vand.u32 %v3196, 4294901760
  %3198 = vmatmul.f32.gmra.mxu0 %v3197
  %v3199 = vpop.f32.mrf.mxu0
  %v3200 = vadd.f32 %v890, %v3199
  %3201 = vdwg.mxu0
  %3202 = vmatpush.msra.mxu0 0.0
  %3203 = vmatpush.msra.mxu0 0.0
  %3204 = vmatpush.msra.mxu0 0.0
  %3205 = vmatpush.msra.mxu0 0.0
  %3206 = vmatpush.msra.mxu0 0.0
  %3207 = vmatpush.msra.mxu0 0.0
  %3208 = vmatpush.msra.mxu0 0.0
  %3209 = vmatpush.msra.mxu0 0.0
  %3210 = vmatpush.msra.mxu0 0.0
  %v3211 = vand.u32 %v901, 4294901760
  %v3212 = vsub.f32 %v901, %v3211
  %v3213 = vand.u32 %v3212, 4294901760
  %v3214 = vsub.f32 %v3212, %v3213
  %v3215 = vand.u32 %v3214, 4294901760
  %3216 = vmatpush.msra.mxu0 %v3215
  %v3217 = vand.u32 %v38, 4294901760
  %v3218 = vsub.f32 %v38, %v3217
  %v3219 = vand.u32 %v3218, 4294901760
  %v3220 = vsub.f32 %v3218, %v3219
  %v3221 = vand.u32 %v3220, 4294901760
  %3222 = vmatpush.msra.mxu0 %v3221
  %v3223 = vand.u32 %v37, 4294901760
  %v3224 = vsub.f32 %v37, %v3223
  %v3225 = vand.u32 %v3224, 4294901760
  %v3226 = vsub.f32 %v3224, %v3225
  %v3227 = vand.u32 %v3226, 4294901760
  %3228 = vmatpush.msra.mxu0 %v3227
  %v3229 = vand.u32 %v36, 4294901760
  %v3230 = vsub.f32 %v36, %v3229
  %v3231 = vand.u32 %v3230, 4294901760
  %v3232 = vsub.f32 %v3230, %v3231
  %v3233 = vand.u32 %v3232, 4294901760
  %3234 = vmatpush.msra.mxu0 %v3233
  %v3235 = vand.u32 %v35, 4294901760
  %v3236 = vsub.f32 %v35, %v3235
  %v3237 = vand.u32 %v3236, 4294901760
  %v3238 = vsub.f32 %v3236, %v3237
  %v3239 = vand.u32 %v3238, 4294901760
  %3240 = vmatpush.msra.mxu0 %v3239
  %v3241 = vand.u32 %v34, 4294901760
  %v3242 = vsub.f32 %v34, %v3241
  %v3243 = vand.u32 %v3242, 4294901760
  %v3244 = vsub.f32 %v3242, %v3243
  %v3245 = vand.u32 %v3244, 4294901760
  %3246 = vmatpush.msra.mxu0 %v3245
  %v3247 = vand.u32 %v33, 4294901760
  %v3248 = vsub.f32 %v33, %v3247
  %v3249 = vand.u32 %v3248, 4294901760
  %v3250 = vsub.f32 %v3248, %v3249
  %v3251 = vand.u32 %v3250, 4294901760
  %3252 = vmatpush.msra.mxu0 %v3251
  %v3253 = vand.u32 %v3157, 4294901760
  %3254 = vmatmul.f32.gmra.mxu0 %v3253
  %v3255 = vpop.f32.mrf.mxu0
  %v3256 = vadd.f32 %v3192, %v3255
  %v3257 = vand.u32 %v3160, 4294901760
  %3258 = vmatmul.f32.gmra.mxu0 %v3257
  %v3259 = vpop.f32.mrf.mxu0
  %v3260 = vadd.f32 %v3200, %v3259
  %3261 = vdwg.mxu0
  %3262 = vmatpush.msra.mxu0 0.0
  %3263 = vmatpush.msra.mxu0 0.0
  %3264 = vmatpush.msra.mxu0 0.0
  %3265 = vmatpush.msra.mxu0 0.0
  %3266 = vmatpush.msra.mxu0 0.0
  %3267 = vmatpush.msra.mxu0 0.0
  %3268 = vmatpush.msra.mxu0 0.0
  %3269 = vmatpush.msra.mxu0 0.0
  %3270 = vmatpush.msra.mxu0 0.0
  %v3271 = vand.u32 %v901, 4294901760
  %v3272 = vsub.f32 %v901, %v3271
  %3273 = vmatpush.msra.mxu0 %v3272
  %v3274 = vand.u32 %v38, 4294901760
  %v3275 = vsub.f32 %v38, %v3274
  %3276 = vmatpush.msra.mxu0 %v3275
  %v3277 = vand.u32 %v37, 4294901760
  %v3278 = vsub.f32 %v37, %v3277
  %3279 = vmatpush.msra.mxu0 %v3278
  %v3280 = vand.u32 %v36, 4294901760
  %v3281 = vsub.f32 %v36, %v3280
  %3282 = vmatpush.msra.mxu0 %v3281
  %v3283 = vand.u32 %v35, 4294901760
  %v3284 = vsub.f32 %v35, %v3283
  %3285 = vmatpush.msra.mxu0 %v3284
  %v3286 = vand.u32 %v34, 4294901760
  %v3287 = vsub.f32 %v34, %v3286
  %3288 = vmatpush.msra.mxu0 %v3287
  %v3289 = vand.u32 %v33, 4294901760
  %v3290 = vsub.f32 %v33, %v3289
  %3291 = vmatpush.msra.mxu0 %v3290
  %v3292 = vand.u32 %v3157, 4294901760
  %v3293 = vsub.f32 %v3157, %v3292
  %3294 = vmatmul.f32.gmra.mxu0 %v3293
  %v3295 = vpop.f32.mrf.mxu0
  %v3296 = vadd.f32 %v3256, %v3295
  %v3297 = vand.u32 %v3160, 4294901760
  %v3298 = vsub.f32 %v3160, %v3297
  %3299 = vmatmul.f32.gmra.mxu0 %v3298
  %v3300 = vpop.f32.mrf.mxu0
  %v3301 = vadd.f32 %v3260, %v3300
  %3302 = vdwg.mxu0
  %3303 = vmatpush.msra.mxu0 0.0
  %3304 = vmatpush.msra.mxu0 0.0
  %3305 = vmatpush.msra.mxu0 0.0
  %3306 = vmatpush.msra.mxu0 0.0
  %3307 = vmatpush.msra.mxu0 0.0
  %3308 = vmatpush.msra.mxu0 0.0
  %3309 = vmatpush.msra.mxu0 0.0
  %3310 = vmatpush.msra.mxu0 0.0
  %3311 = vmatpush.msra.mxu0 0.0
  %v3312 = vand.u32 %v901, 4294901760
  %3313 = vmatpush.msra.mxu0 %v3312
  %v3314 = vand.u32 %v38, 4294901760
  %3315 = vmatpush.msra.mxu0 %v3314
  %v3316 = vand.u32 %v37, 4294901760
  %3317 = vmatpush.msra.mxu0 %v3316
  %v3318 = vand.u32 %v36, 4294901760
  %3319 = vmatpush.msra.mxu0 %v3318
  %v3320 = vand.u32 %v35, 4294901760
  %3321 = vmatpush.msra.mxu0 %v3320
  %v3322 = vand.u32 %v34, 4294901760
  %3323 = vmatpush.msra.mxu0 %v3322
  %v3324 = vand.u32 %v33, 4294901760
  %3325 = vmatpush.msra.mxu0 %v3324
  %v3326 = vand.u32 %v3157, 4294901760
  %v3327 = vsub.f32 %v3157, %v3326
  %v3328 = vand.u32 %v3327, 4294901760
  %3329 = vmatmul.f32.gmra.mxu0 %v3328
  %v3330 = vpop.f32.mrf.mxu0
  %v3331 = vadd.f32 %v3296, %v3330
  %v3332 = vand.u32 %v3160, 4294901760
  %v3333 = vsub.f32 %v3160, %v3332
  %v3334 = vand.u32 %v3333, 4294901760
  %3335 = vmatmul.f32.gmra.mxu0 %v3334
  %v3336 = vpop.f32.mrf.mxu0
  %v3337 = vadd.f32 %v3301, %v3336
  %3338 = vdwg.mxu0
  %3339 = vmatpush.msra.mxu0 0.0
  %3340 = vmatpush.msra.mxu0 0.0
  %3341 = vmatpush.msra.mxu0 0.0
  %3342 = vmatpush.msra.mxu0 0.0
  %3343 = vmatpush.msra.mxu0 0.0
  %3344 = vmatpush.msra.mxu0 0.0
  %3345 = vmatpush.msra.mxu0 0.0
  %3346 = vmatpush.msra.mxu0 0.0
  %3347 = vmatpush.msra.mxu0 0.0
  %v3348 = vand.u32 %v901, 4294901760
  %v3349 = vsub.f32 %v901, %v3348
  %v3350 = vand.u32 %v3349, 4294901760
  %3351 = vmatpush.msra.mxu0 %v3350
  %v3352 = vand.u32 %v38, 4294901760
  %v3353 = vsub.f32 %v38, %v3352
  %v3354 = vand.u32 %v3353, 4294901760
  %3355 = vmatpush.msra.mxu0 %v3354
  %v3356 = vand.u32 %v37, 4294901760
  %v3357 = vsub.f32 %v37, %v3356
  %v3358 = vand.u32 %v3357, 4294901760
  %3359 = vmatpush.msra.mxu0 %v3358
  %v3360 = vand.u32 %v36, 4294901760
  %v3361 = vsub.f32 %v36, %v3360
  %v3362 = vand.u32 %v3361, 4294901760
  %3363 = vmatpush.msra.mxu0 %v3362
  %v3364 = vand.u32 %v35, 4294901760
  %v3365 = vsub.f32 %v35, %v3364
  %v3366 = vand.u32 %v3365, 4294901760
  %3367 = vmatpush.msra.mxu0 %v3366
  %v3368 = vand.u32 %v34, 4294901760
  %v3369 = vsub.f32 %v34, %v3368
  %v3370 = vand.u32 %v3369, 4294901760
  %3371 = vmatpush.msra.mxu0 %v3370
  %v3372 = vand.u32 %v33, 4294901760
  %v3373 = vsub.f32 %v33, %v3372
  %v3374 = vand.u32 %v3373, 4294901760
  %3375 = vmatpush.msra.mxu0 %v3374
  %v3376 = vand.u32 %v3157, 4294901760
  %3377 = vmatmul.f32.gmra.mxu0 %v3376
  %v3378 = vpop.f32.mrf.mxu0
  %v3379 = vadd.f32 %v3331, %v3378
  %v3380 = vand.u32 %v3160, 4294901760
  %3381 = vmatmul.f32.gmra.mxu0 %v3380
  %v3382 = vpop.f32.mrf.mxu0
  %v3383 = vadd.f32 %v3337, %v3382
  %3384 = vdwg.mxu0
  %3385 = vmatpush.msra.mxu0 0.0
  %3386 = vmatpush.msra.mxu0 0.0
  %3387 = vmatpush.msra.mxu0 0.0
  %3388 = vmatpush.msra.mxu0 0.0
  %3389 = vmatpush.msra.mxu0 0.0
  %3390 = vmatpush.msra.mxu0 0.0
  %3391 = vmatpush.msra.mxu0 0.0
  %3392 = vmatpush.msra.mxu0 0.0
  %3393 = vmatpush.msra.mxu0 0.0
  %v3394 = vand.u32 %v901, 4294901760
  %3395 = vmatpush.msra.mxu0 %v3394
  %v3396 = vand.u32 %v38, 4294901760
  %3397 = vmatpush.msra.mxu0 %v3396
  %v3398 = vand.u32 %v37, 4294901760
  %3399 = vmatpush.msra.mxu0 %v3398
  %v3400 = vand.u32 %v36, 4294901760
  %3401 = vmatpush.msra.mxu0 %v3400
  %v3402 = vand.u32 %v35, 4294901760
  %3403 = vmatpush.msra.mxu0 %v3402
  %v3404 = vand.u32 %v34, 4294901760
  %3405 = vmatpush.msra.mxu0 %v3404
  %v3406 = vand.u32 %v33, 4294901760
  %3407 = vmatpush.msra.mxu0 %v3406
  %v3408 = vand.u32 %v3157, 4294901760
  %3409 = vmatmul.f32.gmra.mxu0 %v3408
  %v3410 = vpop.f32.mrf.mxu0
  %v3411 = vadd.f32 %v3379, %v3410
  %v3412 = vand.u32 %v3160, 4294901760
  %3413 = vmatmul.f32.gmra.mxu0 %v3412
  %v3414 = vpop.f32.mrf.mxu0
  %v3415 = vadd.f32 %v3383, %v3414
  %3416 = vdwg.mxu0
  %v3417 = vxor.u32 %v3411, 2147483648
  %v3418 = vxor.u32 %v3415, 2147483648
  %v3419 = vmul.f32 %v3417, 1.442695
  %v3420 = vpow.pop %v3419
  %v3421 = vmul.f32 %v3418, 1.442695
  %v3422 = vpow.pop %v3421
  %v3423 = vadd.f32 %v3420, 1.0
  %v3424 = vadd.f32 %v3422, 1.0
  %v3425 = vrcp.pop %v3423
  %v3426 = vmul.f32 %v3423, %v3425
  %v3427 = vsub.f32 1.0, %v3426
  %v3428 = vmul.f32 %v3425, %v3427
  %v3429 = vadd.f32 %v3425, %v3428
  %vm3430 = vweird.f32 %v3423
  %vm3431 = vweird.f32 %v3425
  %vm3432 = vmor %vm3430, %vm3431
  %v3433 = vsel %vm3432, %v3425, %v3429
  %v3434 = vand.u32 2147483647, %v3423
  %vm3435 = vcmp.eq.f32.partialorder %v3434, 8.507059e+37
  %v3436 = vand.u32 %v3423, 2147483648
  %v3437 = vor.u32 1.1754944e-38, %v3436
  %v3438 = vsel %vm3435, %v3437, %v3433
  %v3439 = vmul.f32 1.0, %v3438
  %v3440 = vrcp.pop %v3424
  %v3441 = vmul.f32 %v3424, %v3440
  %v3442 = vsub.f32 1.0, %v3441
  %v3443 = vmul.f32 %v3440, %v3442
  %v3444 = vadd.f32 %v3440, %v3443
  %vm3445 = vweird.f32 %v3424
  %vm3446 = vweird.f32 %v3440
  %vm3447 = vmor %vm3445, %vm3446
  %v3448 = vsel %vm3447, %v3440, %v3444
  %v3449 = vand.u32 2147483647, %v3424
  %vm3450 = vcmp.eq.f32.partialorder %v3449, 8.507059e+37
  %v3451 = vand.u32 %v3424, 2147483648
  %v3452 = vor.u32 1.1754944e-38, %v3451
  %v3453 = vsel %vm3450, %v3452, %v3448
  %v3454 = vmul.f32 1.0, %v3453
  %v3455 = vmul.f32 %v3439, %v2336
  %v3456 = vmul.f32 %v3454, %v2337
  %3457 = vmatpush.msra.mxu0 0.0
  %3458 = vmatpush.msra.mxu0 0.0
  %3459 = vmatpush.msra.mxu0 0.0
  %3460 = vmatpush.msra.mxu0 0.0
  %3461 = vmatpush.msra.mxu0 0.0
  %3462 = vmatpush.msra.mxu0 0.0
  %3463 = vmatpush.msra.mxu0 0.0
  %3464 = vmatpush.msra.mxu0 0.0
  %3465 = vmatpush.msra.mxu0 0.0
  %3466 = vmatpush.msra.mxu0 0.0
  %3467 = vmatpush.msra.mxu0 0.0
  %3468 = vmatpush.msra.mxu0 0.0
  %3469 = vmatpush.msra.mxu0 0.0
  %3470 = vmatpush.msra.mxu0 0.0
  %v3471 = vand.u32 %v3456, 4294901760
  %3472 = vmatpush.msra.mxu0 %v3471
  %v3473 = vand.u32 %v3455, 4294901760
  %3474 = vmatpush.msra.mxu0 %v3473
  %v3475 = vand.u32 %v66, 4294901760
  %v3476 = vsub.f32 %v66, %v3475
  %v3477 = vand.u32 %v3476, 4294901760
  %v3478 = vsub.f32 %v3476, %v3477
  %v3479 = vand.u32 %v3478, 4294901760
  %3480 = vmatmul.f32.gmra.mxu0 %v3479
  %v3481 = vpop.f32.mrf.mxu0
  %v3482 = vadd.f32 0.0, %v3481
  %v3483 = vand.u32 %v69, 4294901760
  %v3484 = vsub.f32 %v69, %v3483
  %v3485 = vand.u32 %v3484, 4294901760
  %v3486 = vsub.f32 %v3484, %v3485
  %v3487 = vand.u32 %v3486, 4294901760
  %3488 = vmatmul.f32.gmra.mxu0 %v3487
  %v3489 = vpop.f32.mrf.mxu0
  %v3490 = vadd.f32 0.0, %v3489
  %3491 = vdwg.mxu0
  %3492 = vmatpush.msra.mxu0 0.0
  %3493 = vmatpush.msra.mxu0 0.0
  %3494 = vmatpush.msra.mxu0 0.0
  %3495 = vmatpush.msra.mxu0 0.0
  %3496 = vmatpush.msra.mxu0 0.0
  %3497 = vmatpush.msra.mxu0 0.0
  %3498 = vmatpush.msra.mxu0 0.0
  %3499 = vmatpush.msra.mxu0 0.0
  %3500 = vmatpush.msra.mxu0 0.0
  %3501 = vmatpush.msra.mxu0 0.0
  %3502 = vmatpush.msra.mxu0 0.0
  %3503 = vmatpush.msra.mxu0 0.0
  %3504 = vmatpush.msra.mxu0 0.0
  %3505 = vmatpush.msra.mxu0 0.0
  %v3506 = vand.u32 %v3456, 4294901760
  %v3507 = vsub.f32 %v3456, %v3506
  %v3508 = vand.u32 %v3507, 4294901760
  %v3509 = vsub.f32 %v3507, %v3508
  %v3510 = vand.u32 %v3509, 4294901760
  %3511 = vmatpush.msra.mxu0 %v3510
  %v3512 = vand.u32 %v3455, 4294901760
  %v3513 = vsub.f32 %v3455, %v3512
  %v3514 = vand.u32 %v3513, 4294901760
  %v3515 = vsub.f32 %v3513, %v3514
  %v3516 = vand.u32 %v3515, 4294901760
  %3517 = vmatpush.msra.mxu0 %v3516
  %v3518 = vand.u32 %v66, 4294901760
  %3519 = vmatmul.f32.gmra.mxu0 %v3518
  %v3520 = vpop.f32.mrf.mxu0
  %v3521 = vadd.f32 %v3482, %v3520
  %v3522 = vand.u32 %v69, 4294901760
  %3523 = vmatmul.f32.gmra.mxu0 %v3522
  %v3524 = vpop.f32.mrf.mxu0
  %v3525 = vadd.f32 %v3490, %v3524
  %3526 = vdwg.mxu0
  %3527 = vmatpush.msra.mxu0 0.0
  %3528 = vmatpush.msra.mxu0 0.0
  %3529 = vmatpush.msra.mxu0 0.0
  %3530 = vmatpush.msra.mxu0 0.0
  %3531 = vmatpush.msra.mxu0 0.0
  %3532 = vmatpush.msra.mxu0 0.0
  %3533 = vmatpush.msra.mxu0 0.0
  %3534 = vmatpush.msra.mxu0 0.0
  %3535 = vmatpush.msra.mxu0 0.0
  %3536 = vmatpush.msra.mxu0 0.0
  %3537 = vmatpush.msra.mxu0 0.0
  %3538 = vmatpush.msra.mxu0 0.0
  %3539 = vmatpush.msra.mxu0 0.0
  %3540 = vmatpush.msra.mxu0 0.0
  %v3541 = vand.u32 %v3456, 4294901760
  %v3542 = vsub.f32 %v3456, %v3541
  %3543 = vmatpush.msra.mxu0 %v3542
  %v3544 = vand.u32 %v3455, 4294901760
  %v3545 = vsub.f32 %v3455, %v3544
  %3546 = vmatpush.msra.mxu0 %v3545
  %v3547 = vand.u32 %v66, 4294901760
  %v3548 = vsub.f32 %v66, %v3547
  %3549 = vmatmul.f32.gmra.mxu0 %v3548
  %v3550 = vpop.f32.mrf.mxu0
  %v3551 = vadd.f32 %v3521, %v3550
  %v3552 = vand.u32 %v69, 4294901760
  %v3553 = vsub.f32 %v69, %v3552
  %3554 = vmatmul.f32.gmra.mxu0 %v3553
  %v3555 = vpop.f32.mrf.mxu0
  %v3556 = vadd.f32 %v3525, %v3555
  %3557 = vdwg.mxu0
  %3558 = vmatpush.msra.mxu0 0.0
  %3559 = vmatpush.msra.mxu0 0.0
  %3560 = vmatpush.msra.mxu0 0.0
  %3561 = vmatpush.msra.mxu0 0.0
  %3562 = vmatpush.msra.mxu0 0.0
  %3563 = vmatpush.msra.mxu0 0.0
  %3564 = vmatpush.msra.mxu0 0.0
  %3565 = vmatpush.msra.mxu0 0.0
  %3566 = vmatpush.msra.mxu0 0.0
  %3567 = vmatpush.msra.mxu0 0.0
  %3568 = vmatpush.msra.mxu0 0.0
  %3569 = vmatpush.msra.mxu0 0.0
  %3570 = vmatpush.msra.mxu0 0.0
  %3571 = vmatpush.msra.mxu0 0.0
  %v3572 = vand.u32 %v3456, 4294901760
  %3573 = vmatpush.msra.mxu0 %v3572
  %v3574 = vand.u32 %v3455, 4294901760
  %3575 = vmatpush.msra.mxu0 %v3574
  %v3576 = vand.u32 %v66, 4294901760
  %v3577 = vsub.f32 %v66, %v3576
  %v3578 = vand.u32 %v3577, 4294901760
  %3579 = vmatmul.f32.gmra.mxu0 %v3578
  %v3580 = vpop.f32.mrf.mxu0
  %v3581 = vadd.f32 %v3551, %v3580
  %v3582 = vand.u32 %v69, 4294901760
  %v3583 = vsub.f32 %v69, %v3582
  %v3584 = vand.u32 %v3583, 4294901760
  %3585 = vmatmul.f32.gmra.mxu0 %v3584
  %v3586 = vpop.f32.mrf.mxu0
  %v3587 = vadd.f32 %v3556, %v3586
  %3588 = vdwg.mxu0
  %3589 = vmatpush.msra.mxu0 0.0
  %3590 = vmatpush.msra.mxu0 0.0
  %3591 = vmatpush.msra.mxu0 0.0
  %3592 = vmatpush.msra.mxu0 0.0
  %3593 = vmatpush.msra.mxu0 0.0
  %3594 = vmatpush.msra.mxu0 0.0
  %3595 = vmatpush.msra.mxu0 0.0
  %3596 = vmatpush.msra.mxu0 0.0
  %3597 = vmatpush.msra.mxu0 0.0
  %3598 = vmatpush.msra.mxu0 0.0
  %3599 = vmatpush.msra.mxu0 0.0
  %3600 = vmatpush.msra.mxu0 0.0
  %3601 = vmatpush.msra.mxu0 0.0
  %3602 = vmatpush.msra.mxu0 0.0
  %v3603 = vand.u32 %v3456, 4294901760
  %v3604 = vsub.f32 %v3456, %v3603
  %v3605 = vand.u32 %v3604, 4294901760
  %3606 = vmatpush.msra.mxu0 %v3605
  %v3607 = vand.u32 %v3455, 4294901760
  %v3608 = vsub.f32 %v3455, %v3607
  %v3609 = vand.u32 %v3608, 4294901760
  %3610 = vmatpush.msra.mxu0 %v3609
  %v3611 = vand.u32 %v66, 4294901760
  %3612 = vmatmul.f32.gmra.mxu0 %v3611
  %v3613 = vpop.f32.mrf.mxu0
  %v3614 = vadd.f32 %v3581, %v3613
  %v3615 = vand.u32 %v69, 4294901760
  %3616 = vmatmul.f32.gmra.mxu0 %v3615
  %v3617 = vpop.f32.mrf.mxu0
  %v3618 = vadd.f32 %v3587, %v3617
  %3619 = vdwg.mxu0
  %3620 = vmatpush.msra.mxu0 0.0
  %3621 = vmatpush.msra.mxu0 0.0
  %3622 = vmatpush.msra.mxu0 0.0
  %3623 = vmatpush.msra.mxu0 0.0
  %3624 = vmatpush.msra.mxu0 0.0
  %3625 = vmatpush.msra.mxu0 0.0
  %3626 = vmatpush.msra.mxu0 0.0
  %3627 = vmatpush.msra.mxu0 0.0
  %3628 = vmatpush.msra.mxu0 0.0
  %3629 = vmatpush.msra.mxu0 0.0
  %3630 = vmatpush.msra.mxu0 0.0
  %3631 = vmatpush.msra.mxu0 0.0
  %3632 = vmatpush.msra.mxu0 0.0
  %3633 = vmatpush.msra.mxu0 0.0
  %v3634 = vand.u32 %v3456, 4294901760
  %3635 = vmatpush.msra.mxu0 %v3634
  %v3636 = vand.u32 %v3455, 4294901760
  %3637 = vmatpush.msra.mxu0 %v3636
  %v3638 = vand.u32 %v66, 4294901760
  %3639 = vmatmul.f32.gmra.mxu0 %v3638
  %v3640 = vpop.f32.mrf.mxu0
  %v3641 = vadd.f32 %v3614, %v3640
  %v3642 = vand.u32 %v69, 4294901760
  %3643 = vmatmul.f32.gmra.mxu0 %v3642
  %v3644 = vpop.f32.mrf.mxu0
  %v3645 = vadd.f32 %v3618, %v3644
  %3646 = vdwg.mxu0
  %3647 = vmatpush.msra.mxu0 0.0
  %3648 = vmatpush.msra.mxu0 0.0
  %3649 = vmatpush.msra.mxu0 0.0
  %3650 = vmatpush.msra.mxu0 0.0
  %3651 = vmatpush.msra.mxu0 0.0
  %3652 = vmatpush.msra.mxu0 0.0
  %3653 = vmatpush.msra.mxu0 0.0
  %3654 = vmatpush.msra.mxu0 0.0
  %3655 = vmatpush.msra.mxu0 0.0
  %3656 = vmatpush.msra.mxu0 0.0
  %3657 = vmatpush.msra.mxu0 0.0
  %3658 = vmatpush.msra.mxu0 0.0
  %3659 = vmatpush.msra.mxu0 0.0
  %3660 = vmatpush.msra.mxu0 0.0
  %v3661 = vand.u32 %v3645, 4294901760
  %3662 = vmatpush.msra.mxu0 %v3661
  %v3663 = vand.u32 %v3641, 4294901760
  %3664 = vmatpush.msra.mxu0 %v3663
  %v3665 = vand.u32 %v66, 4294901760
  %v3666 = vsub.f32 %v66, %v3665
  %v3667 = vand.u32 %v3666, 4294901760
  %v3668 = vsub.f32 %v3666, %v3667
  %v3669 = vand.u32 %v3668, 4294901760
  %3670 = vmatmul.f32.gmra.mxu0 %v3669
  %v3671 = vpop.f32.mrf.mxu0
  %v3672 = vadd.f32 0.0, %v3671
  %v3673 = vand.u32 %v69, 4294901760
  %v3674 = vsub.f32 %v69, %v3673
  %v3675 = vand.u32 %v3674, 4294901760
  %v3676 = vsub.f32 %v3674, %v3675
  %v3677 = vand.u32 %v3676, 4294901760
  %3678 = vmatmul.f32.gmra.mxu0 %v3677
  %v3679 = vpop.f32.mrf.mxu0
  %v3680 = vadd.f32 0.0, %v3679
  %3681 = vdwg.mxu0
  %3682 = vmatpush.msra.mxu0 0.0
  %3683 = vmatpush.msra.mxu0 0.0
  %3684 = vmatpush.msra.mxu0 0.0
  %3685 = vmatpush.msra.mxu0 0.0
  %3686 = vmatpush.msra.mxu0 0.0
  %3687 = vmatpush.msra.mxu0 0.0
  %3688 = vmatpush.msra.mxu0 0.0
  %3689 = vmatpush.msra.mxu0 0.0
  %3690 = vmatpush.msra.mxu0 0.0
  %3691 = vmatpush.msra.mxu0 0.0
  %3692 = vmatpush.msra.mxu0 0.0
  %3693 = vmatpush.msra.mxu0 0.0
  %3694 = vmatpush.msra.mxu0 0.0
  %3695 = vmatpush.msra.mxu0 0.0
  %v3696 = vand.u32 %v3645, 4294901760
  %v3697 = vsub.f32 %v3645, %v3696
  %v3698 = vand.u32 %v3697, 4294901760
  %v3699 = vsub.f32 %v3697, %v3698
  %v3700 = vand.u32 %v3699, 4294901760
  %3701 = vmatpush.msra.mxu0 %v3700
  %v3702 = vand.u32 %v3641, 4294901760
  %v3703 = vsub.f32 %v3641, %v3702
  %v3704 = vand.u32 %v3703, 4294901760
  %v3705 = vsub.f32 %v3703, %v3704
  %v3706 = vand.u32 %v3705, 4294901760
  %3707 = vmatpush.msra.mxu0 %v3706
  %v3708 = vand.u32 %v66, 4294901760
  %3709 = vmatmul.f32.gmra.mxu0 %v3708
  %v3710 = vpop.f32.mrf.mxu0
  %v3711 = vadd.f32 %v3672, %v3710
  %v3712 = vand.u32 %v69, 4294901760
  %3713 = vmatmul.f32.gmra.mxu0 %v3712
  %v3714 = vpop.f32.mrf.mxu0
  %v3715 = vadd.f32 %v3680, %v3714
  %3716 = vdwg.mxu0
  %3717 = vmatpush.msra.mxu0 0.0
  %3718 = vmatpush.msra.mxu0 0.0
  %3719 = vmatpush.msra.mxu0 0.0
  %3720 = vmatpush.msra.mxu0 0.0
  %3721 = vmatpush.msra.mxu0 0.0
  %3722 = vmatpush.msra.mxu0 0.0
  %3723 = vmatpush.msra.mxu0 0.0
  %3724 = vmatpush.msra.mxu0 0.0
  %3725 = vmatpush.msra.mxu0 0.0
  %3726 = vmatpush.msra.mxu0 0.0
  %3727 = vmatpush.msra.mxu0 0.0
  %3728 = vmatpush.msra.mxu0 0.0
  %3729 = vmatpush.msra.mxu0 0.0
  %3730 = vmatpush.msra.mxu0 0.0
  %v3731 = vand.u32 %v3645, 4294901760
  %v3732 = vsub.f32 %v3645, %v3731
  %3733 = vmatpush.msra.mxu0 %v3732
  %v3734 = vand.u32 %v3641, 4294901760
  %v3735 = vsub.f32 %v3641, %v3734
  %3736 = vmatpush.msra.mxu0 %v3735
  %v3737 = vand.u32 %v66, 4294901760
  %v3738 = vsub.f32 %v66, %v3737
  %3739 = vmatmul.f32.gmra.mxu0 %v3738
  %v3740 = vpop.f32.mrf.mxu0
  %v3741 = vadd.f32 %v3711, %v3740
  %v3742 = vand.u32 %v69, 4294901760
  %v3743 = vsub.f32 %v69, %v3742
  %3744 = vmatmul.f32.gmra.mxu0 %v3743
  %v3745 = vpop.f32.mrf.mxu0
  %v3746 = vadd.f32 %v3715, %v3745
  %3747 = vdwg.mxu0
  %3748 = vmatpush.msra.mxu0 0.0
  %3749 = vmatpush.msra.mxu0 0.0
  %3750 = vmatpush.msra.mxu0 0.0
  %3751 = vmatpush.msra.mxu0 0.0
  %3752 = vmatpush.msra.mxu0 0.0
  %3753 = vmatpush.msra.mxu0 0.0
  %3754 = vmatpush.msra.mxu0 0.0
  %3755 = vmatpush.msra.mxu0 0.0
  %3756 = vmatpush.msra.mxu0 0.0
  %3757 = vmatpush.msra.mxu0 0.0
  %3758 = vmatpush.msra.mxu0 0.0
  %3759 = vmatpush.msra.mxu0 0.0
  %3760 = vmatpush.msra.mxu0 0.0
  %3761 = vmatpush.msra.mxu0 0.0
  %v3762 = vand.u32 %v3645, 4294901760
  %3763 = vmatpush.msra.mxu0 %v3762
  %v3764 = vand.u32 %v3641, 4294901760
  %3765 = vmatpush.msra.mxu0 %v3764
  %v3766 = vand.u32 %v66, 4294901760
  %v3767 = vsub.f32 %v66, %v3766
  %v3768 = vand.u32 %v3767, 4294901760
  %3769 = vmatmul.f32.gmra.mxu0 %v3768
  %v3770 = vpop.f32.mrf.mxu0
  %v3771 = vadd.f32 %v3741, %v3770
  %v3772 = vand.u32 %v69, 4294901760
  %v3773 = vsub.f32 %v69, %v3772
  %v3774 = vand.u32 %v3773, 4294901760
  %3775 = vmatmul.f32.gmra.mxu0 %v3774
  %v3776 = vpop.f32.mrf.mxu0
  %v3777 = vadd.f32 %v3746, %v3776
  %3778 = vdwg.mxu0
  %3779 = vmatpush.msra.mxu0 0.0
  %3780 = vmatpush.msra.mxu0 0.0
  %3781 = vmatpush.msra.mxu0 0.0
  %3782 = vmatpush.msra.mxu0 0.0
  %3783 = vmatpush.msra.mxu0 0.0
  %3784 = vmatpush.msra.mxu0 0.0
  %3785 = vmatpush.msra.mxu0 0.0
  %3786 = vmatpush.msra.mxu0 0.0
  %3787 = vmatpush.msra.mxu0 0.0
  %3788 = vmatpush.msra.mxu0 0.0
  %3789 = vmatpush.msra.mxu0 0.0
  %3790 = vmatpush.msra.mxu0 0.0
  %3791 = vmatpush.msra.mxu0 0.0
  %3792 = vmatpush.msra.mxu0 0.0
  %v3793 = vand.u32 %v3645, 4294901760
  %v3794 = vsub.f32 %v3645, %v3793
  %v3795 = vand.u32 %v3794, 4294901760
  %3796 = vmatpush.msra.mxu0 %v3795
  %v3797 = vand.u32 %v3641, 4294901760
  %v3798 = vsub.f32 %v3641, %v3797
  %v3799 = vand.u32 %v3798, 4294901760
  %3800 = vmatpush.msra.mxu0 %v3799
  %v3801 = vand.u32 %v66, 4294901760
  %3802 = vmatmul.f32.gmra.mxu0 %v3801
  %v3803 = vpop.f32.mrf.mxu0
  %v3804 = vadd.f32 %v3771, %v3803
  %v3805 = vand.u32 %v69, 4294901760
  %3806 = vmatmul.f32.gmra.mxu0 %v3805
  %v3807 = vpop.f32.mrf.mxu0
  %v3808 = vadd.f32 %v3777, %v3807
  %3809 = vdwg.mxu0
  %3810 = vmatpush.msra.mxu0 0.0
  %3811 = vmatpush.msra.mxu0 0.0
  %3812 = vmatpush.msra.mxu0 0.0
  %3813 = vmatpush.msra.mxu0 0.0
  %3814 = vmatpush.msra.mxu0 0.0
  %3815 = vmatpush.msra.mxu0 0.0
  %3816 = vmatpush.msra.mxu0 0.0
  %3817 = vmatpush.msra.mxu0 0.0
  %3818 = vmatpush.msra.mxu0 0.0
  %3819 = vmatpush.msra.mxu0 0.0
  %3820 = vmatpush.msra.mxu0 0.0
  %3821 = vmatpush.msra.mxu0 0.0
  %3822 = vmatpush.msra.mxu0 0.0
  %3823 = vmatpush.msra.mxu0 0.0
  %v3824 = vand.u32 %v3645, 4294901760
  %3825 = vmatpush.msra.mxu0 %v3824
  %v3826 = vand.u32 %v3641, 4294901760
  %3827 = vmatpush.msra.mxu0 %v3826
  %v3828 = vand.u32 %v66, 4294901760
  %3829 = vmatmul.f32.gmra.mxu0 %v3828
  %v3830 = vpop.f32.mrf.mxu0
  %v3831 = vadd.f32 %v3804, %v3830
  %v3832 = vand.u32 %v69, 4294901760
  %3833 = vmatmul.f32.gmra.mxu0 %v3832
  %v3834 = vpop.f32.mrf.mxu0
  %v3835 = vadd.f32 %v3808, %v3834
  %3836 = vdwg.mxu0
  %v3837 = vmul.f32 %v3831, 2.0
  %v3838 = vmul.f32 %v3835, 2.0
  %v3839 = vsub.f32 %v3837, %v3455
  %v3840 = vsub.f32 %v3838, %v3456
  %3841 = vmatpush.msra.mxu0 0.0
  %3842 = vmatpush.msra.mxu0 0.0
  %3843 = vmatpush.msra.mxu0 0.0
  %3844 = vmatpush.msra.mxu0 0.0
  %3845 = vmatpush.msra.mxu0 0.0
  %3846 = vmatpush.msra.mxu0 0.0
  %3847 = vmatpush.msra.mxu0 0.0
  %3848 = vmatpush.msra.mxu0 0.0
  %3849 = vmatpush.msra.mxu0 0.0
  %3850 = vmatpush.msra.mxu0 0.0
  %3851 = vmatpush.msra.mxu0 0.0
  %3852 = vmatpush.msra.mxu0 0.0
  %3853 = vmatpush.msra.mxu0 0.0
  %3854 = vmatpush.msra.mxu0 0.0
  %v3855 = vand.u32 %v3645, 4294901760
  %3856 = vmatpush.msra.mxu0 %v3855
  %v3857 = vand.u32 %v3641, 4294901760
  %3858 = vmatpush.msra.mxu0 %v3857
  %v3859 = vand.u32 %v456, 4294901760
  %v3860 = vsub.f32 %v456, %v3859
  %v3861 = vand.u32 %v3860, 4294901760
  %v3862 = vsub.f32 %v3860, %v3861
  %v3863 = vand.u32 %v3862, 4294901760
  %3864 = vmatmul.f32.gmra.mxu0 %v3863
  %v3865 = vpop.f32.mrf.mxu0
  %v3866 = vadd.f32 0.0, %v3865
  %v3867 = vand.u32 %v459, 4294901760
  %v3868 = vsub.f32 %v459, %v3867
  %v3869 = vand.u32 %v3868, 4294901760
  %v3870 = vsub.f32 %v3868, %v3869
  %v3871 = vand.u32 %v3870, 4294901760
  %3872 = vmatmul.f32.gmra.mxu0 %v3871
  %v3873 = vpop.f32.mrf.mxu0
  %v3874 = vadd.f32 0.0, %v3873
  %3875 = vdwg.mxu0
  %3876 = vmatpush.msra.mxu0 0.0
  %3877 = vmatpush.msra.mxu0 0.0
  %3878 = vmatpush.msra.mxu0 0.0
  %3879 = vmatpush.msra.mxu0 0.0
  %3880 = vmatpush.msra.mxu0 0.0
  %3881 = vmatpush.msra.mxu0 0.0
  %3882 = vmatpush.msra.mxu0 0.0
  %3883 = vmatpush.msra.mxu0 0.0
  %3884 = vmatpush.msra.mxu0 0.0
  %3885 = vmatpush.msra.mxu0 0.0
  %3886 = vmatpush.msra.mxu0 0.0
  %3887 = vmatpush.msra.mxu0 0.0
  %3888 = vmatpush.msra.mxu0 0.0
  %3889 = vmatpush.msra.mxu0 0.0
  %v3890 = vand.u32 %v3645, 4294901760
  %v3891 = vsub.f32 %v3645, %v3890
  %v3892 = vand.u32 %v3891, 4294901760
  %v3893 = vsub.f32 %v3891, %v3892
  %v3894 = vand.u32 %v3893, 4294901760
  %3895 = vmatpush.msra.mxu0 %v3894
  %v3896 = vand.u32 %v3641, 4294901760
  %v3897 = vsub.f32 %v3641, %v3896
  %v3898 = vand.u32 %v3897, 4294901760
  %v3899 = vsub.f32 %v3897, %v3898
  %v3900 = vand.u32 %v3899, 4294901760
  %3901 = vmatpush.msra.mxu0 %v3900
  %v3902 = vand.u32 %v456, 4294901760
  %3903 = vmatmul.f32.gmra.mxu0 %v3902
  %v3904 = vpop.f32.mrf.mxu0
  %v3905 = vadd.f32 %v3866, %v3904
  %v3906 = vand.u32 %v459, 4294901760
  %3907 = vmatmul.f32.gmra.mxu0 %v3906
  %v3908 = vpop.f32.mrf.mxu0
  %v3909 = vadd.f32 %v3874, %v3908
  %3910 = vdwg.mxu0
  %3911 = vmatpush.msra.mxu0 0.0
  %3912 = vmatpush.msra.mxu0 0.0
  %3913 = vmatpush.msra.mxu0 0.0
  %3914 = vmatpush.msra.mxu0 0.0
  %3915 = vmatpush.msra.mxu0 0.0
  %3916 = vmatpush.msra.mxu0 0.0
  %3917 = vmatpush.msra.mxu0 0.0
  %3918 = vmatpush.msra.mxu0 0.0
  %3919 = vmatpush.msra.mxu0 0.0
  %3920 = vmatpush.msra.mxu0 0.0
  %3921 = vmatpush.msra.mxu0 0.0
  %3922 = vmatpush.msra.mxu0 0.0
  %3923 = vmatpush.msra.mxu0 0.0
  %3924 = vmatpush.msra.mxu0 0.0
  %v3925 = vand.u32 %v3645, 4294901760
  %v3926 = vsub.f32 %v3645, %v3925
  %3927 = vmatpush.msra.mxu0 %v3926
  %v3928 = vand.u32 %v3641, 4294901760
  %v3929 = vsub.f32 %v3641, %v3928
  %3930 = vmatpush.msra.mxu0 %v3929
  %v3931 = vand.u32 %v456, 4294901760
  %v3932 = vsub.f32 %v456, %v3931
  %3933 = vmatmul.f32.gmra.mxu0 %v3932
  %v3934 = vpop.f32.mrf.mxu0
  %v3935 = vadd.f32 %v3905, %v3934
  %v3936 = vand.u32 %v459, 4294901760
  %v3937 = vsub.f32 %v459, %v3936
  %3938 = vmatmul.f32.gmra.mxu0 %v3937
  %v3939 = vpop.f32.mrf.mxu0
  %v3940 = vadd.f32 %v3909, %v3939
  %3941 = vdwg.mxu0
  %3942 = vmatpush.msra.mxu0 0.0
  %3943 = vmatpush.msra.mxu0 0.0
  %3944 = vmatpush.msra.mxu0 0.0
  %3945 = vmatpush.msra.mxu0 0.0
  %3946 = vmatpush.msra.mxu0 0.0
  %3947 = vmatpush.msra.mxu0 0.0
  %3948 = vmatpush.msra.mxu0 0.0
  %3949 = vmatpush.msra.mxu0 0.0
  %3950 = vmatpush.msra.mxu0 0.0
  %3951 = vmatpush.msra.mxu0 0.0
  %3952 = vmatpush.msra.mxu0 0.0
  %3953 = vmatpush.msra.mxu0 0.0
  %3954 = vmatpush.msra.mxu0 0.0
  %3955 = vmatpush.msra.mxu0 0.0
  %v3956 = vand.u32 %v3645, 4294901760
  %3957 = vmatpush.msra.mxu0 %v3956
  %v3958 = vand.u32 %v3641, 4294901760
  %3959 = vmatpush.msra.mxu0 %v3958
  %v3960 = vand.u32 %v456, 4294901760
  %v3961 = vsub.f32 %v456, %v3960
  %v3962 = vand.u32 %v3961, 4294901760
  %3963 = vmatmul.f32.gmra.mxu0 %v3962
  %v3964 = vpop.f32.mrf.mxu0
  %v3965 = vadd.f32 %v3935, %v3964
  %v3966 = vand.u32 %v459, 4294901760
  %v3967 = vsub.f32 %v459, %v3966
  %v3968 = vand.u32 %v3967, 4294901760
  %3969 = vmatmul.f32.gmra.mxu0 %v3968
  %v3970 = vpop.f32.mrf.mxu0
  %v3971 = vadd.f32 %v3940, %v3970
  %3972 = vdwg.mxu0
  %3973 = vmatpush.msra.mxu0 0.0
  %3974 = vmatpush.msra.mxu0 0.0
  %3975 = vmatpush.msra.mxu0 0.0
  %3976 = vmatpush.msra.mxu0 0.0
  %3977 = vmatpush.msra.mxu0 0.0
  %3978 = vmatpush.msra.mxu0 0.0
  %3979 = vmatpush.msra.mxu0 0.0
  %3980 = vmatpush.msra.mxu0 0.0
  %3981 = vmatpush.msra.mxu0 0.0
  %3982 = vmatpush.msra.mxu0 0.0
  %3983 = vmatpush.msra.mxu0 0.0
  %3984 = vmatpush.msra.mxu0 0.0
  %3985 = vmatpush.msra.mxu0 0.0
  %3986 = vmatpush.msra.mxu0 0.0
  %v3987 = vand.u32 %v3645, 4294901760
  %v3988 = vsub.f32 %v3645, %v3987
  %v3989 = vand.u32 %v3988, 4294901760
  %3990 = vmatpush.msra.mxu0 %v3989
  %v3991 = vand.u32 %v3641, 4294901760
  %v3992 = vsub.f32 %v3641, %v3991
  %v3993 = vand.u32 %v3992, 4294901760
  %3994 = vmatpush.msra.mxu0 %v3993
  %v3995 = vand.u32 %v456, 4294901760
  %3996 = vmatmul.f32.gmra.mxu0 %v3995
  %v3997 = vpop.f32.mrf.mxu0
  %v3998 = vadd.f32 %v3965, %v3997
  %v3999 = vand.u32 %v459, 4294901760
  %4000 = vmatmul.f32.gmra.mxu0 %v3999
  %v4001 = vpop.f32.mrf.mxu0
  %v4002 = vadd.f32 %v3971, %v4001
  %4003 = vdwg.mxu0
  %4004 = vmatpush.msra.mxu0 0.0
  %4005 = vmatpush.msra.mxu0 0.0
  %4006 = vmatpush.msra.mxu0 0.0
  %4007 = vmatpush.msra.mxu0 0.0
  %4008 = vmatpush.msra.mxu0 0.0
  %4009 = vmatpush.msra.mxu0 0.0
  %4010 = vmatpush.msra.mxu0 0.0
  %4011 = vmatpush.msra.mxu0 0.0
  %4012 = vmatpush.msra.mxu0 0.0
  %4013 = vmatpush.msra.mxu0 0.0
  %4014 = vmatpush.msra.mxu0 0.0
  %4015 = vmatpush.msra.mxu0 0.0
  %4016 = vmatpush.msra.mxu0 0.0
  %4017 = vmatpush.msra.mxu0 0.0
  %v4018 = vand.u32 %v3645, 4294901760
  %4019 = vmatpush.msra.mxu0 %v4018
  %v4020 = vand.u32 %v3641, 4294901760
  %4021 = vmatpush.msra.mxu0 %v4020
  %v4022 = vand.u32 %v456, 4294901760
  %4023 = vmatmul.f32.gmra.mxu0 %v4022
  %v4024 = vpop.f32.mrf.mxu0
  %v4025 = vadd.f32 %v3998, %v4024
  %v4026 = vand.u32 %v459, 4294901760
  %4027 = vmatmul.f32.gmra.mxu0 %v4026
  %v4028 = vpop.f32.mrf.mxu0
  %v4029 = vadd.f32 %v4002, %v4028
  %4030 = vdwg.mxu0
  %4031 = vmatpush.msra.mxu0 0.0
  %4032 = vmatpush.msra.mxu0 0.0
  %4033 = vmatpush.msra.mxu0 0.0
  %4034 = vmatpush.msra.mxu0 0.0
  %4035 = vmatpush.msra.mxu0 0.0
  %4036 = vmatpush.msra.mxu0 0.0
  %4037 = vmatpush.msra.mxu0 0.0
  %4038 = vmatpush.msra.mxu0 0.0
  %4039 = vmatpush.msra.mxu0 0.0
  %4040 = vmatpush.msra.mxu0 0.0
  %4041 = vmatpush.msra.mxu0 0.0
  %4042 = vmatpush.msra.mxu0 0.0
  %4043 = vmatpush.msra.mxu0 0.0
  %4044 = vmatpush.msra.mxu0 0.0
  %v4045 = vand.u32 %v4029, 4294901760
  %4046 = vmatpush.msra.mxu0 %v4045
  %v4047 = vand.u32 %v4025, 4294901760
  %4048 = vmatpush.msra.mxu0 %v4047
  %v4049 = vand.u32 %v456, 4294901760
  %v4050 = vsub.f32 %v456, %v4049
  %v4051 = vand.u32 %v4050, 4294901760
  %v4052 = vsub.f32 %v4050, %v4051
  %v4053 = vand.u32 %v4052, 4294901760
  %4054 = vmatmul.f32.gmra.mxu0 %v4053
  %v4055 = vpop.f32.mrf.mxu0
  %v4056 = vadd.f32 0.0, %v4055
  %v4057 = vand.u32 %v459, 4294901760
  %v4058 = vsub.f32 %v459, %v4057
  %v4059 = vand.u32 %v4058, 4294901760
  %v4060 = vsub.f32 %v4058, %v4059
  %v4061 = vand.u32 %v4060, 4294901760
  %4062 = vmatmul.f32.gmra.mxu0 %v4061
  %v4063 = vpop.f32.mrf.mxu0
  %v4064 = vadd.f32 0.0, %v4063
  %4065 = vdwg.mxu0
  %4066 = vmatpush.msra.mxu0 0.0
  %4067 = vmatpush.msra.mxu0 0.0
  %4068 = vmatpush.msra.mxu0 0.0
  %4069 = vmatpush.msra.mxu0 0.0
  %4070 = vmatpush.msra.mxu0 0.0
  %4071 = vmatpush.msra.mxu0 0.0
  %4072 = vmatpush.msra.mxu0 0.0
  %4073 = vmatpush.msra.mxu0 0.0
  %4074 = vmatpush.msra.mxu0 0.0
  %4075 = vmatpush.msra.mxu0 0.0
  %4076 = vmatpush.msra.mxu0 0.0
  %4077 = vmatpush.msra.mxu0 0.0
  %4078 = vmatpush.msra.mxu0 0.0
  %4079 = vmatpush.msra.mxu0 0.0
  %v4080 = vand.u32 %v4029, 4294901760
  %v4081 = vsub.f32 %v4029, %v4080
  %v4082 = vand.u32 %v4081, 4294901760
  %v4083 = vsub.f32 %v4081, %v4082
  %v4084 = vand.u32 %v4083, 4294901760
  %4085 = vmatpush.msra.mxu0 %v4084
  %v4086 = vand.u32 %v4025, 4294901760
  %v4087 = vsub.f32 %v4025, %v4086
  %v4088 = vand.u32 %v4087, 4294901760
  %v4089 = vsub.f32 %v4087, %v4088
  %v4090 = vand.u32 %v4089, 4294901760
  %4091 = vmatpush.msra.mxu0 %v4090
  %v4092 = vand.u32 %v456, 4294901760
  %4093 = vmatmul.f32.gmra.mxu0 %v4092
  %v4094 = vpop.f32.mrf.mxu0
  %v4095 = vadd.f32 %v4056, %v4094
  %v4096 = vand.u32 %v459, 4294901760
  %4097 = vmatmul.f32.gmra.mxu0 %v4096
  %v4098 = vpop.f32.mrf.mxu0
  %v4099 = vadd.f32 %v4064, %v4098
  %4100 = vdwg.mxu0
  %4101 = vmatpush.msra.mxu0 0.0
  %4102 = vmatpush.msra.mxu0 0.0
  %4103 = vmatpush.msra.mxu0 0.0
  %4104 = vmatpush.msra.mxu0 0.0
  %4105 = vmatpush.msra.mxu0 0.0
  %4106 = vmatpush.msra.mxu0 0.0
  %4107 = vmatpush.msra.mxu0 0.0
  %4108 = vmatpush.msra.mxu0 0.0
  %4109 = vmatpush.msra.mxu0 0.0
  %4110 = vmatpush.msra.mxu0 0.0
  %4111 = vmatpush.msra.mxu0 0.0
  %4112 = vmatpush.msra.mxu0 0.0
  %4113 = vmatpush.msra.mxu0 0.0
  %4114 = vmatpush.msra.mxu0 0.0
  %v4115 = vand.u32 %v4029, 4294901760
  %v4116 = vsub.f32 %v4029, %v4115
  %4117 = vmatpush.msra.mxu0 %v4116
  %v4118 = vand.u32 %v4025, 4294901760
  %v4119 = vsub.f32 %v4025, %v4118
  %4120 = vmatpush.msra.mxu0 %v4119
  %v4121 = vand.u32 %v456, 4294901760
  %v4122 = vsub.f32 %v456, %v4121
  %4123 = vmatmul.f32.gmra.mxu0 %v4122
  %v4124 = vpop.f32.mrf.mxu0
  %v4125 = vadd.f32 %v4095, %v4124
  %v4126 = vand.u32 %v459, 4294901760
  %v4127 = vsub.f32 %v459, %v4126
  %4128 = vmatmul.f32.gmra.mxu0 %v4127
  %v4129 = vpop.f32.mrf.mxu0
  %v4130 = vadd.f32 %v4099, %v4129
  %4131 = vdwg.mxu0
  %4132 = vmatpush.msra.mxu0 0.0
  %4133 = vmatpush.msra.mxu0 0.0
  %4134 = vmatpush.msra.mxu0 0.0
  %4135 = vmatpush.msra.mxu0 0.0
  %4136 = vmatpush.msra.mxu0 0.0
  %4137 = vmatpush.msra.mxu0 0.0
  %4138 = vmatpush.msra.mxu0 0.0
  %4139 = vmatpush.msra.mxu0 0.0
  %4140 = vmatpush.msra.mxu0 0.0
  %4141 = vmatpush.msra.mxu0 0.0
  %4142 = vmatpush.msra.mxu0 0.0
  %4143 = vmatpush.msra.mxu0 0.0
  %4144 = vmatpush.msra.mxu0 0.0
  %4145 = vmatpush.msra.mxu0 0.0
  %v4146 = vand.u32 %v4029, 4294901760
  %4147 = vmatpush.msra.mxu0 %v4146
  %v4148 = vand.u32 %v4025, 4294901760
  %4149 = vmatpush.msra.mxu0 %v4148
  %v4150 = vand.u32 %v456, 4294901760
  %v4151 = vsub.f32 %v456, %v4150
  %v4152 = vand.u32 %v4151, 4294901760
  %4153 = vmatmul.f32.gmra.mxu0 %v4152
  %v4154 = vpop.f32.mrf.mxu0
  %v4155 = vadd.f32 %v4125, %v4154
  %v4156 = vand.u32 %v459, 4294901760
  %v4157 = vsub.f32 %v459, %v4156
  %v4158 = vand.u32 %v4157, 4294901760
  %4159 = vmatmul.f32.gmra.mxu0 %v4158
  %v4160 = vpop.f32.mrf.mxu0
  %v4161 = vadd.f32 %v4130, %v4160
  %4162 = vdwg.mxu0
  %4163 = vmatpush.msra.mxu0 0.0
  %4164 = vmatpush.msra.mxu0 0.0
  %4165 = vmatpush.msra.mxu0 0.0
  %4166 = vmatpush.msra.mxu0 0.0
  %4167 = vmatpush.msra.mxu0 0.0
  %4168 = vmatpush.msra.mxu0 0.0
  %4169 = vmatpush.msra.mxu0 0.0
  %4170 = vmatpush.msra.mxu0 0.0
  %4171 = vmatpush.msra.mxu0 0.0
  %4172 = vmatpush.msra.mxu0 0.0
  %4173 = vmatpush.msra.mxu0 0.0
  %4174 = vmatpush.msra.mxu0 0.0
  %4175 = vmatpush.msra.mxu0 0.0
  %4176 = vmatpush.msra.mxu0 0.0
  %v4177 = vand.u32 %v4029, 4294901760
  %v4178 = vsub.f32 %v4029, %v4177
  %v4179 = vand.u32 %v4178, 4294901760
  %4180 = vmatpush.msra.mxu0 %v4179
  %v4181 = vand.u32 %v4025, 4294901760
  %v4182 = vsub.f32 %v4025, %v4181
  %v4183 = vand.u32 %v4182, 4294901760
  %4184 = vmatpush.msra.mxu0 %v4183
  %v4185 = vand.u32 %v456, 4294901760
  %4186 = vmatmul.f32.gmra.mxu0 %v4185
  %v4187 = vpop.f32.mrf.mxu0
  %v4188 = vadd.f32 %v4155, %v4187
  %v4189 = vand.u32 %v459, 4294901760
  %4190 = vmatmul.f32.gmra.mxu0 %v4189
  %v4191 = vpop.f32.mrf.mxu0
  %v4192 = vadd.f32 %v4161, %v4191
  %4193 = vdwg.mxu0
  %4194 = vmatpush.msra.mxu0 0.0
  %4195 = vmatpush.msra.mxu0 0.0
  %4196 = vmatpush.msra.mxu0 0.0
  %4197 = vmatpush.msra.mxu0 0.0
  %4198 = vmatpush.msra.mxu0 0.0
  %4199 = vmatpush.msra.mxu0 0.0
  %4200 = vmatpush.msra.mxu0 0.0
  %4201 = vmatpush.msra.mxu0 0.0
  %4202 = vmatpush.msra.mxu0 0.0
  %4203 = vmatpush.msra.mxu0 0.0
  %4204 = vmatpush.msra.mxu0 0.0
  %4205 = vmatpush.msra.mxu0 0.0
  %4206 = vmatpush.msra.mxu0 0.0
  %4207 = vmatpush.msra.mxu0 0.0
  %v4208 = vand.u32 %v4029, 4294901760
  %4209 = vmatpush.msra.mxu0 %v4208
  %v4210 = vand.u32 %v4025, 4294901760
  %4211 = vmatpush.msra.mxu0 %v4210
  %v4212 = vand.u32 %v456, 4294901760
  %4213 = vmatmul.f32.gmra.mxu0 %v4212
  %v4214 = vpop.f32.mrf.mxu0
  %v4215 = vadd.f32 %v4188, %v4214
  %v4216 = vand.u32 %v459, 4294901760
  %4217 = vmatmul.f32.gmra.mxu0 %v4216
  %v4218 = vpop.f32.mrf.mxu0
  %v4219 = vadd.f32 %v4192, %v4218
  %4220 = vdwg.mxu0
  %v4221 = vmul.f32 %v4215, 2.0
  %v4222 = vmul.f32 %v4219, 2.0
  %v4223 = vsub.f32 %v4221, %v3641
  %v4224 = vsub.f32 %v4222, %v3645
  %4227 = vrot.lane.b32.xlu0 %v3455, 2
  %v4228 = vpop.permute.xlu0 %4227
  %4229 = vrot.lane.b32.xlu0 %v3456, 2
  %v4230 = vpop.permute.xlu0 %4229
  %4235 = vrot.lane.b32.xlu0 %v3641, 12
  %v4236 = vpop.permute.xlu0 %4235
  %4237 = vrot.lane.b32.xlu0 %v3645, 12
  %v4238 = vpop.permute.xlu0 %4237
  %4243 = vrot.lane.b32.xlu0 %v3839, 22
  %v4244 = vpop.permute.xlu0 %4243
  %4245 = vrot.lane.b32.xlu0 %v3840, 22
  %v4246 = vpop.permute.xlu0 %4245
  %4251 = vrot.lane.b32.xlu0 %v4025, 32
  %v4252 = vpop.permute.xlu0 %4251
  %4253 = vrot.lane.b32.xlu0 %v4029, 32
  %v4254 = vpop.permute.xlu0 %4253
  %4259 = vrot.lane.b32.xlu0 %v4223, 42
  %v4260 = vpop.permute.xlu0 %4259
  %4261 = vrot.lane.b32.xlu0 %v4224, 42
  %v4262 = vpop.permute.xlu0 %4261
  %v4265 = vsel %vm61, %v2346, %v4228
  %v4266 = vsel %vm61, %v2347, %v4230
  %v4267 = vsel %vm877, %v4265, %v3119
  %v4268 = vsel %vm877, %v4266, %v3121
  %v4269 = vsel %vm2010, %v4267, %v4236
  %v4270 = vsel %vm2010, %v4268, %v4238
  %v4271 = vsel %vm880, %v4269, %v3127
  %v4272 = vsel %vm880, %v4270, %v3129
  %v4273 = vsel %vm2015, %v4271, %v4244
  %v4274 = vsel %vm2015, %v4272, %v4246
  %v4275 = vsel %vm883, %v4273, %v3135
  %v4276 = vsel %vm883, %v4274, %v3137
  %v4277 = vsel %vm2020, %v4275, %v4252
  %v4278 = vsel %vm2020, %v4276, %v4254
  %v4279 = vsel %vm886, %v4277, %v3143
  %v4280 = vsel %vm886, %v4278, %v3145
  %v4281 = vsel %vm2025, %v4279, %v4260
  %v4282 = vsel %vm2025, %v4280, %v4262
  %v4284 = vsel %vm892, %v4281, 0
  %v4287 = vsel %vm892, %v4282, 0
  %4289 = vmatpush.msra.mxu0 0.0
  %4290 = vmatpush.msra.mxu0 0.0
  %4291 = vmatpush.msra.mxu0 0.0
  %4292 = vmatpush.msra.mxu0 0.0
  %4293 = vmatpush.msra.mxu0 0.0
  %4294 = vmatpush.msra.mxu0 0.0
  %4295 = vmatpush.msra.mxu0 0.0
  %4296 = vmatpush.msra.mxu0 0.0
  %4297 = vmatpush.msra.mxu0 0.0
  %v4298 = vand.u32 %v2038, 4294901760
  %4299 = vmatpush.msra.mxu0 %v4298
  %v4300 = vand.u32 %v46, 4294901760
  %4301 = vmatpush.msra.mxu0 %v4300
  %v4302 = vand.u32 %v45, 4294901760
  %4303 = vmatpush.msra.mxu0 %v4302
  %v4304 = vand.u32 %v44, 4294901760
  %4305 = vmatpush.msra.mxu0 %v4304
  %v4306 = vand.u32 %v43, 4294901760
  %4307 = vmatpush.msra.mxu0 %v4306
  %v4308 = vand.u32 %v42, 4294901760
  %4309 = vmatpush.msra.mxu0 %v4308
  %v4310 = vand.u32 %v41, 4294901760
  %4311 = vmatpush.msra.mxu0 %v4310
  %v4312 = vand.u32 %v4284, 4294901760
  %v4313 = vsub.f32 %v4284, %v4312
  %v4314 = vand.u32 %v4313, 4294901760
  %v4315 = vsub.f32 %v4313, %v4314
  %v4316 = vand.u32 %v4315, 4294901760
  %4317 = vmatmul.f32.gmra.mxu0 %v4316
  %v4318 = vpop.f32.mrf.mxu0
  %v4319 = vadd.f32 %v2029, %v4318
  %v4320 = vand.u32 %v4287, 4294901760
  %v4321 = vsub.f32 %v4287, %v4320
  %v4322 = vand.u32 %v4321, 4294901760
  %v4323 = vsub.f32 %v4321, %v4322
  %v4324 = vand.u32 %v4323, 4294901760
  %4325 = vmatmul.f32.gmra.mxu0 %v4324
  %v4326 = vpop.f32.mrf.mxu0
  %v4327 = vadd.f32 %v2029, %v4326
  %4328 = vdwg.mxu0
  %4329 = vmatpush.msra.mxu0 0.0
  %4330 = vmatpush.msra.mxu0 0.0
  %4331 = vmatpush.msra.mxu0 0.0
  %4332 = vmatpush.msra.mxu0 0.0
  %4333 = vmatpush.msra.mxu0 0.0
  %4334 = vmatpush.msra.mxu0 0.0
  %4335 = vmatpush.msra.mxu0 0.0
  %4336 = vmatpush.msra.mxu0 0.0
  %4337 = vmatpush.msra.mxu0 0.0
  %v4338 = vand.u32 %v2038, 4294901760
  %v4339 = vsub.f32 %v2038, %v4338
  %v4340 = vand.u32 %v4339, 4294901760
  %v4341 = vsub.f32 %v4339, %v4340
  %v4342 = vand.u32 %v4341, 4294901760
  %4343 = vmatpush.msra.mxu0 %v4342
  %v4344 = vand.u32 %v46, 4294901760
  %v4345 = vsub.f32 %v46, %v4344
  %v4346 = vand.u32 %v4345, 4294901760
  %v4347 = vsub.f32 %v4345, %v4346
  %v4348 = vand.u32 %v4347, 4294901760
  %4349 = vmatpush.msra.mxu0 %v4348
  %v4350 = vand.u32 %v45, 4294901760
  %v4351 = vsub.f32 %v45, %v4350
  %v4352 = vand.u32 %v4351, 4294901760
  %v4353 = vsub.f32 %v4351, %v4352
  %v4354 = vand.u32 %v4353, 4294901760
  %4355 = vmatpush.msra.mxu0 %v4354
  %v4356 = vand.u32 %v44, 4294901760
  %v4357 = vsub.f32 %v44, %v4356
  %v4358 = vand.u32 %v4357, 4294901760
  %v4359 = vsub.f32 %v4357, %v4358
  %v4360 = vand.u32 %v4359, 4294901760
  %4361 = vmatpush.msra.mxu0 %v4360
  %v4362 = vand.u32 %v43, 4294901760
  %v4363 = vsub.f32 %v43, %v4362
  %v4364 = vand.u32 %v4363, 4294901760
  %v4365 = vsub.f32 %v4363, %v4364
  %v4366 = vand.u32 %v4365, 4294901760
  %4367 = vmatpush.msra.mxu0 %v4366
  %v4368 = vand.u32 %v42, 4294901760
  %v4369 = vsub.f32 %v42, %v4368
  %v4370 = vand.u32 %v4369, 4294901760
  %v4371 = vsub.f32 %v4369, %v4370
  %v4372 = vand.u32 %v4371, 4294901760
  %4373 = vmatpush.msra.mxu0 %v4372
  %v4374 = vand.u32 %v41, 4294901760
  %v4375 = vsub.f32 %v41, %v4374
  %v4376 = vand.u32 %v4375, 4294901760
  %v4377 = vsub.f32 %v4375, %v4376
  %v4378 = vand.u32 %v4377, 4294901760
  %4379 = vmatpush.msra.mxu0 %v4378
  %v4380 = vand.u32 %v4284, 4294901760
  %4381 = vmatmul.f32.gmra.mxu0 %v4380
  %v4382 = vpop.f32.mrf.mxu0
  %v4383 = vadd.f32 %v4319, %v4382
  %v4384 = vand.u32 %v4287, 4294901760
  %4385 = vmatmul.f32.gmra.mxu0 %v4384
  %v4386 = vpop.f32.mrf.mxu0
  %v4387 = vadd.f32 %v4327, %v4386
  %4388 = vdwg.mxu0
  %4389 = vmatpush.msra.mxu0 0.0
  %4390 = vmatpush.msra.mxu0 0.0
  %4391 = vmatpush.msra.mxu0 0.0
  %4392 = vmatpush.msra.mxu0 0.0
  %4393 = vmatpush.msra.mxu0 0.0
  %4394 = vmatpush.msra.mxu0 0.0
  %4395 = vmatpush.msra.mxu0 0.0
  %4396 = vmatpush.msra.mxu0 0.0
  %4397 = vmatpush.msra.mxu0 0.0
  %v4398 = vand.u32 %v2038, 4294901760
  %v4399 = vsub.f32 %v2038, %v4398
  %4400 = vmatpush.msra.mxu0 %v4399
  %v4401 = vand.u32 %v46, 4294901760
  %v4402 = vsub.f32 %v46, %v4401
  %4403 = vmatpush.msra.mxu0 %v4402
  %v4404 = vand.u32 %v45, 4294901760
  %v4405 = vsub.f32 %v45, %v4404
  %4406 = vmatpush.msra.mxu0 %v4405
  %v4407 = vand.u32 %v44, 4294901760
  %v4408 = vsub.f32 %v44, %v4407
  %4409 = vmatpush.msra.mxu0 %v4408
  %v4410 = vand.u32 %v43, 4294901760
  %v4411 = vsub.f32 %v43, %v4410
  %4412 = vmatpush.msra.mxu0 %v4411
  %v4413 = vand.u32 %v42, 4294901760
  %v4414 = vsub.f32 %v42, %v4413
  %4415 = vmatpush.msra.mxu0 %v4414
  %v4416 = vand.u32 %v41, 4294901760
  %v4417 = vsub.f32 %v41, %v4416
  %4418 = vmatpush.msra.mxu0 %v4417
  %v4419 = vand.u32 %v4284, 4294901760
  %v4420 = vsub.f32 %v4284, %v4419
  %4421 = vmatmul.f32.gmra.mxu0 %v4420
  %v4422 = vpop.f32.mrf.mxu0
  %v4423 = vadd.f32 %v4383, %v4422
  %v4424 = vand.u32 %v4287, 4294901760
  %v4425 = vsub.f32 %v4287, %v4424
  %4426 = vmatmul.f32.gmra.mxu0 %v4425
  %v4427 = vpop.f32.mrf.mxu0
  %v4428 = vadd.f32 %v4387, %v4427
  %4429 = vdwg.mxu0
  %4430 = vmatpush.msra.mxu0 0.0
  %4431 = vmatpush.msra.mxu0 0.0
  %4432 = vmatpush.msra.mxu0 0.0
  %4433 = vmatpush.msra.mxu0 0.0
  %4434 = vmatpush.msra.mxu0 0.0
  %4435 = vmatpush.msra.mxu0 0.0
  %4436 = vmatpush.msra.mxu0 0.0
  %4437 = vmatpush.msra.mxu0 0.0
  %4438 = vmatpush.msra.mxu0 0.0
  %v4439 = vand.u32 %v2038, 4294901760
  %4440 = vmatpush.msra.mxu0 %v4439
  %v4441 = vand.u32 %v46, 4294901760
  %4442 = vmatpush.msra.mxu0 %v4441
  %v4443 = vand.u32 %v45, 4294901760
  %4444 = vmatpush.msra.mxu0 %v4443
  %v4445 = vand.u32 %v44, 4294901760
  %4446 = vmatpush.msra.mxu0 %v4445
  %v4447 = vand.u32 %v43, 4294901760
  %4448 = vmatpush.msra.mxu0 %v4447
  %v4449 = vand.u32 %v42, 4294901760
  %4450 = vmatpush.msra.mxu0 %v4449
  %v4451 = vand.u32 %v41, 4294901760
  %4452 = vmatpush.msra.mxu0 %v4451
  %v4453 = vand.u32 %v4284, 4294901760
  %v4454 = vsub.f32 %v4284, %v4453
  %v4455 = vand.u32 %v4454, 4294901760
  %4456 = vmatmul.f32.gmra.mxu0 %v4455
  %v4457 = vpop.f32.mrf.mxu0
  %v4458 = vadd.f32 %v4423, %v4457
  %v4459 = vand.u32 %v4287, 4294901760
  %v4460 = vsub.f32 %v4287, %v4459
  %v4461 = vand.u32 %v4460, 4294901760
  %4462 = vmatmul.f32.gmra.mxu0 %v4461
  %v4463 = vpop.f32.mrf.mxu0
  %v4464 = vadd.f32 %v4428, %v4463
  %4465 = vdwg.mxu0
  %4466 = vmatpush.msra.mxu0 0.0
  %4467 = vmatpush.msra.mxu0 0.0
  %4468 = vmatpush.msra.mxu0 0.0
  %4469 = vmatpush.msra.mxu0 0.0
  %4470 = vmatpush.msra.mxu0 0.0
  %4471 = vmatpush.msra.mxu0 0.0
  %4472 = vmatpush.msra.mxu0 0.0
  %4473 = vmatpush.msra.mxu0 0.0
  %4474 = vmatpush.msra.mxu0 0.0
  %v4475 = vand.u32 %v2038, 4294901760
  %v4476 = vsub.f32 %v2038, %v4475
  %v4477 = vand.u32 %v4476, 4294901760
  %4478 = vmatpush.msra.mxu0 %v4477
  %v4479 = vand.u32 %v46, 4294901760
  %v4480 = vsub.f32 %v46, %v4479
  %v4481 = vand.u32 %v4480, 4294901760
  %4482 = vmatpush.msra.mxu0 %v4481
  %v4483 = vand.u32 %v45, 4294901760
  %v4484 = vsub.f32 %v45, %v4483
  %v4485 = vand.u32 %v4484, 4294901760
  %4486 = vmatpush.msra.mxu0 %v4485
  %v4487 = vand.u32 %v44, 4294901760
  %v4488 = vsub.f32 %v44, %v4487
  %v4489 = vand.u32 %v4488, 4294901760
  %4490 = vmatpush.msra.mxu0 %v4489
  %v4491 = vand.u32 %v43, 4294901760
  %v4492 = vsub.f32 %v43, %v4491
  %v4493 = vand.u32 %v4492, 4294901760
  %4494 = vmatpush.msra.mxu0 %v4493
  %v4495 = vand.u32 %v42, 4294901760
  %v4496 = vsub.f32 %v42, %v4495
  %v4497 = vand.u32 %v4496, 4294901760
  %4498 = vmatpush.msra.mxu0 %v4497
  %v4499 = vand.u32 %v41, 4294901760
  %v4500 = vsub.f32 %v41, %v4499
  %v4501 = vand.u32 %v4500, 4294901760
  %4502 = vmatpush.msra.mxu0 %v4501
  %v4503 = vand.u32 %v4284, 4294901760
  %4504 = vmatmul.f32.gmra.mxu0 %v4503
  %v4505 = vpop.f32.mrf.mxu0
  %v4506 = vadd.f32 %v4458, %v4505
  %v4507 = vand.u32 %v4287, 4294901760
  %4508 = vmatmul.f32.gmra.mxu0 %v4507
  %v4509 = vpop.f32.mrf.mxu0
  %v4510 = vadd.f32 %v4464, %v4509
  %4511 = vdwg.mxu0
  %4512 = vmatpush.msra.mxu0 0.0
  %4513 = vmatpush.msra.mxu0 0.0
  %4514 = vmatpush.msra.mxu0 0.0
  %4515 = vmatpush.msra.mxu0 0.0
  %4516 = vmatpush.msra.mxu0 0.0
  %4517 = vmatpush.msra.mxu0 0.0
  %4518 = vmatpush.msra.mxu0 0.0
  %4519 = vmatpush.msra.mxu0 0.0
  %4520 = vmatpush.msra.mxu0 0.0
  %v4521 = vand.u32 %v2038, 4294901760
  %4522 = vmatpush.msra.mxu0 %v4521
  %v4523 = vand.u32 %v46, 4294901760
  %4524 = vmatpush.msra.mxu0 %v4523
  %v4525 = vand.u32 %v45, 4294901760
  %4526 = vmatpush.msra.mxu0 %v4525
  %v4527 = vand.u32 %v44, 4294901760
  %4528 = vmatpush.msra.mxu0 %v4527
  %v4529 = vand.u32 %v43, 4294901760
  %4530 = vmatpush.msra.mxu0 %v4529
  %v4531 = vand.u32 %v42, 4294901760
  %4532 = vmatpush.msra.mxu0 %v4531
  %v4533 = vand.u32 %v41, 4294901760
  %4534 = vmatpush.msra.mxu0 %v4533
  %v4535 = vand.u32 %v4284, 4294901760
  %4536 = vmatmul.f32.gmra.mxu0 %v4535
  %v4537 = vpop.f32.mrf.mxu0
  %v4538 = vadd.f32 %v4506, %v4537
  %v4539 = vand.u32 %v4287, 4294901760
  %4540 = vmatmul.f32.gmra.mxu0 %v4539
  %v4541 = vpop.f32.mrf.mxu0
  %v4542 = vadd.f32 %v4510, %v4541
  %4543 = vdwg.mxu0
  %v4544 = vtanh.pop %v4538
  %v4545 = vtanh.pop %v4542
  %4546 = vrot.lane.b32.xlu0 %v2336, 8
  %v4547 = vpop.permute.xlu0 %4546
  %4548 = vrot.lane.b32.xlu0 %v2337, 8
  %v4549 = vpop.permute.xlu0 %4548
  %v4552 = vmul.f32 %v3439, %v4547
  %v4553 = vmul.f32 %v3454, %v4549
  %v4554 = vsub.f32 1.0, %v3439
  %v4555 = vsub.f32 1.0, %v3454
  %4558 = vrot.lane.b32.xlu0 %v4544, 8
  %v4559 = vpop.permute.xlu0 %4558
  %4560 = vrot.lane.b32.xlu0 %v4545, 8
  %v4561 = vpop.permute.xlu0 %4560
  %v4564 = vmul.f32 %v4554, %v4559
  %v4565 = vmul.f32 %v4555, %v4561
  %v4566 = vadd.f32 %v4552, %v4564
  %v4567 = vadd.f32 %v4553, %v4565
  %4570 = vrot.lane.b32.xlu0 %v4566, 120
  %v4571 = vpop.permute.xlu0 %4570
  %4572 = vrot.lane.b32.xlu0 %v4567, 120
  %v4573 = vpop.permute.xlu0 %4572
  %s4576 = scalar_lea.vmem %s8, 16
  %4577 = vst.msk [vmem:[%s4576] sm:$0xff] %vm2327, %v4571
  %4578 = vst.msk [vmem:[%s4576 + $0x8] sm:$0xff] %vm2327, %v4573
  %s4579 = scalar_lea.vmem %s7, 16
  %4580 = vst.msk [vmem:[%s4579] sm:$0xff] %vm2327, %v4571
  %4581 = vst.msk [vmem:[%s4579 + $0x8] sm:$0xff] %vm2327, %v4573
  // Predicated region
  $region30: #{tpu_custom_call.1} parent=0 // pred_check
    _
  $region31: #{tpu_custom_call.1} parent=0 // pred_check_branch
    %4583 = sbr.rel (0) target = $region33
  $region32: #{tpu_custom_call.1} parent=0 // pred_region
    _
  $region33: #{tpu_custom_call.1} parent=0 // pred_fallthru
    _
  // Predicated region
  $region34: #{tpu_custom_call.1} parent=0 // pred_check
    _
  $region35: #{tpu_custom_call.1} parent=0 // pred_check_branch
    %4585 = sbr.rel (0) target = $region37
  $region36: #{tpu_custom_call.1} parent=0 // pred_region
    _
  $region37: #{tpu_custom_call.1} parent=0 // pred_fallthru
    _
  // Predicated region
  $region38: #{tpu_custom_call.1} parent=0 // pred_check
    _
  $region39: #{tpu_custom_call.1} parent=0 // pred_check_branch
    %4587 = sbr.rel (0) target = $region41
  $region40: #{tpu_custom_call.1} parent=0 // pred_region
    _
  $region41: #{tpu_custom_call.1} parent=0 // pred_fallthru
    _
  // Predicated region
  $region42: #{tpu_custom_call.1} parent=0 // pred_check
    _
  $region43: #{tpu_custom_call.1} parent=0 // pred_check_branch
    %4589 = sbr.rel (0) target = $region45
  $region44: #{tpu_custom_call.1} parent=0 // pred_region
    _
  $region45: #{tpu_custom_call.1} parent=0 // pred_fallthru
    _

</llo_original>
